<compile_context>
chip_gen: v7x
topology: tpu7x:2x2x1
jax: 0.10.0
libtpu: 0.0.40
codegen_flags: <defaults>
</compile_context>

<pallas_src>
import functools

import jax
import jax.numpy as jnp
from jax.experimental import pallas as pl
from jax.experimental.pallas import tpu as pltpu


def _resblock_kernel(xflat_ref, mask_ref, w1s_ref, g1_ref, b1_ref,
                     w2_ref, g2_ref, b2_ref, bsk_ref,
                     out_ref, slab_ref, *, k, wp, margin, inv_count):
    C, Lp = out_ref.shape                 # Lp = N*Hp*Wp rounded up to 128
    pad = k // 2
    eps = 1e-5
    slope = 0.01                          # nn.LeakyReLU default negative_slope

    mb = mask_ref[...] != 0.0             # (1, Lp) interior-pixel predicate

    # Zero only the halo margins once (the slab body is fully overwritten before
    # each conv); keeps uninitialised VMEM out of the (discarded) halo taps.
    if margin:
        zeros_m = jnp.zeros((slab_ref.shape[0], margin), slab_ref.dtype)
        slab_ref[:, :margin] = zeros_m
        slab_ref[:, margin + Lp:] = zeros_m

    def conv_taps(w_ref):
        # Per-tap accumulate matmuls: each of the k*k taps is a flat lane-shifted
        # view of the slab used directly as the MXU RHS -> no im2col scratch and
        # no k*k (C, Lp) store+reload round trip.  Halo outputs are garbage that
        # is masked / cropped downstream.
        acc = None
        for ky in range(k):
            for kx in range(k):
                t = ky * k + kx
                start = margin + (ky - pad) * wp + (kx - pad)
                part = jnp.dot(w_ref[t], slab_ref[:, start:start + Lp],
                               preferred_element_type=jnp.float32)
                acc = part if acc is None else acc + part
        return acc                        # (M, Lp) float32

    def batchnorm(y, g_ref, b_ref):
        # Training-mode BatchNorm2d over interior (N,H,W) pixels, single pass
        # (sum & sum-of-squares); affine folded into one per-channel
        # scale/shift so the slab is touched by a single y*scale+shift pass.
        # NOTE: E[x^2]-mean^2 can cancel when |mean| >> std; fine at these
        # scales / f32 accumulation (matches the two-pass reference to 1e-4).
        ym = jnp.where(mb, y, 0.0)
        s1 = jnp.sum(ym, axis=1, keepdims=True)                 # (C, 1)
        s2 = jnp.sum(ym * ym, axis=1, keepdims=True)            # (C, 1)
        mean = s1 * inv_count
        var = s2 * inv_count - mean * mean
        scale = g_ref[...] * jax.lax.rsqrt(var + eps)
        shift = b_ref[...] - mean * scale
        return y * scale + shift

    def lrelu(y):
        return jnp.where(y > 0, y, slope * y)

    # ---- conv1 (with the 1x1 skip fused as C extra output rows) ----
    slab_ref[:, margin:margin + Lp] = xflat_ref[...]
    acc1 = conv_taps(w1s_ref)                                   # (2C, Lp)
    skip = acc1[C:, :] + bsk_ref[...]                           # skip conv + bias
    # halo re-zeroing fused into the same select as the activation
    y1 = jnp.where(mb, lrelu(batchnorm(acc1[:C, :], g1_ref, b1_ref)), 0.0)

    # ---- conv2 -> BN2 ----
    slab_ref[:, margin:margin + Lp] = y1.astype(slab_ref.dtype)
    y2 = batchnorm(conv_taps(w2_ref), g2_ref, b2_ref)

    # ---- residual add + final activation (lane-dense store) ----
    out_ref[...] = lrelu(skip + y2).astype(out_ref.dtype)


def _vmem_limit_bytes():
    # Use the chip's real VMEM: ~96 MiB scoped on v5e/v6e (128 MiB physical),
    # ~48 MiB on v7x (64 MiB physical).  Conservative fallback if the query fails.
    try:
        cap = int(pltpu.get_tpu_info().vmem_capacity_bytes)
    except Exception:
        return 32 * 1024 * 1024
    return min((cap * 3) // 4, 100 * 1024 * 1024)


def resblock_forward(x_nchw, params, *, kernel_size, mxu_dtype=None):
    """x_nchw: (N, C, H, W) float32.  Returns (N, C, H, W) float32."""
    k = kernel_size
    pad = k // 2
    N, C, H, W = x_nchw.shape
    Hp, Wp = H + 2 * pad, W + 2 * pad
    L = N * Hp * Wp
    Lp = ((L + 127) // 128) * 128                    # lane-dense spatial width
    margin = ((pad * Wp + pad + 127) // 128) * 128   # flat-shift halo margin
    assert margin >= pad * Wp + pad                  # halo taps must stay in defined memory

    if mxu_dtype is None:
        # bf16 MXU operands (weights + slab) when the channel count keeps the
        # packed sublane blocks aligned; accumulation and BN math stay f32.
        mxu_dtype = jnp.bfloat16 if C % 16 == 0 else jnp.float32

    # Wrapper glue (plain JAX): NCHW -> (C, N, Hp, Wp) zero-padded -> (C, Lp)
    # with channels on sublanes, padded flat spatial on lanes.
    xc = jnp.transpose(x_nchw, (1, 0, 2, 3)).astype(jnp.float32)     # (C,N,H,W)
    xp = jnp.pad(xc, ((0, 0), (0, 0), (pad, pad), (pad, pad)))       # (C,N,Hp,Wp)
    xflat = jnp.pad(xp.reshape(C, L), ((0, 0), (0, Lp - L))).astype(mxu_dtype)

    # Interior mask (1 on real output pixels, 0 on halo / padding-to-128).
    m = jnp.pad(jnp.ones((N, H, W), jnp.float32),
                ((0, 0), (pad, pad), (pad, pad))).reshape(1, L)
    m = jnp.pad(m, ((0, 0), (0, Lp - L)))                            # (1,Lp)

    # Per-tap weights (k*k, Cout, Cin); skip 1x1 fused into conv1's center tap
    # as C extra output rows (zeros on the other taps).
    def per_tap(w):   # (k*k, Cin, Cout) -> (k*k, Cout, Cin)
        return jnp.transpose(w, (0, 2, 1))

    center = (k // 2) * k + (k // 2)
    w1t = per_tap(params["w1"])
    skip_rows = jnp.zeros((k * k, C, C), jnp.float32).at[center].set(params["wskip"].T)
    w1s = jnp.concatenate([w1t, skip_rows], axis=1).astype(mxu_dtype)  # (k*k, 2C, C)
    w2t = per_tap(params["w2"]).astype(mxu_dtype)                      # (k*k, C, C)

    g1 = params["g1"].reshape(C, 1).astype(jnp.float32)
    b1 = params["b1"].reshape(C, 1).astype(jnp.float32)
    g2 = params["g2"].reshape(C, 1).astype(jnp.float32)
    b2 = params["b2"].reshape(C, 1).astype(jnp.float32)
    bsk = params["bskip"].reshape(C, 1).astype(jnp.float32)

    kernel = functools.partial(_resblock_kernel, k=k, wp=Wp, margin=margin,
                               inv_count=1.0 / (N * H * W))
    vmem = pl.BlockSpec(memory_space=pltpu.MemorySpace.VMEM)

    out_flat = pl.pallas_call(
        kernel,
        out_shape=jax.ShapeDtypeStruct((C, Lp), jnp.float32),
        in_specs=[vmem] * 9,
        out_specs=vmem,
        scratch_shapes=[
            pltpu.VMEM((C, Lp + 2 * margin), mxu_dtype),   # margin-padded slab
        ],
        compiler_params=pltpu.CompilerParams(vmem_limit_bytes=_vmem_limit_bytes()),
    )(xflat, m, w1s, g1, b1, w2t, g2, b2, bsk)

    out = out_flat[:, :L].reshape(C, N, Hp, Wp)[:, :, pad:pad + H, pad:pad + W]
    return jnp.transpose(out, (1, 0, 2, 3))


# ---------------------------- pure-JAX reference ----------------------------
def _reference(x_nchw, params, *, kernel_size):
    k = kernel_size
    C = x_nchw.shape[1]
    eps, slope = 1e-5, 0.01

    def to_oihw(w_kcc):  # (k*k, Cin, Cout) -> (Cout, Cin, kh, kw)
        return jnp.transpose(w_kcc.reshape(k, k, C, C), (3, 2, 0, 1))

    def conv(x, w_oihw):
        return jax.lax.conv_general_dilated(
            x, w_oihw, window_strides=(1, 1), padding="SAME",
            dimension_numbers=("NCHW", "OIHW", "NCHW"))

    def bn(y, g, b):
        mean = jnp.mean(y, axis=(0, 2, 3), keepdims=True)
        var = jnp.mean((y - mean) ** 2, axis=(0, 2, 3), keepdims=True)
        return (y - mean) * jax.lax.rsqrt(var + eps) * g.reshape(1, C, 1, 1) \
            + b.reshape(1, C, 1, 1)

    def lrelu(y):
        return jnp.where(y > 0, y, slope * y)

    y = lrelu(bn(conv(x_nchw, to_oihw(params["w1"])), params["g1"], params["b1"]))
    y = bn(conv(y, to_oihw(params["w2"])), params["g2"], params["b2"])
    wsk_oihw = params["wskip"].T[:, :, None, None]
    skip = conv(x_nchw, wsk_oihw) + params["bskip"].reshape(1, C, 1, 1)
    return lrelu(skip + y)


if __name__ == "__main__":
    def make_params(key, C, k, scale=0.1):
        kw1, kw2, kws, kbs, kg1, kb1, kg2, kb2 = jax.random.split(key, 8)
        # Conv weights stored as (k*k, Cin, Cout); BN gamma/beta mildly
        # randomized so the folded scale/shift path is genuinely exercised;
        # 1x1 skip conv has a bias (PyTorch default bias=True).
        return {
            "w1": scale * jax.random.normal(kw1, (k * k, C, C), jnp.float32),
            "g1": 1.0 + 0.1 * jax.random.normal(kg1, (1, C), jnp.float32),
            "b1": 0.1 * jax.random.normal(kb1, (1, C), jnp.float32),
            "w2": scale * jax.random.normal(kw2, (k * k, C, C), jnp.float32),
            "g2": 1.0 + 0.1 * jax.random.normal(kg2, (1, C), jnp.float32),
            "b2": 0.1 * jax.random.normal(kb2, (1, C), jnp.float32),
            "wskip": scale * jax.random.normal(kws, (C, C), jnp.float32),
            "bskip": scale * jax.random.normal(kbs, (1, C), jnp.float32),
        }

    k = 3
    key = jax.random.PRNGKey(0)
    kx1, kp1, kx2, kp2 = jax.random.split(key, 4)

    # ---- strict f32 check (C=8 -> f32 MXU path, tight tolerance) ----
    N, C, H, W = 2, 8, 16, 16
    params = make_params(kp1, C, k)
    x = jax.random.normal(kx1, (N, C, H, W), jnp.float32)
    out = jax.block_until_ready(resblock_forward(x, params, kernel_size=k))
    ref = jax.block_until_ready(_reference(x, params, kernel_size=k))
    assert out.shape == (N, C, H, W)
    err = float(jnp.max(jnp.abs(out - ref)))
    assert jnp.allclose(out, ref, atol=1e-4, rtol=1e-4), err

    # ---- bf16 MXU-operand path (C % 16 == 0); accumulation / BN stay f32 ----
    # (Not a perf benchmark: MXU-side tuning is meaningless at toy sizes.)
    N2, C2 = 2, 16
    params2 = make_params(kp2, C2, k)
    x2 = jax.random.normal(kx2, (N2, C2, H, W), jnp.float32)
    out2 = jax.block_until_ready(resblock_forward(x2, params2, kernel_size=k))
    ref2 = jax.block_until_ready(_reference(x2, params2, kernel_size=k))
    assert out2.shape == (N2, C2, H, W)
    err2 = float(jnp.max(jnp.abs(out2 - ref2)))
    assert jnp.allclose(out2, ref2, atol=1e-1, rtol=1e-1), err2

    print("KERNEL_OK")
</pallas_src>

<mosaic_0001>
module attributes {stable_mosaic.version = 11 : i64} {
  func.func @_resblock_kernel(%arg0: memref<8x768xf32, #tpu.memory_space<vmem>>, %arg1: memref<1x768xf32, #tpu.memory_space<vmem>>, %arg2: memref<9x16x8xf32, #tpu.memory_space<vmem>>, %arg3: memref<8x1xf32, #tpu.memory_space<vmem>>, %arg4: memref<8x1xf32, #tpu.memory_space<vmem>>, %arg5: memref<9x8x8xf32, #tpu.memory_space<vmem>>, %arg6: memref<8x1xf32, #tpu.memory_space<vmem>>, %arg7: memref<8x1xf32, #tpu.memory_space<vmem>>, %arg8: memref<8x1xf32, #tpu.memory_space<vmem>>, %arg9: memref<8x768xf32, #tpu.memory_space<vmem>>, %arg10: memref<8x1024xf32, #tpu.memory_space<vmem>>) attributes {dimension_semantics = [], scalar_prefetch = 0 : i64, scratch_operands = 1 : i64, tpu.core_type = #tpu.core_type<tc>} {
    %c0 = arith.constant 0 : index
    %c0_0 = arith.constant 0 : index
    %0 = vector.load %arg1[%c0, %c0_0] : memref<1x768xf32, #tpu.memory_space<vmem>>, vector<1x768xf32>
    %cst = arith.constant 0.000000e+00 : f32
    %1 = vector.broadcast %cst : f32 to vector<1x768xf32>
    %2 = arith.cmpf one, %0, %1 : vector<1x768xf32>
    %cst_1 = arith.constant 0.000000e+00 : f32
    %3 = vector.broadcast %cst_1 : f32 to vector<8x128xf32>
    %c0_2 = arith.constant 0 : index
    %c0_3 = arith.constant 0 : index
    %4 = vector.load %arg10[%c0_2, %c0_3] : memref<8x1024xf32, #tpu.memory_space<vmem>>, vector<8x128xf32>
    tpu.vector_store %arg10[%c0_2, %c0_3], %3 {strides = array<i32>} : memref<8x1024xf32, #tpu.memory_space<vmem>>, vector<8x128xf32>,
    %c0_4 = arith.constant 0 : index
    %c896 = arith.constant 896 : index
    %5 = vector.load %arg10[%c0_4, %c896] : memref<8x1024xf32, #tpu.memory_space<vmem>>, vector<8x128xf32>
    tpu.vector_store %arg10[%c0_4, %c896], %3 {strides = array<i32>} : memref<8x1024xf32, #tpu.memory_space<vmem>>, vector<8x128xf32>,
    %c0_5 = arith.constant 0 : index
    %c0_6 = arith.constant 0 : index
    %6 = vector.load %arg0[%c0_5, %c0_6] : memref<8x768xf32, #tpu.memory_space<vmem>>, vector<8x768xf32>
    %c0_7 = arith.constant 0 : index
    %c128 = arith.constant 128 : index
    %7 = vector.load %arg10[%c0_7, %c128] : memref<8x1024xf32, #tpu.memory_space<vmem>>, vector<8x768xf32>
    tpu.vector_store %arg10[%c0_7, %c128], %6 {strides = array<i32>} : memref<8x1024xf32, #tpu.memory_space<vmem>>, vector<8x768xf32>,
    %c0_8 = arith.constant 0 : index
    %c0_9 = arith.constant 0 : index
    %c0_10 = arith.constant 0 : index
    %8 = vector.load %arg2[%c0_8, %c0_9, %c0_10] : memref<9x16x8xf32, #tpu.memory_space<vmem>>, vector<1x16x8xf32>
    %9 = vector.shape_cast %8 : vector<1x16x8xf32> to vector<16x8xf32>
    %c0_11 = arith.constant 0 : index
    %c109 = arith.constant 109 : index
    %10 = vector.load %arg10[%c0_11, %c109] : memref<8x1024xf32, #tpu.memory_space<vmem>>, vector<8x768xf32>
    %cst_12 = arith.constant dense<0.000000e+00> : vector<16x768xf32>
    %11 = tpu.matmul %9, %10, %cst_12 {dimension_numbers = #tpu.dot_dimension_numbers<[1], [0], [0], [1], [0, 0, 1, 1], [], []>} : vector<16x8xf32>, vector<8x768xf32>, vector<16x768xf32> -> vector<16x768xf32>
    %c1 = arith.constant 1 : index
    %c0_13 = arith.constant 0 : index
    %c0_14 = arith.constant 0 : index
    %12 = vector.load %arg2[%c1, %c0_13, %c0_14] : memref<9x16x8xf32, #tpu.memory_space<vmem>>, vector<1x16x8xf32>
    %13 = vector.shape_cast %12 : vector<1x16x8xf32> to vector<16x8xf32>
    %c0_15 = arith.constant 0 : index
    %c110 = arith.constant 110 : index
    %14 = vector.load %arg10[%c0_15, %c110] : memref<8x1024xf32, #tpu.memory_space<vmem>>, vector<8x768xf32>
    %cst_16 = arith.constant dense<0.000000e+00> : vector<16x768xf32>
    %15 = tpu.matmul %13, %14, %cst_16 {dimension_numbers = #tpu.dot_dimension_numbers<[1], [0], [0], [1], [0, 0, 1, 1], [], []>} : vector<16x8xf32>, vector<8x768xf32>, vector<16x768xf32> -> vector<16x768xf32>
    %16 = arith.addf %11, %15 : vector<16x768xf32>
    %c2 = arith.constant 2 : index
    %c0_17 = arith.constant 0 : index
    %c0_18 = arith.constant 0 : index
    %17 = vector.load %arg2[%c2, %c0_17, %c0_18] : memref<9x16x8xf32, #tpu.memory_space<vmem>>, vector<1x16x8xf32>
    %18 = vector.shape_cast %17 : vector<1x16x8xf32> to vector<16x8xf32>
    %c0_19 = arith.constant 0 : index
    %c111 = arith.constant 111 : index
    %19 = vector.load %arg10[%c0_19, %c111] : memref<8x1024xf32, #tpu.memory_space<vmem>>, vector<8x768xf32>
    %cst_20 = arith.constant dense<0.000000e+00> : vector<16x768xf32>
    %20 = tpu.matmul %18, %19, %cst_20 {dimension_numbers = #tpu.dot_dimension_numbers<[1], [0], [0], [1], [0, 0, 1, 1], [], []>} : vector<16x8xf32>, vector<8x768xf32>, vector<16x768xf32> -> vector<16x768xf32>
    %21 = arith.addf %16, %20 : vector<16x768xf32>
    %c3 = arith.constant 3 : index
    %c0_21 = arith.constant 0 : index
    %c0_22 = arith.constant 0 : index
    %22 = vector.load %arg2[%c3, %c0_21, %c0_22] : memref<9x16x8xf32, #tpu.memory_space<vmem>>, vector<1x16x8xf32>
    %23 = vector.shape_cast %22 : vector<1x16x8xf32> to vector<16x8xf32>
    %c0_23 = arith.constant 0 : index
    %c127 = arith.constant 127 : index
    %24 = vector.load %arg10[%c0_23, %c127] : memref<8x1024xf32, #tpu.memory_space<vmem>>, vector<8x768xf32>
    %cst_24 = arith.constant dense<0.000000e+00> : vector<16x768xf32>
    %25 = tpu.matmul %23, %24, %cst_24 {dimension_numbers = #tpu.dot_dimension_numbers<[1], [0], [0], [1], [0, 0, 1, 1], [], []>} : vector<16x8xf32>, vector<8x768xf32>, vector<16x768xf32> -> vector<16x768xf32>
    %26 = arith.addf %21, %25 : vector<16x768xf32>
    %c4 = arith.constant 4 : index
    %c0_25 = arith.constant 0 : index
    %c0_26 = arith.constant 0 : index
    %27 = vector.load %arg2[%c4, %c0_25, %c0_26] : memref<9x16x8xf32, #tpu.memory_space<vmem>>, vector<1x16x8xf32>
    %28 = vector.shape_cast %27 : vector<1x16x8xf32> to vector<16x8xf32>
    %c0_27 = arith.constant 0 : index
    %c128_28 = arith.constant 128 : index
    %29 = vector.load %arg10[%c0_27, %c128_28] : memref<8x1024xf32, #tpu.memory_space<vmem>>, vector<8x768xf32>
    %cst_29 = arith.constant dense<0.000000e+00> : vector<16x768xf32>
    %30 = tpu.matmul %28, %29, %cst_29 {dimension_numbers = #tpu.dot_dimension_numbers<[1], [0], [0], [1], [0, 0, 1, 1], [], []>} : vector<16x8xf32>, vector<8x768xf32>, vector<16x768xf32> -> vector<16x768xf32>
    %31 = arith.addf %26, %30 : vector<16x768xf32>
    %c5 = arith.constant 5 : index
    %c0_30 = arith.constant 0 : index
    %c0_31 = arith.constant 0 : index
    %32 = vector.load %arg2[%c5, %c0_30, %c0_31] : memref<9x16x8xf32, #tpu.memory_space<vmem>>, vector<1x16x8xf32>
    %33 = vector.shape_cast %32 : vector<1x16x8xf32> to vector<16x8xf32>
    %c0_32 = arith.constant 0 : index
    %c129 = arith.constant 129 : index
    %34 = vector.load %arg10[%c0_32, %c129] : memref<8x1024xf32, #tpu.memory_space<vmem>>, vector<8x768xf32>
    %cst_33 = arith.constant dense<0.000000e+00> : vector<16x768xf32>
    %35 = tpu.matmul %33, %34, %cst_33 {dimension_numbers = #tpu.dot_dimension_numbers<[1], [0], [0], [1], [0, 0, 1, 1], [], []>} : vector<16x8xf32>, vector<8x768xf32>, vector<16x768xf32> -> vector<16x768xf32>
    %36 = arith.addf %31, %35 : vector<16x768xf32>
    %c6 = arith.constant 6 : index
    %c0_34 = arith.constant 0 : index
    %c0_35 = arith.constant 0 : index
    %37 = vector.load %arg2[%c6, %c0_34, %c0_35] : memref<9x16x8xf32, #tpu.memory_space<vmem>>, vector<1x16x8xf32>
    %38 = vector.shape_cast %37 : vector<1x16x8xf32> to vector<16x8xf32>
    %c0_36 = arith.constant 0 : index
    %c145 = arith.constant 145 : index
    %39 = vector.load %arg10[%c0_36, %c145] : memref<8x1024xf32, #tpu.memory_space<vmem>>, vector<8x768xf32>
    %cst_37 = arith.constant dense<0.000000e+00> : vector<16x768xf32>
    %40 = tpu.matmul %38, %39, %cst_37 {dimension_numbers = #tpu.dot_dimension_numbers<[1], [0], [0], [1], [0, 0, 1, 1], [], []>} : vector<16x8xf32>, vector<8x768xf32>, vector<16x768xf32> -> vector<16x768xf32>
    %41 = arith.addf %36, %40 : vector<16x768xf32>
    %c7 = arith.constant 7 : index
    %c0_38 = arith.constant 0 : index
    %c0_39 = arith.constant 0 : index
    %42 = vector.load %arg2[%c7, %c0_38, %c0_39] : memref<9x16x8xf32, #tpu.memory_space<vmem>>, vector<1x16x8xf32>
    %43 = vector.shape_cast %42 : vector<1x16x8xf32> to vector<16x8xf32>
    %c0_40 = arith.constant 0 : index
    %c146 = arith.constant 146 : index
    %44 = vector.load %arg10[%c0_40, %c146] : memref<8x1024xf32, #tpu.memory_space<vmem>>, vector<8x768xf32>
    %cst_41 = arith.constant dense<0.000000e+00> : vector<16x768xf32>
    %45 = tpu.matmul %43, %44, %cst_41 {dimension_numbers = #tpu.dot_dimension_numbers<[1], [0], [0], [1], [0, 0, 1, 1], [], []>} : vector<16x8xf32>, vector<8x768xf32>, vector<16x768xf32> -> vector<16x768xf32>
    %46 = arith.addf %41, %45 : vector<16x768xf32>
    %c8 = arith.constant 8 : index
    %c0_42 = arith.constant 0 : index
    %c0_43 = arith.constant 0 : index
    %47 = vector.load %arg2[%c8, %c0_42, %c0_43] : memref<9x16x8xf32, #tpu.memory_space<vmem>>, vector<1x16x8xf32>
    %48 = vector.shape_cast %47 : vector<1x16x8xf32> to vector<16x8xf32>
    %c0_44 = arith.constant 0 : index
    %c147 = arith.constant 147 : index
    %49 = vector.load %arg10[%c0_44, %c147] : memref<8x1024xf32, #tpu.memory_space<vmem>>, vector<8x768xf32>
    %cst_45 = arith.constant dense<0.000000e+00> : vector<16x768xf32>
    %50 = tpu.matmul %48, %49, %cst_45 {dimension_numbers = #tpu.dot_dimension_numbers<[1], [0], [0], [1], [0, 0, 1, 1], [], []>} : vector<16x8xf32>, vector<8x768xf32>, vector<16x768xf32> -> vector<16x768xf32>
    %51 = arith.addf %46, %50 : vector<16x768xf32>
    %52 = vector.extract_strided_slice %51 {offsets = [8, 0], sizes = [8, 768], strides = [1, 1]} : vector<16x768xf32> to vector<8x768xf32>
    %c0_46 = arith.constant 0 : index
    %c0_47 = arith.constant 0 : index
    %53 = vector.load %arg8[%c0_46, %c0_47] : memref<8x1xf32, #tpu.memory_space<vmem>>, vector<8x1xf32>
    %54 = vector.broadcast %53 : vector<8x1xf32> to vector<8x768xf32>
    %55 = arith.addf %52, %54 : vector<8x768xf32>
    %56 = vector.extract_strided_slice %51 {offsets = [0, 0], sizes = [8, 768], strides = [1, 1]} : vector<16x768xf32> to vector<8x768xf32>
    %cst_48 = arith.constant 0.000000e+00 : f32
    %57 = vector.shape_cast %2 : vector<1x768xi1> to vector<1x768xi1>
    %58 = vector.broadcast %57 : vector<1x768xi1> to vector<8x768xi1>
    %59 = vector.broadcast %cst_48 : f32 to vector<8x768xf32>
    %60 = arith.select %58, %56, %59 : vector<8x768xi1>, vector<8x768xf32>
    %cst_49 = arith.constant dense<0.000000e+00> : vector<8xf32>
    %61 = vector.multi_reduction <add>, %60, %cst_49 [1] : vector<8x768xf32> to vector<8xf32>
    %62 = vector.shape_cast %61 : vector<8xf32> to vector<8x1xf32>
    %63 = arith.mulf %60, %60 : vector<8x768xf32>
    %cst_50 = arith.constant dense<0.000000e+00> : vector<8xf32>
    %64 = vector.multi_reduction <add>, %63, %cst_50 [1] : vector<8x768xf32> to vector<8xf32>
    %65 = vector.shape_cast %64 : vector<8xf32> to vector<8x1xf32>
    %cst_51 = arith.constant 0.001953125 : f32
    %66 = vector.broadcast %cst_51 : f32 to vector<8x1xf32>
    %67 = arith.mulf %62, %66 : vector<8x1xf32>
    %cst_52 = arith.constant 0.001953125 : f32
    %68 = vector.broadcast %cst_52 : f32 to vector<8x1xf32>
    %69 = arith.mulf %65, %68 : vector<8x1xf32>
    %70 = arith.mulf %67, %67 : vector<8x1xf32>
    %71 = arith.subf %69, %70 : vector<8x1xf32>
    %c0_53 = arith.constant 0 : index
    %c0_54 = arith.constant 0 : index
    %72 = vector.load %arg3[%c0_53, %c0_54] : memref<8x1xf32, #tpu.memory_space<vmem>>, vector<8x1xf32>
    %cst_55 = arith.constant 9.99999974E-6 : f32
    %73 = vector.broadcast %cst_55 : f32 to vector<8x1xf32>
    %74 = arith.addf %71, %73 : vector<8x1xf32>
    %75 = math.rsqrt %74 : vector<8x1xf32>
    %76 = arith.mulf %72, %75 : vector<8x1xf32>
    %c0_56 = arith.constant 0 : index
    %c0_57 = arith.constant 0 : index
    %77 = vector.load %arg4[%c0_56, %c0_57] : memref<8x1xf32, #tpu.memory_space<vmem>>, vector<8x1xf32>
    %78 = arith.mulf %67, %76 : vector<8x1xf32>
    %79 = arith.subf %77, %78 : vector<8x1xf32>
    %80 = vector.broadcast %76 : vector<8x1xf32> to vector<8x768xf32>
    %81 = arith.mulf %56, %80 : vector<8x768xf32>
    %82 = vector.broadcast %79 : vector<8x1xf32> to vector<8x768xf32>
    %83 = arith.addf %81, %82 : vector<8x768xf32>
    %cst_58 = arith.constant 0.000000e+00 : f32
    %84 = vector.broadcast %cst_58 : f32 to vector<8x768xf32>
    %85 = arith.cmpf ogt, %83, %84 : vector<8x768xf32>
    %cst_59 = arith.constant 0.00999999977 : f32
    %86 = vector.broadcast %cst_59 : f32 to vector<8x768xf32>
    %87 = arith.mulf %86, %83 : vector<8x768xf32>
    %88 = arith.select %85, %83, %87 : vector<8x768xi1>, vector<8x768xf32>
    %cst_60 = arith.constant 0.000000e+00 : f32
    %89 = vector.shape_cast %2 : vector<1x768xi1> to vector<1x768xi1>
    %90 = vector.broadcast %89 : vector<1x768xi1> to vector<8x768xi1>
    %91 = vector.broadcast %cst_60 : f32 to vector<8x768xf32>
    %92 = arith.select %90, %88, %91 : vector<8x768xi1>, vector<8x768xf32>
    %c0_61 = arith.constant 0 : index
    %c128_62 = arith.constant 128 : index
    %93 = vector.load %arg10[%c0_61, %c128_62] : memref<8x1024xf32, #tpu.memory_space<vmem>>, vector<8x768xf32>
    tpu.vector_store %arg10[%c0_61, %c128_62], %92 {strides = array<i32>} : memref<8x1024xf32, #tpu.memory_space<vmem>>, vector<8x768xf32>,
    %c0_63 = arith.constant 0 : index
    %c0_64 = arith.constant 0 : index
    %c0_65 = arith.constant 0 : index
    %94 = vector.load %arg5[%c0_63, %c0_64, %c0_65] : memref<9x8x8xf32, #tpu.memory_space<vmem>>, vector<1x8x8xf32>
    %95 = vector.shape_cast %94 : vector<1x8x8xf32> to vector<8x8xf32>
    %c0_66 = arith.constant 0 : index
    %c109_67 = arith.constant 109 : index
    %96 = vector.load %arg10[%c0_66, %c109_67] : memref<8x1024xf32, #tpu.memory_space<vmem>>, vector<8x768xf32>
    %cst_68 = arith.constant dense<0.000000e+00> : vector<8x768xf32>
    %97 = tpu.matmul %95, %96, %cst_68 {dimension_numbers = #tpu.dot_dimension_numbers<[1], [0], [0], [1], [0, 0, 1, 1], [], []>} : vector<8x8xf32>, vector<8x768xf32>, vector<8x768xf32> -> vector<8x768xf32>
    %c1_69 = arith.constant 1 : index
    %c0_70 = arith.constant 0 : index
    %c0_71 = arith.constant 0 : index
    %98 = vector.load %arg5[%c1_69, %c0_70, %c0_71] : memref<9x8x8xf32, #tpu.memory_space<vmem>>, vector<1x8x8xf32>
    %99 = vector.shape_cast %98 : vector<1x8x8xf32> to vector<8x8xf32>
    %c0_72 = arith.constant 0 : index
    %c110_73 = arith.constant 110 : index
    %100 = vector.load %arg10[%c0_72, %c110_73] : memref<8x1024xf32, #tpu.memory_space<vmem>>, vector<8x768xf32>
    %cst_74 = arith.constant dense<0.000000e+00> : vector<8x768xf32>
    %101 = tpu.matmul %99, %100, %cst_74 {dimension_numbers = #tpu.dot_dimension_numbers<[1], [0], [0], [1], [0, 0, 1, 1], [], []>} : vector<8x8xf32>, vector<8x768xf32>, vector<8x768xf32> -> vector<8x768xf32>
    %102 = arith.addf %97, %101 : vector<8x768xf32>
    %c2_75 = arith.constant 2 : index
    %c0_76 = arith.constant 0 : index
    %c0_77 = arith.constant 0 : index
    %103 = vector.load %arg5[%c2_75, %c0_76, %c0_77] : memref<9x8x8xf32, #tpu.memory_space<vmem>>, vector<1x8x8xf32>
    %104 = vector.shape_cast %103 : vector<1x8x8xf32> to vector<8x8xf32>
    %c0_78 = arith.constant 0 : index
    %c111_79 = arith.constant 111 : index
    %105 = vector.load %arg10[%c0_78, %c111_79] : memref<8x1024xf32, #tpu.memory_space<vmem>>, vector<8x768xf32>
    %cst_80 = arith.constant dense<0.000000e+00> : vector<8x768xf32>
    %106 = tpu.matmul %104, %105, %cst_80 {dimension_numbers = #tpu.dot_dimension_numbers<[1], [0], [0], [1], [0, 0, 1, 1], [], []>} : vector<8x8xf32>, vector<8x768xf32>, vector<8x768xf32> -> vector<8x768xf32>
    %107 = arith.addf %102, %106 : vector<8x768xf32>
    %c3_81 = arith.constant 3 : index
    %c0_82 = arith.constant 0 : index
    %c0_83 = arith.constant 0 : index
    %108 = vector.load %arg5[%c3_81, %c0_82, %c0_83] : memref<9x8x8xf32, #tpu.memory_space<vmem>>, vector<1x8x8xf32>
    %109 = vector.shape_cast %108 : vector<1x8x8xf32> to vector<8x8xf32>
    %c0_84 = arith.constant 0 : index
    %c127_85 = arith.constant 127 : index
    %110 = vector.load %arg10[%c0_84, %c127_85] : memref<8x1024xf32, #tpu.memory_space<vmem>>, vector<8x768xf32>
    %cst_86 = arith.constant dense<0.000000e+00> : vector<8x768xf32>
    %111 = tpu.matmul %109, %110, %cst_86 {dimension_numbers = #tpu.dot_dimension_numbers<[1], [0], [0], [1], [0, 0, 1, 1], [], []>} : vector<8x8xf32>, vector<8x768xf32>, vector<8x768xf32> -> vector<8x768xf32>
    %112 = arith.addf %107, %111 : vector<8x768xf32>
    %c4_87 = arith.constant 4 : index
    %c0_88 = arith.constant 0 : index
    %c0_89 = arith.constant 0 : index
    %113 = vector.load %arg5[%c4_87, %c0_88, %c0_89] : memref<9x8x8xf32, #tpu.memory_space<vmem>>, vector<1x8x8xf32>
    %114 = vector.shape_cast %113 : vector<1x8x8xf32> to vector<8x8xf32>
    %c0_90 = arith.constant 0 : index
    %c128_91 = arith.constant 128 : index
    %115 = vector.load %arg10[%c0_90, %c128_91] : memref<8x1024xf32, #tpu.memory_space<vmem>>, vector<8x768xf32>
    %cst_92 = arith.constant dense<0.000000e+00> : vector<8x768xf32>
    %116 = tpu.matmul %114, %115, %cst_92 {dimension_numbers = #tpu.dot_dimension_numbers<[1], [0], [0], [1], [0, 0, 1, 1], [], []>} : vector<8x8xf32>, vector<8x768xf32>, vector<8x768xf32> -> vector<8x768xf32>
    %117 = arith.addf %112, %116 : vector<8x768xf32>
    %c5_93 = arith.constant 5 : index
    %c0_94 = arith.constant 0 : index
    %c0_95 = arith.constant 0 : index
    %118 = vector.load %arg5[%c5_93, %c0_94, %c0_95] : memref<9x8x8xf32, #tpu.memory_space<vmem>>, vector<1x8x8xf32>
    %119 = vector.shape_cast %118 : vector<1x8x8xf32> to vector<8x8xf32>
    %c0_96 = arith.constant 0 : index
    %c129_97 = arith.constant 129 : index
    %120 = vector.load %arg10[%c0_96, %c129_97] : memref<8x1024xf32, #tpu.memory_space<vmem>>, vector<8x768xf32>
    %cst_98 = arith.constant dense<0.000000e+00> : vector<8x768xf32>
    %121 = tpu.matmul %119, %120, %cst_98 {dimension_numbers = #tpu.dot_dimension_numbers<[1], [0], [0], [1], [0, 0, 1, 1], [], []>} : vector<8x8xf32>, vector<8x768xf32>, vector<8x768xf32> -> vector<8x768xf32>
    %122 = arith.addf %117, %121 : vector<8x768xf32>
    %c6_99 = arith.constant 6 : index
    %c0_100 = arith.constant 0 : index
    %c0_101 = arith.constant 0 : index
    %123 = vector.load %arg5[%c6_99, %c0_100, %c0_101] : memref<9x8x8xf32, #tpu.memory_space<vmem>>, vector<1x8x8xf32>
    %124 = vector.shape_cast %123 : vector<1x8x8xf32> to vector<8x8xf32>
    %c0_102 = arith.constant 0 : index
    %c145_103 = arith.constant 145 : index
    %125 = vector.load %arg10[%c0_102, %c145_103] : memref<8x1024xf32, #tpu.memory_space<vmem>>, vector<8x768xf32>
    %cst_104 = arith.constant dense<0.000000e+00> : vector<8x768xf32>
    %126 = tpu.matmul %124, %125, %cst_104 {dimension_numbers = #tpu.dot_dimension_numbers<[1], [0], [0], [1], [0, 0, 1, 1], [], []>} : vector<8x8xf32>, vector<8x768xf32>, vector<8x768xf32> -> vector<8x768xf32>
    %127 = arith.addf %122, %126 : vector<8x768xf32>
    %c7_105 = arith.constant 7 : index
    %c0_106 = arith.constant 0 : index
    %c0_107 = arith.constant 0 : index
    %128 = vector.load %arg5[%c7_105, %c0_106, %c0_107] : memref<9x8x8xf32, #tpu.memory_space<vmem>>, vector<1x8x8xf32>
    %129 = vector.shape_cast %128 : vector<1x8x8xf32> to vector<8x8xf32>
    %c0_108 = arith.constant 0 : index
    %c146_109 = arith.constant 146 : index
    %130 = vector.load %arg10[%c0_108, %c146_109] : memref<8x1024xf32, #tpu.memory_space<vmem>>, vector<8x768xf32>
    %cst_110 = arith.constant dense<0.000000e+00> : vector<8x768xf32>
    %131 = tpu.matmul %129, %130, %cst_110 {dimension_numbers = #tpu.dot_dimension_numbers<[1], [0], [0], [1], [0, 0, 1, 1], [], []>} : vector<8x8xf32>, vector<8x768xf32>, vector<8x768xf32> -> vector<8x768xf32>
    %132 = arith.addf %127, %131 : vector<8x768xf32>
    %c8_111 = arith.constant 8 : index
    %c0_112 = arith.constant 0 : index
    %c0_113 = arith.constant 0 : index
    %133 = vector.load %arg5[%c8_111, %c0_112, %c0_113] : memref<9x8x8xf32, #tpu.memory_space<vmem>>, vector<1x8x8xf32>
    %134 = vector.shape_cast %133 : vector<1x8x8xf32> to vector<8x8xf32>
    %c0_114 = arith.constant 0 : index
    %c147_115 = arith.constant 147 : index
    %135 = vector.load %arg10[%c0_114, %c147_115] : memref<8x1024xf32, #tpu.memory_space<vmem>>, vector<8x768xf32>
    %cst_116 = arith.constant dense<0.000000e+00> : vector<8x768xf32>
    %136 = tpu.matmul %134, %135, %cst_116 {dimension_numbers = #tpu.dot_dimension_numbers<[1], [0], [0], [1], [0, 0, 1, 1], [], []>} : vector<8x8xf32>, vector<8x768xf32>, vector<8x768xf32> -> vector<8x768xf32>
    %137 = arith.addf %132, %136 : vector<8x768xf32>
    %cst_117 = arith.constant 0.000000e+00 : f32
    %138 = vector.shape_cast %2 : vector<1x768xi1> to vector<1x768xi1>
    %139 = vector.broadcast %138 : vector<1x768xi1> to vector<8x768xi1>
    %140 = vector.broadcast %cst_117 : f32 to vector<8x768xf32>
    %141 = arith.select %139, %137, %140 : vector<8x768xi1>, vector<8x768xf32>
    %cst_118 = arith.constant dense<0.000000e+00> : vector<8xf32>
    %142 = vector.multi_reduction <add>, %141, %cst_118 [1] : vector<8x768xf32> to vector<8xf32>
    %143 = vector.shape_cast %142 : vector<8xf32> to vector<8x1xf32>
    %144 = arith.mulf %141, %141 : vector<8x768xf32>
    %cst_119 = arith.constant dense<0.000000e+00> : vector<8xf32>
    %145 = vector.multi_reduction <add>, %144, %cst_119 [1] : vector<8x768xf32> to vector<8xf32>
    %146 = vector.shape_cast %145 : vector<8xf32> to vector<8x1xf32>
    %cst_120 = arith.constant 0.001953125 : f32
    %147 = vector.broadcast %cst_120 : f32 to vector<8x1xf32>
    %148 = arith.mulf %143, %147 : vector<8x1xf32>
    %cst_121 = arith.constant 0.001953125 : f32
    %149 = vector.broadcast %cst_121 : f32 to vector<8x1xf32>
    %150 = arith.mulf %146, %149 : vector<8x1xf32>
    %151 = arith.mulf %148, %148 : vector<8x1xf32>
    %152 = arith.subf %150, %151 : vector<8x1xf32>
    %c0_122 = arith.constant 0 : index
    %c0_123 = arith.constant 0 : index
    %153 = vector.load %arg6[%c0_122, %c0_123] : memref<8x1xf32, #tpu.memory_space<vmem>>, vector<8x1xf32>
    %cst_124 = arith.constant 9.99999974E-6 : f32
    %154 = vector.broadcast %cst_124 : f32 to vector<8x1xf32>
    %155 = arith.addf %152, %154 : vector<8x1xf32>
    %156 = math.rsqrt %155 : vector<8x1xf32>
    %157 = arith.mulf %153, %156 : vector<8x1xf32>
    %c0_125 = arith.constant 0 : index
    %c0_126 = arith.constant 0 : index
    %158 = vector.load %arg7[%c0_125, %c0_126] : memref<8x1xf32, #tpu.memory_space<vmem>>, vector<8x1xf32>
    %159 = arith.mulf %148, %157 : vector<8x1xf32>
    %160 = arith.subf %158, %159 : vector<8x1xf32>
    %161 = vector.broadcast %157 : vector<8x1xf32> to vector<8x768xf32>
    %162 = arith.mulf %137, %161 : vector<8x768xf32>
    %163 = vector.broadcast %160 : vector<8x1xf32> to vector<8x768xf32>
    %164 = arith.addf %162, %163 : vector<8x768xf32>
    %165 = arith.addf %55, %164 : vector<8x768xf32>
    %cst_127 = arith.constant 0.000000e+00 : f32
    %166 = vector.broadcast %cst_127 : f32 to vector<8x768xf32>
    %167 = arith.cmpf ogt, %165, %166 : vector<8x768xf32>
    %cst_128 = arith.constant 0.00999999977 : f32
    %168 = vector.broadcast %cst_128 : f32 to vector<8x768xf32>
    %169 = arith.mulf %168, %165 : vector<8x768xf32>
    %170 = arith.select %167, %165, %169 : vector<8x768xi1>, vector<8x768xf32>
    %c0_129 = arith.constant 0 : index
    %c0_130 = arith.constant 0 : index
    %171 = vector.load %arg9[%c0_129, %c0_130] : memref<8x768xf32, #tpu.memory_space<vmem>>, vector<8x768xf32>
    tpu.vector_store %arg9[%c0_129, %c0_130], %170 {strides = array<i32>} : memref<8x768xf32, #tpu.memory_space<vmem>>, vector<8x768xf32>,
    return
  }
}

</mosaic_0001>

<llo_original>
// kernel: tpu_custom_call.1
$region0: #{tpu_custom_call.1}
  #allocation0 [shape = 'u32[]', space=smem, size = 0x4, offset = 0x4, fixed_abs, tag = 'smem constant byte address 0x4 - core index']
  #allocation1 [shape = 'u32[144,128]{1,0:T(1,128)}', space=vmem, size = 0x12000, scoped, tag = 'internal scratch']
  #allocation2 [shape = 'f32[8,1024]{1,0:T(8,128)}', space=vmem, size = 0x8000, scoped, tag = 'scratch operand']
  %s0 = inlined_call_operand.vmem [shape: f32[8,768], index: 0, kind: input, shape index: {}]
  %s1 = inlined_call_operand.vmem [shape: f32[1,768], index: 1, kind: input, shape index: {}]
  %s2 = inlined_call_operand.vmem [shape: f32[9,16,8], index: 2, kind: input, shape index: {}]
  %s3 = inlined_call_operand.vmem [shape: f32[8,1], index: 3, kind: input, shape index: {}]
  %s4 = inlined_call_operand.vmem [shape: f32[8,1], index: 4, kind: input, shape index: {}]
  %s5 = inlined_call_operand.vmem [shape: f32[9,8,8], index: 5, kind: input, shape index: {}]
  %s6 = inlined_call_operand.vmem [shape: f32[8,1], index: 6, kind: input, shape index: {}]
  %s7 = inlined_call_operand.vmem [shape: f32[8,1], index: 7, kind: input, shape index: {}]
  %s8 = inlined_call_operand.vmem [shape: f32[8,1], index: 8, kind: input, shape index: {}]
  %s9 = inlined_call_operand.hbm [shape: f32[8,768], index: 9, kind: output, shape index: {}]
  %s10 = sld [smem:[#allocation0]]
  $region46: #{tpu_custom_call.1} parent=0
    _
  %s12 = ssub.s32 1, %s10
  %s13 = scalar_select 0, %s12, %s10
  $region1: #{tpu_custom_call.1} parent=0
    #allocation3 [shape = 'u8[24576]{0}', space=vmem, size = 0x6000, scoped, tag = 'output window, operand 0, single buffered']
    #allocation4 [shape = 's32[1]{0}', space=sflag, size = 0x4, scoped, tag = 'scoped memory for tpu_custom_call.1']
    %14 = vsyncpa [#allocation4], 0
    // Predicated region
    $region2: #{tpu_custom_call.1} parent=1 // pred_check
      _
    $region3: #{tpu_custom_call.1} parent=1 // pred_check_branch
      %16 = sbr.rel (0) target = $region5
    $region4: #{tpu_custom_call.1} parent=1 // pred_region
      _
    $region5: #{tpu_custom_call.1} parent=1 // pred_fallthru
      _
    // Predicated region
    $region6: #{tpu_custom_call.1} parent=1 // pred_check
      _
    $region7: #{tpu_custom_call.1} parent=1 // pred_check_branch
      %18 = sbr.rel (0) target = $region9
    $region8: #{tpu_custom_call.1} parent=1 // pred_region
      _
    $region9: #{tpu_custom_call.1} parent=1 // pred_fallthru
      _
    // Predicated region
    $region10: #{tpu_custom_call.1} parent=1 // pred_check
      _
    $region11: #{tpu_custom_call.1} parent=1 // pred_check_branch
      %20 = sbr.rel (0) target = $region13
    $region12: #{tpu_custom_call.1} parent=1 // pred_region
      _
    $region13: #{tpu_custom_call.1} parent=1 // pred_fallthru
      _
    // Predicated region
    $region14: #{tpu_custom_call.1} parent=1 // pred_check
      _
    $region15: #{tpu_custom_call.1} parent=1 // pred_check_branch
      %22 = sbr.rel (0) target = $region17
    $region16: #{tpu_custom_call.1} parent=1 // pred_region
      _
    $region17: #{tpu_custom_call.1} parent=1 // pred_fallthru
      _
    // Predicated region
    $region18: #{tpu_custom_call.1} parent=1 // pred_check
      _
    $region19: #{tpu_custom_call.1} parent=1 // pred_check_branch
      %24 = sbr.rel (0) target = $region21
    $region20: #{tpu_custom_call.1} parent=1 // pred_region
      _
    $region21: #{tpu_custom_call.1} parent=1 // pred_fallthru
      _
    // Predicated region
    $region22: #{tpu_custom_call.1} parent=1 // pred_check
      _
    $region23: #{tpu_custom_call.1} parent=1 // pred_check_branch
      %26 = sbr.rel (0) target = $region25
    $region24: #{tpu_custom_call.1} parent=1 // pred_region
      _
    $region25: #{tpu_custom_call.1} parent=1 // pred_fallthru
      _
    // Predicated region
    $region26: #{tpu_custom_call.1} parent=1 // pred_check
      _
    $region27: #{tpu_custom_call.1} parent=1 // pred_check_branch
      %28 = sbr.rel (0) target = $region29
    $region28: #{tpu_custom_call.1} parent=1 // pred_region
      _
    $region29: #{tpu_custom_call.1} parent=1 // pred_fallthru
      _
    // Predicated region
    $region30: #{tpu_custom_call.1} parent=1 // pred_check
      _
    $region31: #{tpu_custom_call.1} parent=1 // pred_check_branch
      %30 = sbr.rel (0) target = $region33
    $region32: #{tpu_custom_call.1} parent=1 // pred_region
      _
    $region33: #{tpu_custom_call.1} parent=1 // pred_fallthru
      _
    // Predicated region
    $region34: #{tpu_custom_call.1} parent=1 // pred_check
      _
    $region35: #{tpu_custom_call.1} parent=1 // pred_check_branch
      %32 = sbr.rel (0) target = $region37
    $region36: #{tpu_custom_call.1} parent=1 // pred_region
      _
    $region37: #{tpu_custom_call.1} parent=1 // pred_fallthru
      _
    %v33 = vld [vmem:[%s1] sm:$0x3f]
    %vm34 = vcmp.ne.f32.partialorder %v33, 0.0
    %35 = vst [vmem:[#allocation2] sm:$0xff] 0.0
    %36 = vst [vmem:[#allocation2 + $0x38] sm:$0xff] 0.0
    %v37 = vld [vmem:[%s0] sm:$0xff]
    %v38 = vld [vmem:[%s0 + $0x8] sm:$0xff]
    %v39 = vld [vmem:[%s0 + $0x10] sm:$0xff]
    %v40 = vld [vmem:[%s0 + $0x18] sm:$0xff]
    %v41 = vld [vmem:[%s0 + $0x20] sm:$0xff]
    %v42 = vld [vmem:[%s0 + $0x28] sm:$0xff]
    %43 = vst [vmem:[#allocation2 + $0x8] sm:$0xff] %v37
    %44 = vst [vmem:[#allocation2 + $0x10] sm:$0xff] %v38
    %45 = vst [vmem:[#allocation2 + $0x18] sm:$0xff] %v39
    %46 = vst [vmem:[#allocation2 + $0x20] sm:$0xff] %v40
    %47 = vst [vmem:[#allocation2 + $0x28] sm:$0xff] %v41
    %48 = vst [vmem:[#allocation2 + $0x30] sm:$0xff] %v42
    %v49 = vld [vmem:[%s2] sm:$0xff]
    %v50 = vld [vmem:[%s2 + $0x8] sm:$0xff]
    %v51 = vld [vmem:[#allocation2] sm:$0xff]
    %v52 = vld [vmem:[#allocation2 + $0x8] sm:$0xff]
    %v53 = vld [vmem:[#allocation2 + $0x10] sm:$0xff]
    %v54 = vld [vmem:[#allocation2 + $0x18] sm:$0xff]
    %v55 = vld [vmem:[#allocation2 + $0x20] sm:$0xff]
    %v56 = vld [vmem:[#allocation2 + $0x28] sm:$0xff]
    %v57 = vld [vmem:[#allocation2 + $0x30] sm:$0xff]
    %s58 = scalar_lea.vmem %s2, 16
    %v59 = vld [vmem:[%s58] sm:$0xff]
    %v60 = vld [vmem:[%s58 + $0x8] sm:$0xff]
    %68 = vrot.lane.b32.xlu0 %v51, 18
    %v69 = vpop.permute.xlu0 %68
    %70 = vrot.lane.b32.xlu0 %v52, 18
    %v71 = vpop.permute.xlu0 %70
    %72 = vrot.lane.b32.xlu0 %v53, 18
    %v73 = vpop.permute.xlu0 %72
    %74 = vrot.lane.b32.xlu0 %v54, 18
    %v75 = vpop.permute.xlu0 %74
    %76 = vrot.lane.b32.xlu0 %v55, 18
    %v77 = vpop.permute.xlu0 %76
    %78 = vrot.lane.b32.xlu0 %v56, 18
    %v79 = vpop.permute.xlu0 %78
    %80 = vrot.lane.b32.xlu0 %v57, 18
    %v81 = vpop.permute.xlu0 %80
    %vm82 = vcmask 146432
    %v83 = vsel %vm82, %v69, %v71
    %v84 = vsel %vm82, %v71, %v73
    %v85 = vsel %vm82, %v73, %v75
    %v86 = vsel %vm82, %v75, %v77
    %v87 = vsel %vm82, %v77, %v79
    %v88 = vsel %vm82, %v79, %v81
    %vm95 = vcmask 64512
    %v97 = vsel %vm95, %v59, 0
    %v100 = vsel %vm95, %v60, 0
    %102 = vmatprep.subr.mxu0 %v84
    %103 = vmatpush1.msra.mxu0 %v83
    %104 = vmatprep.subr.mxu0 0.0
    %105 = vmatpush1.msra.mxu0 0.0
    %106 = vmatprep.subr.mxu0 0.0
    %107 = vmatpush1.msra.mxu0 0.0
    %108 = vmatprep.subr.mxu0 0.0
    %109 = vmatpush1.msra.mxu0 0.0
    %110 = vmatprep.subr.mxu0 0.0
    %111 = vmatpush1.msra.mxu0 0.0
    %112 = vmatprep.subr.mxu0 0.0
    %113 = vmatpush1.msra.mxu0 0.0
    %114 = vmatprep.subr.mxu0 0.0
    %115 = vmatpush1.msra.mxu0 0.0
    %116 = vmatprep.subr.mxu0 0.0
    %117 = vmatpush1.msra.mxu0 0.0
    %118 = vmatprep.subr.mxu0 0.0
    %119 = vmatpush1.msra.mxu0 0.0
    %120 = vmatprep.subr.mxu0 0.0
    %121 = vmatpush1.msra.mxu0 0.0
    %122 = vmatprep.subr.mxu0 0.0
    %123 = vmatpush1.msra.mxu0 0.0
    %124 = vmatprep.subr.mxu0 0.0
    %125 = vmatpush1.msra.mxu0 0.0
    %126 = vmatprep.subr.mxu0 0.0
    %127 = vmatpush1.msra.mxu0 0.0
    %128 = vmatprep.subr.mxu0 0.0
    %129 = vmatpush1.msra.mxu0 0.0
    %130 = vmatprep.subr.mxu0 0.0
    %131 = vmatpush1.msra.mxu0 0.0
    %132 = vmatprep.subr.mxu0 0.0
    %133 = vmatpush1.msra.mxu0 0.0
    %134 = vmatprep.subr.mxu0 0.0
    %135 = vmatpush1.msra.mxu0 0.0
    %136 = vmatprep.subr.mxu0 0.0
    %137 = vmatpush1.msra.mxu0 0.0
    %138 = vmatprep.subr.mxu0 0.0
    %139 = vmatpush1.msra.mxu0 0.0
    %140 = vmatprep.subr.mxu0 0.0
    %141 = vmatpush1.msra.mxu0 0.0
    %142 = vmatprep.subr.mxu0 0.0
    %143 = vmatpush1.msra.mxu0 0.0
    %144 = vmatprep.subr.mxu0 0.0
    %145 = vmatpush1.msra.mxu0 0.0
    %146 = vmatprep.subr.mxu0 0.0
    %147 = vmatpush1.msra.mxu0 0.0
    %148 = vmatprep.subr.mxu0 0.0
    %149 = vmatpush1.msra.mxu0 0.0
    %150 = vmatprep.subr.mxu0 0.0
    %151 = vmatpush1.msra.mxu0 0.0
    %152 = vmatprep.subr.mxu0 0.0
    %153 = vmatpush1.msra.mxu0 0.0
    %154 = vmatprep.subr.mxu0 0.0
    %155 = vmatpush1.msra.mxu0 0.0
    %156 = vmatprep.subr.mxu0 0.0
    %157 = vmatpush1.msra.mxu0 0.0
    %158 = vmatprep.subr.mxu0 0.0
    %159 = vmatpush1.msra.mxu0 0.0
    %160 = vmatprep.subr.mxu0 0.0
    %161 = vmatpush1.msra.mxu0 0.0
    %162 = vmatprep.subr.mxu0 0.0
    %163 = vmatpush1.msra.mxu0 0.0
    %164 = vmatprep.subr.mxu0 0.0
    %165 = vmatpush1.msra.mxu0 0.0
    %166 = vmatprep.mubr.f32.mxu0 0.0
    %167 = vmatmul.mubr.f32.gmra.mrb[0].mxu0 %v97
    %v168 = vpop.f32.mrb[0].mxu0
    %v169 = vadd.f32 0.0, %v168
    %v170 = vpop.f32.mrb[0].mxu0
    %v171 = vadd.f32 0.0, %v170
    %172 = vmatprep.mubr.f32.mxu0 0.0
    %173 = vmatmul.mubr.f32.gmra.mrb[0].mxu0 %v100
    %v174 = vpop.f32.mrb[0].mxu0
    %v175 = vadd.f32 0.0, %v174
    %v176 = vpop.f32.mrb[0].mxu0
    %v177 = vadd.f32 0.0, %v176
    %178 = vdwg.mxu0
    %179 = vmatprep.subr.mxu0 %v86
    %180 = vmatpush1.msra.mxu0 %v85
    %181 = vmatprep.subr.mxu0 0.0
    %182 = vmatpush1.msra.mxu0 0.0
    %183 = vmatprep.subr.mxu0 0.0
    %184 = vmatpush1.msra.mxu0 0.0
    %185 = vmatprep.subr.mxu0 0.0
    %186 = vmatpush1.msra.mxu0 0.0
    %187 = vmatprep.subr.mxu0 0.0
    %188 = vmatpush1.msra.mxu0 0.0
    %189 = vmatprep.subr.mxu0 0.0
    %190 = vmatpush1.msra.mxu0 0.0
    %191 = vmatprep.subr.mxu0 0.0
    %192 = vmatpush1.msra.mxu0 0.0
    %193 = vmatprep.subr.mxu0 0.0
    %194 = vmatpush1.msra.mxu0 0.0
    %195 = vmatprep.subr.mxu0 0.0
    %196 = vmatpush1.msra.mxu0 0.0
    %197 = vmatprep.subr.mxu0 0.0
    %198 = vmatpush1.msra.mxu0 0.0
    %199 = vmatprep.subr.mxu0 0.0
    %200 = vmatpush1.msra.mxu0 0.0
    %201 = vmatprep.subr.mxu0 0.0
    %202 = vmatpush1.msra.mxu0 0.0
    %203 = vmatprep.subr.mxu0 0.0
    %204 = vmatpush1.msra.mxu0 0.0
    %205 = vmatprep.subr.mxu0 0.0
    %206 = vmatpush1.msra.mxu0 0.0
    %207 = vmatprep.subr.mxu0 0.0
    %208 = vmatpush1.msra.mxu0 0.0
    %209 = vmatprep.subr.mxu0 0.0
    %210 = vmatpush1.msra.mxu0 0.0
    %211 = vmatprep.subr.mxu0 0.0
    %212 = vmatpush1.msra.mxu0 0.0
    %213 = vmatprep.subr.mxu0 0.0
    %214 = vmatpush1.msra.mxu0 0.0
    %215 = vmatprep.subr.mxu0 0.0
    %216 = vmatpush1.msra.mxu0 0.0
    %217 = vmatprep.subr.mxu0 0.0
    %218 = vmatpush1.msra.mxu0 0.0
    %219 = vmatprep.subr.mxu0 0.0
    %220 = vmatpush1.msra.mxu0 0.0
    %221 = vmatprep.subr.mxu0 0.0
    %222 = vmatpush1.msra.mxu0 0.0
    %223 = vmatprep.subr.mxu0 0.0
    %224 = vmatpush1.msra.mxu0 0.0
    %225 = vmatprep.subr.mxu0 0.0
    %226 = vmatpush1.msra.mxu0 0.0
    %227 = vmatprep.subr.mxu0 0.0
    %228 = vmatpush1.msra.mxu0 0.0
    %229 = vmatprep.subr.mxu0 0.0
    %230 = vmatpush1.msra.mxu0 0.0
    %231 = vmatprep.subr.mxu0 0.0
    %232 = vmatpush1.msra.mxu0 0.0
    %233 = vmatprep.subr.mxu0 0.0
    %234 = vmatpush1.msra.mxu0 0.0
    %235 = vmatprep.subr.mxu0 0.0
    %236 = vmatpush1.msra.mxu0 0.0
    %237 = vmatprep.subr.mxu0 0.0
    %238 = vmatpush1.msra.mxu0 0.0
    %239 = vmatprep.subr.mxu0 0.0
    %240 = vmatpush1.msra.mxu0 0.0
    %241 = vmatprep.subr.mxu0 0.0
    %242 = vmatpush1.msra.mxu0 0.0
    %243 = vmatprep.mubr.f32.mxu0 0.0
    %244 = vmatmul.mubr.f32.gmra.mrb[0].mxu0 %v97
    %v245 = vpop.f32.mrb[0].mxu0
    %v246 = vadd.f32 0.0, %v245
    %v247 = vpop.f32.mrb[0].mxu0
    %v248 = vadd.f32 0.0, %v247
    %249 = vmatprep.mubr.f32.mxu0 0.0
    %250 = vmatmul.mubr.f32.gmra.mrb[0].mxu0 %v100
    %v251 = vpop.f32.mrb[0].mxu0
    %v252 = vadd.f32 0.0, %v251
    %v253 = vpop.f32.mrb[0].mxu0
    %v254 = vadd.f32 0.0, %v253
    %255 = vdwg.mxu0
    %256 = vmatprep.subr.mxu0 %v88
    %257 = vmatpush1.msra.mxu0 %v87
    %258 = vmatprep.subr.mxu0 0.0
    %259 = vmatpush1.msra.mxu0 0.0
    %260 = vmatprep.subr.mxu0 0.0
    %261 = vmatpush1.msra.mxu0 0.0
    %262 = vmatprep.subr.mxu0 0.0
    %263 = vmatpush1.msra.mxu0 0.0
    %264 = vmatprep.subr.mxu0 0.0
    %265 = vmatpush1.msra.mxu0 0.0
    %266 = vmatprep.subr.mxu0 0.0
    %267 = vmatpush1.msra.mxu0 0.0
    %268 = vmatprep.subr.mxu0 0.0
    %269 = vmatpush1.msra.mxu0 0.0
    %270 = vmatprep.subr.mxu0 0.0
    %271 = vmatpush1.msra.mxu0 0.0
    %272 = vmatprep.subr.mxu0 0.0
    %273 = vmatpush1.msra.mxu0 0.0
    %274 = vmatprep.subr.mxu0 0.0
    %275 = vmatpush1.msra.mxu0 0.0
    %276 = vmatprep.subr.mxu0 0.0
    %277 = vmatpush1.msra.mxu0 0.0
    %278 = vmatprep.subr.mxu0 0.0
    %279 = vmatpush1.msra.mxu0 0.0
    %280 = vmatprep.subr.mxu0 0.0
    %281 = vmatpush1.msra.mxu0 0.0
    %282 = vmatprep.subr.mxu0 0.0
    %283 = vmatpush1.msra.mxu0 0.0
    %284 = vmatprep.subr.mxu0 0.0
    %285 = vmatpush1.msra.mxu0 0.0
    %286 = vmatprep.subr.mxu0 0.0
    %287 = vmatpush1.msra.mxu0 0.0
    %288 = vmatprep.subr.mxu0 0.0
    %289 = vmatpush1.msra.mxu0 0.0
    %290 = vmatprep.subr.mxu0 0.0
    %291 = vmatpush1.msra.mxu0 0.0
    %292 = vmatprep.subr.mxu0 0.0
    %293 = vmatpush1.msra.mxu0 0.0
    %294 = vmatprep.subr.mxu0 0.0
    %295 = vmatpush1.msra.mxu0 0.0
    %296 = vmatprep.subr.mxu0 0.0
    %297 = vmatpush1.msra.mxu0 0.0
    %298 = vmatprep.subr.mxu0 0.0
    %299 = vmatpush1.msra.mxu0 0.0
    %300 = vmatprep.subr.mxu0 0.0
    %301 = vmatpush1.msra.mxu0 0.0
    %302 = vmatprep.subr.mxu0 0.0
    %303 = vmatpush1.msra.mxu0 0.0
    %304 = vmatprep.subr.mxu0 0.0
    %305 = vmatpush1.msra.mxu0 0.0
    %306 = vmatprep.subr.mxu0 0.0
    %307 = vmatpush1.msra.mxu0 0.0
    %308 = vmatprep.subr.mxu0 0.0
    %309 = vmatpush1.msra.mxu0 0.0
    %310 = vmatprep.subr.mxu0 0.0
    %311 = vmatpush1.msra.mxu0 0.0
    %312 = vmatprep.subr.mxu0 0.0
    %313 = vmatpush1.msra.mxu0 0.0
    %314 = vmatprep.subr.mxu0 0.0
    %315 = vmatpush1.msra.mxu0 0.0
    %316 = vmatprep.subr.mxu0 0.0
    %317 = vmatpush1.msra.mxu0 0.0
    %318 = vmatprep.subr.mxu0 0.0
    %319 = vmatpush1.msra.mxu0 0.0
    %320 = vmatprep.mubr.f32.mxu0 0.0
    %321 = vmatmul.mubr.f32.gmra.mrb[0].mxu0 %v97
    %v322 = vpop.f32.mrb[0].mxu0
    %v323 = vadd.f32 0.0, %v322
    %v324 = vpop.f32.mrb[0].mxu0
    %v325 = vadd.f32 0.0, %v324
    %326 = vmatprep.mubr.f32.mxu0 0.0
    %327 = vmatmul.mubr.f32.gmra.mrb[0].mxu0 %v100
    %v328 = vpop.f32.mrb[0].mxu0
    %v329 = vadd.f32 0.0, %v328
    %v330 = vpop.f32.mrb[0].mxu0
    %v331 = vadd.f32 0.0, %v330
    %332 = vdwg.mxu0
    %333 = vrot.lane.b32.xlu0 %v51, 19
    %v334 = vpop.permute.xlu0 %333
    %335 = vrot.lane.b32.xlu0 %v52, 19
    %v336 = vpop.permute.xlu0 %335
    %337 = vrot.lane.b32.xlu0 %v53, 19
    %v338 = vpop.permute.xlu0 %337
    %339 = vrot.lane.b32.xlu0 %v54, 19
    %v340 = vpop.permute.xlu0 %339
    %341 = vrot.lane.b32.xlu0 %v55, 19
    %v342 = vpop.permute.xlu0 %341
    %343 = vrot.lane.b32.xlu0 %v56, 19
    %v344 = vpop.permute.xlu0 %343
    %345 = vrot.lane.b32.xlu0 %v57, 19
    %v346 = vpop.permute.xlu0 %345
    %vm347 = vcmask 154624
    %v348 = vsel %vm347, %v334, %v336
    %v349 = vsel %vm347, %v336, %v338
    %v350 = vsel %vm347, %v338, %v340
    %v351 = vsel %vm347, %v340, %v342
    %v352 = vsel %vm347, %v342, %v344
    %v353 = vsel %vm347, %v344, %v346
    %v361 = vsel %vm95, %v49, 0
    %v364 = vsel %vm95, %v50, 0
    %366 = vmatprep.subr.mxu0 %v349
    %367 = vmatpush1.msra.mxu0 %v348
    %368 = vmatprep.subr.mxu0 0.0
    %369 = vmatpush1.msra.mxu0 0.0
    %370 = vmatprep.subr.mxu0 0.0
    %371 = vmatpush1.msra.mxu0 0.0
    %372 = vmatprep.subr.mxu0 0.0
    %373 = vmatpush1.msra.mxu0 0.0
    %374 = vmatprep.subr.mxu0 0.0
    %375 = vmatpush1.msra.mxu0 0.0
    %376 = vmatprep.subr.mxu0 0.0
    %377 = vmatpush1.msra.mxu0 0.0
    %378 = vmatprep.subr.mxu0 0.0
    %379 = vmatpush1.msra.mxu0 0.0
    %380 = vmatprep.subr.mxu0 0.0
    %381 = vmatpush1.msra.mxu0 0.0
    %382 = vmatprep.subr.mxu0 0.0
    %383 = vmatpush1.msra.mxu0 0.0
    %384 = vmatprep.subr.mxu0 0.0
    %385 = vmatpush1.msra.mxu0 0.0
    %386 = vmatprep.subr.mxu0 0.0
    %387 = vmatpush1.msra.mxu0 0.0
    %388 = vmatprep.subr.mxu0 0.0
    %389 = vmatpush1.msra.mxu0 0.0
    %390 = vmatprep.subr.mxu0 0.0
    %391 = vmatpush1.msra.mxu0 0.0
    %392 = vmatprep.subr.mxu0 0.0
    %393 = vmatpush1.msra.mxu0 0.0
    %394 = vmatprep.subr.mxu0 0.0
    %395 = vmatpush1.msra.mxu0 0.0
    %396 = vmatprep.subr.mxu0 0.0
    %397 = vmatpush1.msra.mxu0 0.0
    %398 = vmatprep.subr.mxu0 0.0
    %399 = vmatpush1.msra.mxu0 0.0
    %400 = vmatprep.subr.mxu0 0.0
    %401 = vmatpush1.msra.mxu0 0.0
    %402 = vmatprep.subr.mxu0 0.0
    %403 = vmatpush1.msra.mxu0 0.0
    %404 = vmatprep.subr.mxu0 0.0
    %405 = vmatpush1.msra.mxu0 0.0
    %406 = vmatprep.subr.mxu0 0.0
    %407 = vmatpush1.msra.mxu0 0.0
    %408 = vmatprep.subr.mxu0 0.0
    %409 = vmatpush1.msra.mxu0 0.0
    %410 = vmatprep.subr.mxu0 0.0
    %411 = vmatpush1.msra.mxu0 0.0
    %412 = vmatprep.subr.mxu0 0.0
    %413 = vmatpush1.msra.mxu0 0.0
    %414 = vmatprep.subr.mxu0 0.0
    %415 = vmatpush1.msra.mxu0 0.0
    %416 = vmatprep.subr.mxu0 0.0
    %417 = vmatpush1.msra.mxu0 0.0
    %418 = vmatprep.subr.mxu0 0.0
    %419 = vmatpush1.msra.mxu0 0.0
    %420 = vmatprep.subr.mxu0 0.0
    %421 = vmatpush1.msra.mxu0 0.0
    %422 = vmatprep.subr.mxu0 0.0
    %423 = vmatpush1.msra.mxu0 0.0
    %424 = vmatprep.subr.mxu0 0.0
    %425 = vmatpush1.msra.mxu0 0.0
    %426 = vmatprep.subr.mxu0 0.0
    %427 = vmatpush1.msra.mxu0 0.0
    %428 = vmatprep.subr.mxu0 0.0
    %429 = vmatpush1.msra.mxu0 0.0
    %430 = vmatprep.mubr.f32.mxu0 0.0
    %431 = vmatmul.mubr.f32.gmra.mrb[0].mxu0 %v361
    %v432 = vpop.f32.mrb[0].mxu0
    %v433 = vadd.f32 %v169, %v432
    %v434 = vpop.f32.mrb[0].mxu0
    %v435 = vadd.f32 %v171, %v434
    %436 = vmatprep.mubr.f32.mxu0 0.0
    %437 = vmatmul.mubr.f32.gmra.mrb[0].mxu0 %v364
    %v438 = vpop.f32.mrb[0].mxu0
    %v439 = vadd.f32 %v175, %v438
    %v440 = vpop.f32.mrb[0].mxu0
    %v441 = vadd.f32 %v177, %v440
    %442 = vdwg.mxu0
    %443 = vmatprep.subr.mxu0 %v351
    %444 = vmatpush1.msra.mxu0 %v350
    %445 = vmatprep.subr.mxu0 0.0
    %446 = vmatpush1.msra.mxu0 0.0
    %447 = vmatprep.subr.mxu0 0.0
    %448 = vmatpush1.msra.mxu0 0.0
    %449 = vmatprep.subr.mxu0 0.0
    %450 = vmatpush1.msra.mxu0 0.0
    %451 = vmatprep.subr.mxu0 0.0
    %452 = vmatpush1.msra.mxu0 0.0
    %453 = vmatprep.subr.mxu0 0.0
    %454 = vmatpush1.msra.mxu0 0.0
    %455 = vmatprep.subr.mxu0 0.0
    %456 = vmatpush1.msra.mxu0 0.0
    %457 = vmatprep.subr.mxu0 0.0
    %458 = vmatpush1.msra.mxu0 0.0
    %459 = vmatprep.subr.mxu0 0.0
    %460 = vmatpush1.msra.mxu0 0.0
    %461 = vmatprep.subr.mxu0 0.0
    %462 = vmatpush1.msra.mxu0 0.0
    %463 = vmatprep.subr.mxu0 0.0
    %464 = vmatpush1.msra.mxu0 0.0
    %465 = vmatprep.subr.mxu0 0.0
    %466 = vmatpush1.msra.mxu0 0.0
    %467 = vmatprep.subr.mxu0 0.0
    %468 = vmatpush1.msra.mxu0 0.0
    %469 = vmatprep.subr.mxu0 0.0
    %470 = vmatpush1.msra.mxu0 0.0
    %471 = vmatprep.subr.mxu0 0.0
    %472 = vmatpush1.msra.mxu0 0.0
    %473 = vmatprep.subr.mxu0 0.0
    %474 = vmatpush1.msra.mxu0 0.0
    %475 = vmatprep.subr.mxu0 0.0
    %476 = vmatpush1.msra.mxu0 0.0
    %477 = vmatprep.subr.mxu0 0.0
    %478 = vmatpush1.msra.mxu0 0.0
    %479 = vmatprep.subr.mxu0 0.0
    %480 = vmatpush1.msra.mxu0 0.0
    %481 = vmatprep.subr.mxu0 0.0
    %482 = vmatpush1.msra.mxu0 0.0
    %483 = vmatprep.subr.mxu0 0.0
    %484 = vmatpush1.msra.mxu0 0.0
    %485 = vmatprep.subr.mxu0 0.0
    %486 = vmatpush1.msra.mxu0 0.0
    %487 = vmatprep.subr.mxu0 0.0
    %488 = vmatpush1.msra.mxu0 0.0
    %489 = vmatprep.subr.mxu0 0.0
    %490 = vmatpush1.msra.mxu0 0.0
    %491 = vmatprep.subr.mxu0 0.0
    %492 = vmatpush1.msra.mxu0 0.0
    %493 = vmatprep.subr.mxu0 0.0
    %494 = vmatpush1.msra.mxu0 0.0
    %495 = vmatprep.subr.mxu0 0.0
    %496 = vmatpush1.msra.mxu0 0.0
    %497 = vmatprep.subr.mxu0 0.0
    %498 = vmatpush1.msra.mxu0 0.0
    %499 = vmatprep.subr.mxu0 0.0
    %500 = vmatpush1.msra.mxu0 0.0
    %501 = vmatprep.subr.mxu0 0.0
    %502 = vmatpush1.msra.mxu0 0.0
    %503 = vmatprep.subr.mxu0 0.0
    %504 = vmatpush1.msra.mxu0 0.0
    %505 = vmatprep.subr.mxu0 0.0
    %506 = vmatpush1.msra.mxu0 0.0
    %507 = vmatprep.mubr.f32.mxu0 0.0
    %508 = vmatmul.mubr.f32.gmra.mrb[0].mxu0 %v361
    %v509 = vpop.f32.mrb[0].mxu0
    %v510 = vadd.f32 %v246, %v509
    %v511 = vpop.f32.mrb[0].mxu0
    %v512 = vadd.f32 %v248, %v511
    %513 = vmatprep.mubr.f32.mxu0 0.0
    %514 = vmatmul.mubr.f32.gmra.mrb[0].mxu0 %v364
    %v515 = vpop.f32.mrb[0].mxu0
    %v516 = vadd.f32 %v252, %v515
    %v517 = vpop.f32.mrb[0].mxu0
    %v518 = vadd.f32 %v254, %v517
    %519 = vdwg.mxu0
    %520 = vmatprep.subr.mxu0 %v353
    %521 = vmatpush1.msra.mxu0 %v352
    %522 = vmatprep.subr.mxu0 0.0
    %523 = vmatpush1.msra.mxu0 0.0
    %524 = vmatprep.subr.mxu0 0.0
    %525 = vmatpush1.msra.mxu0 0.0
    %526 = vmatprep.subr.mxu0 0.0
    %527 = vmatpush1.msra.mxu0 0.0
    %528 = vmatprep.subr.mxu0 0.0
    %529 = vmatpush1.msra.mxu0 0.0
    %530 = vmatprep.subr.mxu0 0.0
    %531 = vmatpush1.msra.mxu0 0.0
    %532 = vmatprep.subr.mxu0 0.0
    %533 = vmatpush1.msra.mxu0 0.0
    %534 = vmatprep.subr.mxu0 0.0
    %535 = vmatpush1.msra.mxu0 0.0
    %536 = vmatprep.subr.mxu0 0.0
    %537 = vmatpush1.msra.mxu0 0.0
    %538 = vmatprep.subr.mxu0 0.0
    %539 = vmatpush1.msra.mxu0 0.0
    %540 = vmatprep.subr.mxu0 0.0
    %541 = vmatpush1.msra.mxu0 0.0
    %542 = vmatprep.subr.mxu0 0.0
    %543 = vmatpush1.msra.mxu0 0.0
    %544 = vmatprep.subr.mxu0 0.0
    %545 = vmatpush1.msra.mxu0 0.0
    %546 = vmatprep.subr.mxu0 0.0
    %547 = vmatpush1.msra.mxu0 0.0
    %548 = vmatprep.subr.mxu0 0.0
    %549 = vmatpush1.msra.mxu0 0.0
    %550 = vmatprep.subr.mxu0 0.0
    %551 = vmatpush1.msra.mxu0 0.0
    %552 = vmatprep.subr.mxu0 0.0
    %553 = vmatpush1.msra.mxu0 0.0
    %554 = vmatprep.subr.mxu0 0.0
    %555 = vmatpush1.msra.mxu0 0.0
    %556 = vmatprep.subr.mxu0 0.0
    %557 = vmatpush1.msra.mxu0 0.0
    %558 = vmatprep.subr.mxu0 0.0
    %559 = vmatpush1.msra.mxu0 0.0
    %560 = vmatprep.subr.mxu0 0.0
    %561 = vmatpush1.msra.mxu0 0.0
    %562 = vmatprep.subr.mxu0 0.0
    %563 = vmatpush1.msra.mxu0 0.0
    %564 = vmatprep.subr.mxu0 0.0
    %565 = vmatpush1.msra.mxu0 0.0
    %566 = vmatprep.subr.mxu0 0.0
    %567 = vmatpush1.msra.mxu0 0.0
    %568 = vmatprep.subr.mxu0 0.0
    %569 = vmatpush1.msra.mxu0 0.0
    %570 = vmatprep.subr.mxu0 0.0
    %571 = vmatpush1.msra.mxu0 0.0
    %572 = vmatprep.subr.mxu0 0.0
    %573 = vmatpush1.msra.mxu0 0.0
    %574 = vmatprep.subr.mxu0 0.0
    %575 = vmatpush1.msra.mxu0 0.0
    %576 = vmatprep.subr.mxu0 0.0
    %577 = vmatpush1.msra.mxu0 0.0
    %578 = vmatprep.subr.mxu0 0.0
    %579 = vmatpush1.msra.mxu0 0.0
    %580 = vmatprep.subr.mxu0 0.0
    %581 = vmatpush1.msra.mxu0 0.0
    %582 = vmatprep.subr.mxu0 0.0
    %583 = vmatpush1.msra.mxu0 0.0
    %584 = vmatprep.mubr.f32.mxu0 0.0
    %585 = vmatmul.mubr.f32.gmra.mrb[0].mxu0 %v361
    %v586 = vpop.f32.mrb[0].mxu0
    %v587 = vadd.f32 %v323, %v586
    %v588 = vpop.f32.mrb[0].mxu0
    %v589 = vadd.f32 %v325, %v588
    %590 = vmatprep.mubr.f32.mxu0 0.0
    %591 = vmatmul.mubr.f32.gmra.mrb[0].mxu0 %v364
    %v592 = vpop.f32.mrb[0].mxu0
    %v593 = vadd.f32 %v329, %v592
    %v594 = vpop.f32.mrb[0].mxu0
    %v595 = vadd.f32 %v331, %v594
    %596 = vdwg.mxu0
    %s597 = scalar_lea.vmem %s2, 32
    %v598 = vld [vmem:[%s597] sm:$0xff]
    %v599 = vld [vmem:[%s597 + $0x8] sm:$0xff]
    %600 = vrot.lane.b32.xlu0 %v51, 17
    %v601 = vpop.permute.xlu0 %600
    %602 = vrot.lane.b32.xlu0 %v52, 17
    %v603 = vpop.permute.xlu0 %602
    %604 = vrot.lane.b32.xlu0 %v53, 17
    %v605 = vpop.permute.xlu0 %604
    %606 = vrot.lane.b32.xlu0 %v54, 17
    %v607 = vpop.permute.xlu0 %606
    %608 = vrot.lane.b32.xlu0 %v55, 17
    %v609 = vpop.permute.xlu0 %608
    %610 = vrot.lane.b32.xlu0 %v56, 17
    %v611 = vpop.permute.xlu0 %610
    %612 = vrot.lane.b32.xlu0 %v57, 17
    %v613 = vpop.permute.xlu0 %612
    %vm614 = vcmask 138240
    %v615 = vsel %vm614, %v601, %v603
    %v616 = vsel %vm614, %v603, %v605
    %v617 = vsel %vm614, %v605, %v607
    %v618 = vsel %vm614, %v607, %v609
    %v619 = vsel %vm614, %v609, %v611
    %v620 = vsel %vm614, %v611, %v613
    %v628 = vsel %vm95, %v598, 0
    %v631 = vsel %vm95, %v599, 0
    %633 = vmatprep.subr.mxu0 %v616
    %634 = vmatpush1.msra.mxu0 %v615
    %635 = vmatprep.subr.mxu0 0.0
    %636 = vmatpush1.msra.mxu0 0.0
    %637 = vmatprep.subr.mxu0 0.0
    %638 = vmatpush1.msra.mxu0 0.0
    %639 = vmatprep.subr.mxu0 0.0
    %640 = vmatpush1.msra.mxu0 0.0
    %641 = vmatprep.subr.mxu0 0.0
    %642 = vmatpush1.msra.mxu0 0.0
    %643 = vmatprep.subr.mxu0 0.0
    %644 = vmatpush1.msra.mxu0 0.0
    %645 = vmatprep.subr.mxu0 0.0
    %646 = vmatpush1.msra.mxu0 0.0
    %647 = vmatprep.subr.mxu0 0.0
    %648 = vmatpush1.msra.mxu0 0.0
    %649 = vmatprep.subr.mxu0 0.0
    %650 = vmatpush1.msra.mxu0 0.0
    %651 = vmatprep.subr.mxu0 0.0
    %652 = vmatpush1.msra.mxu0 0.0
    %653 = vmatprep.subr.mxu0 0.0
    %654 = vmatpush1.msra.mxu0 0.0
    %655 = vmatprep.subr.mxu0 0.0
    %656 = vmatpush1.msra.mxu0 0.0
    %657 = vmatprep.subr.mxu0 0.0
    %658 = vmatpush1.msra.mxu0 0.0
    %659 = vmatprep.subr.mxu0 0.0
    %660 = vmatpush1.msra.mxu0 0.0
    %661 = vmatprep.subr.mxu0 0.0
    %662 = vmatpush1.msra.mxu0 0.0
    %663 = vmatprep.subr.mxu0 0.0
    %664 = vmatpush1.msra.mxu0 0.0
    %665 = vmatprep.subr.mxu0 0.0
    %666 = vmatpush1.msra.mxu0 0.0
    %667 = vmatprep.subr.mxu0 0.0
    %668 = vmatpush1.msra.mxu0 0.0
    %669 = vmatprep.subr.mxu0 0.0
    %670 = vmatpush1.msra.mxu0 0.0
    %671 = vmatprep.subr.mxu0 0.0
    %672 = vmatpush1.msra.mxu0 0.0
    %673 = vmatprep.subr.mxu0 0.0
    %674 = vmatpush1.msra.mxu0 0.0
    %675 = vmatprep.subr.mxu0 0.0
    %676 = vmatpush1.msra.mxu0 0.0
    %677 = vmatprep.subr.mxu0 0.0
    %678 = vmatpush1.msra.mxu0 0.0
    %679 = vmatprep.subr.mxu0 0.0
    %680 = vmatpush1.msra.mxu0 0.0
    %681 = vmatprep.subr.mxu0 0.0
    %682 = vmatpush1.msra.mxu0 0.0
    %683 = vmatprep.subr.mxu0 0.0
    %684 = vmatpush1.msra.mxu0 0.0
    %685 = vmatprep.subr.mxu0 0.0
    %686 = vmatpush1.msra.mxu0 0.0
    %687 = vmatprep.subr.mxu0 0.0
    %688 = vmatpush1.msra.mxu0 0.0
    %689 = vmatprep.subr.mxu0 0.0
    %690 = vmatpush1.msra.mxu0 0.0
    %691 = vmatprep.subr.mxu0 0.0
    %692 = vmatpush1.msra.mxu0 0.0
    %693 = vmatprep.subr.mxu0 0.0
    %694 = vmatpush1.msra.mxu0 0.0
    %695 = vmatprep.subr.mxu0 0.0
    %696 = vmatpush1.msra.mxu0 0.0
    %697 = vmatprep.mubr.f32.mxu0 0.0
    %698 = vmatmul.mubr.f32.gmra.mrb[0].mxu0 %v628
    %v699 = vpop.f32.mrb[0].mxu0
    %v700 = vadd.f32 0.0, %v699
    %v701 = vpop.f32.mrb[0].mxu0
    %v702 = vadd.f32 0.0, %v701
    %703 = vmatprep.mubr.f32.mxu0 0.0
    %704 = vmatmul.mubr.f32.gmra.mrb[0].mxu0 %v631
    %v705 = vpop.f32.mrb[0].mxu0
    %v706 = vadd.f32 0.0, %v705
    %v707 = vpop.f32.mrb[0].mxu0
    %v708 = vadd.f32 0.0, %v707
    %709 = vdwg.mxu0
    %710 = vmatprep.subr.mxu0 %v618
    %711 = vmatpush1.msra.mxu0 %v617
    %712 = vmatprep.subr.mxu0 0.0
    %713 = vmatpush1.msra.mxu0 0.0
    %714 = vmatprep.subr.mxu0 0.0
    %715 = vmatpush1.msra.mxu0 0.0
    %716 = vmatprep.subr.mxu0 0.0
    %717 = vmatpush1.msra.mxu0 0.0
    %718 = vmatprep.subr.mxu0 0.0
    %719 = vmatpush1.msra.mxu0 0.0
    %720 = vmatprep.subr.mxu0 0.0
    %721 = vmatpush1.msra.mxu0 0.0
    %722 = vmatprep.subr.mxu0 0.0
    %723 = vmatpush1.msra.mxu0 0.0
    %724 = vmatprep.subr.mxu0 0.0
    %725 = vmatpush1.msra.mxu0 0.0
    %726 = vmatprep.subr.mxu0 0.0
    %727 = vmatpush1.msra.mxu0 0.0
    %728 = vmatprep.subr.mxu0 0.0
    %729 = vmatpush1.msra.mxu0 0.0
    %730 = vmatprep.subr.mxu0 0.0
    %731 = vmatpush1.msra.mxu0 0.0
    %732 = vmatprep.subr.mxu0 0.0
    %733 = vmatpush1.msra.mxu0 0.0
    %734 = vmatprep.subr.mxu0 0.0
    %735 = vmatpush1.msra.mxu0 0.0
    %736 = vmatprep.subr.mxu0 0.0
    %737 = vmatpush1.msra.mxu0 0.0
    %738 = vmatprep.subr.mxu0 0.0
    %739 = vmatpush1.msra.mxu0 0.0
    %740 = vmatprep.subr.mxu0 0.0
    %741 = vmatpush1.msra.mxu0 0.0
    %742 = vmatprep.subr.mxu0 0.0
    %743 = vmatpush1.msra.mxu0 0.0
    %744 = vmatprep.subr.mxu0 0.0
    %745 = vmatpush1.msra.mxu0 0.0
    %746 = vmatprep.subr.mxu0 0.0
    %747 = vmatpush1.msra.mxu0 0.0
    %748 = vmatprep.subr.mxu0 0.0
    %749 = vmatpush1.msra.mxu0 0.0
    %750 = vmatprep.subr.mxu0 0.0
    %751 = vmatpush1.msra.mxu0 0.0
    %752 = vmatprep.subr.mxu0 0.0
    %753 = vmatpush1.msra.mxu0 0.0
    %754 = vmatprep.subr.mxu0 0.0
    %755 = vmatpush1.msra.mxu0 0.0
    %756 = vmatprep.subr.mxu0 0.0
    %757 = vmatpush1.msra.mxu0 0.0
    %758 = vmatprep.subr.mxu0 0.0
    %759 = vmatpush1.msra.mxu0 0.0
    %760 = vmatprep.subr.mxu0 0.0
    %761 = vmatpush1.msra.mxu0 0.0
    %762 = vmatprep.subr.mxu0 0.0
    %763 = vmatpush1.msra.mxu0 0.0
    %764 = vmatprep.subr.mxu0 0.0
    %765 = vmatpush1.msra.mxu0 0.0
    %766 = vmatprep.subr.mxu0 0.0
    %767 = vmatpush1.msra.mxu0 0.0
    %768 = vmatprep.subr.mxu0 0.0
    %769 = vmatpush1.msra.mxu0 0.0
    %770 = vmatprep.subr.mxu0 0.0
    %771 = vmatpush1.msra.mxu0 0.0
    %772 = vmatprep.subr.mxu0 0.0
    %773 = vmatpush1.msra.mxu0 0.0
    %774 = vmatprep.mubr.f32.mxu0 0.0
    %775 = vmatmul.mubr.f32.gmra.mrb[0].mxu0 %v628
    %v776 = vpop.f32.mrb[0].mxu0
    %v777 = vadd.f32 0.0, %v776
    %v778 = vpop.f32.mrb[0].mxu0
    %v779 = vadd.f32 0.0, %v778
    %780 = vmatprep.mubr.f32.mxu0 0.0
    %781 = vmatmul.mubr.f32.gmra.mrb[0].mxu0 %v631
    %v782 = vpop.f32.mrb[0].mxu0
    %v783 = vadd.f32 0.0, %v782
    %v784 = vpop.f32.mrb[0].mxu0
    %v785 = vadd.f32 0.0, %v784
    %786 = vdwg.mxu0
    %787 = vmatprep.subr.mxu0 %v620
    %788 = vmatpush1.msra.mxu0 %v619
    %789 = vmatprep.subr.mxu0 0.0
    %790 = vmatpush1.msra.mxu0 0.0
    %791 = vmatprep.subr.mxu0 0.0
    %792 = vmatpush1.msra.mxu0 0.0
    %793 = vmatprep.subr.mxu0 0.0
    %794 = vmatpush1.msra.mxu0 0.0
    %795 = vmatprep.subr.mxu0 0.0
    %796 = vmatpush1.msra.mxu0 0.0
    %797 = vmatprep.subr.mxu0 0.0
    %798 = vmatpush1.msra.mxu0 0.0
    %799 = vmatprep.subr.mxu0 0.0
    %800 = vmatpush1.msra.mxu0 0.0
    %801 = vmatprep.subr.mxu0 0.0
    %802 = vmatpush1.msra.mxu0 0.0
    %803 = vmatprep.subr.mxu0 0.0
    %804 = vmatpush1.msra.mxu0 0.0
    %805 = vmatprep.subr.mxu0 0.0
    %806 = vmatpush1.msra.mxu0 0.0
    %807 = vmatprep.subr.mxu0 0.0
    %808 = vmatpush1.msra.mxu0 0.0
    %809 = vmatprep.subr.mxu0 0.0
    %810 = vmatpush1.msra.mxu0 0.0
    %811 = vmatprep.subr.mxu0 0.0
    %812 = vmatpush1.msra.mxu0 0.0
    %813 = vmatprep.subr.mxu0 0.0
    %814 = vmatpush1.msra.mxu0 0.0
    %815 = vmatprep.subr.mxu0 0.0
    %816 = vmatpush1.msra.mxu0 0.0
    %817 = vmatprep.subr.mxu0 0.0
    %818 = vmatpush1.msra.mxu0 0.0
    %819 = vmatprep.subr.mxu0 0.0
    %820 = vmatpush1.msra.mxu0 0.0
    %821 = vmatprep.subr.mxu0 0.0
    %822 = vmatpush1.msra.mxu0 0.0
    %823 = vmatprep.subr.mxu0 0.0
    %824 = vmatpush1.msra.mxu0 0.0
    %825 = vmatprep.subr.mxu0 0.0
    %826 = vmatpush1.msra.mxu0 0.0
    %827 = vmatprep.subr.mxu0 0.0
    %828 = vmatpush1.msra.mxu0 0.0
    %829 = vmatprep.subr.mxu0 0.0
    %830 = vmatpush1.msra.mxu0 0.0
    %831 = vmatprep.subr.mxu0 0.0
    %832 = vmatpush1.msra.mxu0 0.0
    %833 = vmatprep.subr.mxu0 0.0
    %834 = vmatpush1.msra.mxu0 0.0
    %835 = vmatprep.subr.mxu0 0.0
    %836 = vmatpush1.msra.mxu0 0.0
    %837 = vmatprep.subr.mxu0 0.0
    %838 = vmatpush1.msra.mxu0 0.0
    %839 = vmatprep.subr.mxu0 0.0
    %840 = vmatpush1.msra.mxu0 0.0
    %841 = vmatprep.subr.mxu0 0.0
    %842 = vmatpush1.msra.mxu0 0.0
    %843 = vmatprep.subr.mxu0 0.0
    %844 = vmatpush1.msra.mxu0 0.0
    %845 = vmatprep.subr.mxu0 0.0
    %846 = vmatpush1.msra.mxu0 0.0
    %847 = vmatprep.subr.mxu0 0.0
    %848 = vmatpush1.msra.mxu0 0.0
    %849 = vmatprep.subr.mxu0 0.0
    %850 = vmatpush1.msra.mxu0 0.0
    %851 = vmatprep.mubr.f32.mxu0 0.0
    %852 = vmatmul.mubr.f32.gmra.mrb[0].mxu0 %v628
    %v853 = vpop.f32.mrb[0].mxu0
    %v854 = vadd.f32 0.0, %v853
    %v855 = vpop.f32.mrb[0].mxu0
    %v856 = vadd.f32 0.0, %v855
    %857 = vmatprep.mubr.f32.mxu0 0.0
    %858 = vmatmul.mubr.f32.gmra.mrb[0].mxu0 %v631
    %v859 = vpop.f32.mrb[0].mxu0
    %v860 = vadd.f32 0.0, %v859
    %v861 = vpop.f32.mrb[0].mxu0
    %v862 = vadd.f32 0.0, %v861
    %863 = vdwg.mxu0
    %v864 = vadd.f32 %v433, %v700
    %v865 = vadd.f32 %v435, %v702
    %v866 = vadd.f32 %v510, %v777
    %v867 = vadd.f32 %v512, %v779
    %v868 = vadd.f32 %v587, %v854
    %v869 = vadd.f32 %v589, %v856
    %v870 = vadd.f32 %v439, %v706
    %v871 = vadd.f32 %v441, %v708
    %v872 = vadd.f32 %v516, %v783
    %v873 = vadd.f32 %v518, %v785
    %v874 = vadd.f32 %v593, %v860
    %v875 = vadd.f32 %v595, %v862
    %s876 = scalar_lea.vmem %s2, 48
    %v877 = vld [vmem:[%s876] sm:$0xff]
    %v878 = vld [vmem:[%s876 + $0x8] sm:$0xff]
    %879 = vrot.lane.b32.xlu0 %v51, 1
    %v880 = vpop.permute.xlu0 %879
    %881 = vrot.lane.b32.xlu0 %v52, 1
    %v882 = vpop.permute.xlu0 %881
    %883 = vrot.lane.b32.xlu0 %v53, 1
    %v884 = vpop.permute.xlu0 %883
    %885 = vrot.lane.b32.xlu0 %v54, 1
    %v886 = vpop.permute.xlu0 %885
    %887 = vrot.lane.b32.xlu0 %v55, 1
    %v888 = vpop.permute.xlu0 %887
    %889 = vrot.lane.b32.xlu0 %v56, 1
    %v890 = vpop.permute.xlu0 %889
    %891 = vrot.lane.b32.xlu0 %v57, 1
    %v892 = vpop.permute.xlu0 %891
    %vm893 = vcmask 7168
    %v894 = vsel %vm893, %v880, %v882
    %v895 = vsel %vm893, %v882, %v884
    %v896 = vsel %vm893, %v884, %v886
    %v897 = vsel %vm893, %v886, %v888
    %v898 = vsel %vm893, %v888, %v890
    %v899 = vsel %vm893, %v890, %v892
    %v907 = vsel %vm95, %v877, 0
    %v910 = vsel %vm95, %v878, 0
    %912 = vmatprep.subr.mxu0 %v895
    %913 = vmatpush1.msra.mxu0 %v894
    %914 = vmatprep.subr.mxu0 0.0
    %915 = vmatpush1.msra.mxu0 0.0
    %916 = vmatprep.subr.mxu0 0.0
    %917 = vmatpush1.msra.mxu0 0.0
    %918 = vmatprep.subr.mxu0 0.0
    %919 = vmatpush1.msra.mxu0 0.0
    %920 = vmatprep.subr.mxu0 0.0
    %921 = vmatpush1.msra.mxu0 0.0
    %922 = vmatprep.subr.mxu0 0.0
    %923 = vmatpush1.msra.mxu0 0.0
    %924 = vmatprep.subr.mxu0 0.0
    %925 = vmatpush1.msra.mxu0 0.0
    %926 = vmatprep.subr.mxu0 0.0
    %927 = vmatpush1.msra.mxu0 0.0
    %928 = vmatprep.subr.mxu0 0.0
    %929 = vmatpush1.msra.mxu0 0.0
    %930 = vmatprep.subr.mxu0 0.0
    %931 = vmatpush1.msra.mxu0 0.0
    %932 = vmatprep.subr.mxu0 0.0
    %933 = vmatpush1.msra.mxu0 0.0
    %934 = vmatprep.subr.mxu0 0.0
    %935 = vmatpush1.msra.mxu0 0.0
    %936 = vmatprep.subr.mxu0 0.0
    %937 = vmatpush1.msra.mxu0 0.0
    %938 = vmatprep.subr.mxu0 0.0
    %939 = vmatpush1.msra.mxu0 0.0
    %940 = vmatprep.subr.mxu0 0.0
    %941 = vmatpush1.msra.mxu0 0.0
    %942 = vmatprep.subr.mxu0 0.0
    %943 = vmatpush1.msra.mxu0 0.0
    %944 = vmatprep.subr.mxu0 0.0
    %945 = vmatpush1.msra.mxu0 0.0
    %946 = vmatprep.subr.mxu0 0.0
    %947 = vmatpush1.msra.mxu0 0.0
    %948 = vmatprep.subr.mxu0 0.0
    %949 = vmatpush1.msra.mxu0 0.0
    %950 = vmatprep.subr.mxu0 0.0
    %951 = vmatpush1.msra.mxu0 0.0
    %952 = vmatprep.subr.mxu0 0.0
    %953 = vmatpush1.msra.mxu0 0.0
    %954 = vmatprep.subr.mxu0 0.0
    %955 = vmatpush1.msra.mxu0 0.0
    %956 = vmatprep.subr.mxu0 0.0
    %957 = vmatpush1.msra.mxu0 0.0
    %958 = vmatprep.subr.mxu0 0.0
    %959 = vmatpush1.msra.mxu0 0.0
    %960 = vmatprep.subr.mxu0 0.0
    %961 = vmatpush1.msra.mxu0 0.0
    %962 = vmatprep.subr.mxu0 0.0
    %963 = vmatpush1.msra.mxu0 0.0
    %964 = vmatprep.subr.mxu0 0.0
    %965 = vmatpush1.msra.mxu0 0.0
    %966 = vmatprep.subr.mxu0 0.0
    %967 = vmatpush1.msra.mxu0 0.0
    %968 = vmatprep.subr.mxu0 0.0
    %969 = vmatpush1.msra.mxu0 0.0
    %970 = vmatprep.subr.mxu0 0.0
    %971 = vmatpush1.msra.mxu0 0.0
    %972 = vmatprep.subr.mxu0 0.0
    %973 = vmatpush1.msra.mxu0 0.0
    %974 = vmatprep.subr.mxu0 0.0
    %975 = vmatpush1.msra.mxu0 0.0
    %976 = vmatprep.mubr.f32.mxu0 0.0
    %977 = vmatmul.mubr.f32.gmra.mrb[0].mxu0 %v907
    %v978 = vpop.f32.mrb[0].mxu0
    %v979 = vadd.f32 0.0, %v978
    %v980 = vpop.f32.mrb[0].mxu0
    %v981 = vadd.f32 0.0, %v980
    %982 = vmatprep.mubr.f32.mxu0 0.0
    %983 = vmatmul.mubr.f32.gmra.mrb[0].mxu0 %v910
    %v984 = vpop.f32.mrb[0].mxu0
    %v985 = vadd.f32 0.0, %v984
    %v986 = vpop.f32.mrb[0].mxu0
    %v987 = vadd.f32 0.0, %v986
    %988 = vdwg.mxu0
    %989 = vmatprep.subr.mxu0 %v897
    %990 = vmatpush1.msra.mxu0 %v896
    %991 = vmatprep.subr.mxu0 0.0
    %992 = vmatpush1.msra.mxu0 0.0
    %993 = vmatprep.subr.mxu0 0.0
    %994 = vmatpush1.msra.mxu0 0.0
    %995 = vmatprep.subr.mxu0 0.0
    %996 = vmatpush1.msra.mxu0 0.0
    %997 = vmatprep.subr.mxu0 0.0
    %998 = vmatpush1.msra.mxu0 0.0
    %999 = vmatprep.subr.mxu0 0.0
    %1000 = vmatpush1.msra.mxu0 0.0
    %1001 = vmatprep.subr.mxu0 0.0
    %1002 = vmatpush1.msra.mxu0 0.0
    %1003 = vmatprep.subr.mxu0 0.0
    %1004 = vmatpush1.msra.mxu0 0.0
    %1005 = vmatprep.subr.mxu0 0.0
    %1006 = vmatpush1.msra.mxu0 0.0
    %1007 = vmatprep.subr.mxu0 0.0
    %1008 = vmatpush1.msra.mxu0 0.0
    %1009 = vmatprep.subr.mxu0 0.0
    %1010 = vmatpush1.msra.mxu0 0.0
    %1011 = vmatprep.subr.mxu0 0.0
    %1012 = vmatpush1.msra.mxu0 0.0
    %1013 = vmatprep.subr.mxu0 0.0
    %1014 = vmatpush1.msra.mxu0 0.0
    %1015 = vmatprep.subr.mxu0 0.0
    %1016 = vmatpush1.msra.mxu0 0.0
    %1017 = vmatprep.subr.mxu0 0.0
    %1018 = vmatpush1.msra.mxu0 0.0
    %1019 = vmatprep.subr.mxu0 0.0
    %1020 = vmatpush1.msra.mxu0 0.0
    %1021 = vmatprep.subr.mxu0 0.0
    %1022 = vmatpush1.msra.mxu0 0.0
    %1023 = vmatprep.subr.mxu0 0.0
    %1024 = vmatpush1.msra.mxu0 0.0
    %1025 = vmatprep.subr.mxu0 0.0
    %1026 = vmatpush1.msra.mxu0 0.0
    %1027 = vmatprep.subr.mxu0 0.0
    %1028 = vmatpush1.msra.mxu0 0.0
    %1029 = vmatprep.subr.mxu0 0.0
    %1030 = vmatpush1.msra.mxu0 0.0
    %1031 = vmatprep.subr.mxu0 0.0
    %1032 = vmatpush1.msra.mxu0 0.0
    %1033 = vmatprep.subr.mxu0 0.0
    %1034 = vmatpush1.msra.mxu0 0.0
    %1035 = vmatprep.subr.mxu0 0.0
    %1036 = vmatpush1.msra.mxu0 0.0
    %1037 = vmatprep.subr.mxu0 0.0
    %1038 = vmatpush1.msra.mxu0 0.0
    %1039 = vmatprep.subr.mxu0 0.0
    %1040 = vmatpush1.msra.mxu0 0.0
    %1041 = vmatprep.subr.mxu0 0.0
    %1042 = vmatpush1.msra.mxu0 0.0
    %1043 = vmatprep.subr.mxu0 0.0
    %1044 = vmatpush1.msra.mxu0 0.0
    %1045 = vmatprep.subr.mxu0 0.0
    %1046 = vmatpush1.msra.mxu0 0.0
    %1047 = vmatprep.subr.mxu0 0.0
    %1048 = vmatpush1.msra.mxu0 0.0
    %1049 = vmatprep.subr.mxu0 0.0
    %1050 = vmatpush1.msra.mxu0 0.0
    %1051 = vmatprep.subr.mxu0 0.0
    %1052 = vmatpush1.msra.mxu0 0.0
    %1053 = vmatprep.mubr.f32.mxu0 0.0
    %1054 = vmatmul.mubr.f32.gmra.mrb[0].mxu0 %v907
    %v1055 = vpop.f32.mrb[0].mxu0
    %v1056 = vadd.f32 0.0, %v1055
    %v1057 = vpop.f32.mrb[0].mxu0
    %v1058 = vadd.f32 0.0, %v1057
    %1059 = vmatprep.mubr.f32.mxu0 0.0
    %1060 = vmatmul.mubr.f32.gmra.mrb[0].mxu0 %v910
    %v1061 = vpop.f32.mrb[0].mxu0
    %v1062 = vadd.f32 0.0, %v1061
    %v1063 = vpop.f32.mrb[0].mxu0
    %v1064 = vadd.f32 0.0, %v1063
    %1065 = vdwg.mxu0
    %1066 = vmatprep.subr.mxu0 %v899
    %1067 = vmatpush1.msra.mxu0 %v898
    %1068 = vmatprep.subr.mxu0 0.0
    %1069 = vmatpush1.msra.mxu0 0.0
    %1070 = vmatprep.subr.mxu0 0.0
    %1071 = vmatpush1.msra.mxu0 0.0
    %1072 = vmatprep.subr.mxu0 0.0
    %1073 = vmatpush1.msra.mxu0 0.0
    %1074 = vmatprep.subr.mxu0 0.0
    %1075 = vmatpush1.msra.mxu0 0.0
    %1076 = vmatprep.subr.mxu0 0.0
    %1077 = vmatpush1.msra.mxu0 0.0
    %1078 = vmatprep.subr.mxu0 0.0
    %1079 = vmatpush1.msra.mxu0 0.0
    %1080 = vmatprep.subr.mxu0 0.0
    %1081 = vmatpush1.msra.mxu0 0.0
    %1082 = vmatprep.subr.mxu0 0.0
    %1083 = vmatpush1.msra.mxu0 0.0
    %1084 = vmatprep.subr.mxu0 0.0
    %1085 = vmatpush1.msra.mxu0 0.0
    %1086 = vmatprep.subr.mxu0 0.0
    %1087 = vmatpush1.msra.mxu0 0.0
    %1088 = vmatprep.subr.mxu0 0.0
    %1089 = vmatpush1.msra.mxu0 0.0
    %1090 = vmatprep.subr.mxu0 0.0
    %1091 = vmatpush1.msra.mxu0 0.0
    %1092 = vmatprep.subr.mxu0 0.0
    %1093 = vmatpush1.msra.mxu0 0.0
    %1094 = vmatprep.subr.mxu0 0.0
    %1095 = vmatpush1.msra.mxu0 0.0
    %1096 = vmatprep.subr.mxu0 0.0
    %1097 = vmatpush1.msra.mxu0 0.0
    %1098 = vmatprep.subr.mxu0 0.0
    %1099 = vmatpush1.msra.mxu0 0.0
    %1100 = vmatprep.subr.mxu0 0.0
    %1101 = vmatpush1.msra.mxu0 0.0
    %1102 = vmatprep.subr.mxu0 0.0
    %1103 = vmatpush1.msra.mxu0 0.0
    %1104 = vmatprep.subr.mxu0 0.0
    %1105 = vmatpush1.msra.mxu0 0.0
    %1106 = vmatprep.subr.mxu0 0.0
    %1107 = vmatpush1.msra.mxu0 0.0
    %1108 = vmatprep.subr.mxu0 0.0
    %1109 = vmatpush1.msra.mxu0 0.0
    %1110 = vmatprep.subr.mxu0 0.0
    %1111 = vmatpush1.msra.mxu0 0.0
    %1112 = vmatprep.subr.mxu0 0.0
    %1113 = vmatpush1.msra.mxu0 0.0
    %1114 = vmatprep.subr.mxu0 0.0
    %1115 = vmatpush1.msra.mxu0 0.0
    %1116 = vmatprep.subr.mxu0 0.0
    %1117 = vmatpush1.msra.mxu0 0.0
    %1118 = vmatprep.subr.mxu0 0.0
    %1119 = vmatpush1.msra.mxu0 0.0
    %1120 = vmatprep.subr.mxu0 0.0
    %1121 = vmatpush1.msra.mxu0 0.0
    %1122 = vmatprep.subr.mxu0 0.0
    %1123 = vmatpush1.msra.mxu0 0.0
    %1124 = vmatprep.subr.mxu0 0.0
    %1125 = vmatpush1.msra.mxu0 0.0
    %1126 = vmatprep.subr.mxu0 0.0
    %1127 = vmatpush1.msra.mxu0 0.0
    %1128 = vmatprep.subr.mxu0 0.0
    %1129 = vmatpush1.msra.mxu0 0.0
    %1130 = vmatprep.mubr.f32.mxu0 0.0
    %1131 = vmatmul.mubr.f32.gmra.mrb[0].mxu0 %v907
    %v1132 = vpop.f32.mrb[0].mxu0
    %v1133 = vadd.f32 0.0, %v1132
    %v1134 = vpop.f32.mrb[0].mxu0
    %v1135 = vadd.f32 0.0, %v1134
    %1136 = vmatprep.mubr.f32.mxu0 0.0
    %1137 = vmatmul.mubr.f32.gmra.mrb[0].mxu0 %v910
    %v1138 = vpop.f32.mrb[0].mxu0
    %v1139 = vadd.f32 0.0, %v1138
    %v1140 = vpop.f32.mrb[0].mxu0
    %v1141 = vadd.f32 0.0, %v1140
    %1142 = vdwg.mxu0
    %v1143 = vadd.f32 %v864, %v979
    %v1144 = vadd.f32 %v865, %v981
    %v1145 = vadd.f32 %v866, %v1056
    %v1146 = vadd.f32 %v867, %v1058
    %v1147 = vadd.f32 %v868, %v1133
    %v1148 = vadd.f32 %v869, %v1135
    %v1149 = vadd.f32 %v870, %v985
    %v1150 = vadd.f32 %v871, %v987
    %v1151 = vadd.f32 %v872, %v1062
    %v1152 = vadd.f32 %v873, %v1064
    %v1153 = vadd.f32 %v874, %v1139
    %v1154 = vadd.f32 %v875, %v1141
    %s1155 = scalar_lea.vmem %s2, 64
    %v1156 = vld [vmem:[%s1155] sm:$0xff]
    %v1157 = vld [vmem:[%s1155 + $0x8] sm:$0xff]
    %v1159 = vsel %vm95, %v1156, 0
    %v1162 = vsel %vm95, %v1157, 0
    %1164 = vmatprep.subr.mxu0 %v53
    %1165 = vmatpush1.msra.mxu0 %v52
    %1166 = vmatprep.subr.mxu0 0.0
    %1167 = vmatpush1.msra.mxu0 0.0
    %1168 = vmatprep.subr.mxu0 0.0
    %1169 = vmatpush1.msra.mxu0 0.0
    %1170 = vmatprep.subr.mxu0 0.0
    %1171 = vmatpush1.msra.mxu0 0.0
    %1172 = vmatprep.subr.mxu0 0.0
    %1173 = vmatpush1.msra.mxu0 0.0
    %1174 = vmatprep.subr.mxu0 0.0
    %1175 = vmatpush1.msra.mxu0 0.0
    %1176 = vmatprep.subr.mxu0 0.0
    %1177 = vmatpush1.msra.mxu0 0.0
    %1178 = vmatprep.subr.mxu0 0.0
    %1179 = vmatpush1.msra.mxu0 0.0
    %1180 = vmatprep.subr.mxu0 0.0
    %1181 = vmatpush1.msra.mxu0 0.0
    %1182 = vmatprep.subr.mxu0 0.0
    %1183 = vmatpush1.msra.mxu0 0.0
    %1184 = vmatprep.subr.mxu0 0.0
    %1185 = vmatpush1.msra.mxu0 0.0
    %1186 = vmatprep.subr.mxu0 0.0
    %1187 = vmatpush1.msra.mxu0 0.0
    %1188 = vmatprep.subr.mxu0 0.0
    %1189 = vmatpush1.msra.mxu0 0.0
    %1190 = vmatprep.subr.mxu0 0.0
    %1191 = vmatpush1.msra.mxu0 0.0
    %1192 = vmatprep.subr.mxu0 0.0
    %1193 = vmatpush1.msra.mxu0 0.0
    %1194 = vmatprep.subr.mxu0 0.0
    %1195 = vmatpush1.msra.mxu0 0.0
    %1196 = vmatprep.subr.mxu0 0.0
    %1197 = vmatpush1.msra.mxu0 0.0
    %1198 = vmatprep.subr.mxu0 0.0
    %1199 = vmatpush1.msra.mxu0 0.0
    %1200 = vmatprep.subr.mxu0 0.0
    %1201 = vmatpush1.msra.mxu0 0.0
    %1202 = vmatprep.subr.mxu0 0.0
    %1203 = vmatpush1.msra.mxu0 0.0
    %1204 = vmatprep.subr.mxu0 0.0
    %1205 = vmatpush1.msra.mxu0 0.0
    %1206 = vmatprep.subr.mxu0 0.0
    %1207 = vmatpush1.msra.mxu0 0.0
    %1208 = vmatprep.subr.mxu0 0.0
    %1209 = vmatpush1.msra.mxu0 0.0
    %1210 = vmatprep.subr.mxu0 0.0
    %1211 = vmatpush1.msra.mxu0 0.0
    %1212 = vmatprep.subr.mxu0 0.0
    %1213 = vmatpush1.msra.mxu0 0.0
    %1214 = vmatprep.subr.mxu0 0.0
    %1215 = vmatpush1.msra.mxu0 0.0
    %1216 = vmatprep.subr.mxu0 0.0
    %1217 = vmatpush1.msra.mxu0 0.0
    %1218 = vmatprep.subr.mxu0 0.0
    %1219 = vmatpush1.msra.mxu0 0.0
    %1220 = vmatprep.subr.mxu0 0.0
    %1221 = vmatpush1.msra.mxu0 0.0
    %1222 = vmatprep.subr.mxu0 0.0
    %1223 = vmatpush1.msra.mxu0 0.0
    %1224 = vmatprep.subr.mxu0 0.0
    %1225 = vmatpush1.msra.mxu0 0.0
    %1226 = vmatprep.subr.mxu0 0.0
    %1227 = vmatpush1.msra.mxu0 0.0
    %1228 = vmatprep.mubr.f32.mxu0 0.0
    %1229 = vmatmul.mubr.f32.gmra.mrb[0].mxu0 %v1159
    %v1230 = vpop.f32.mrb[0].mxu0
    %v1231 = vadd.f32 0.0, %v1230
    %v1232 = vpop.f32.mrb[0].mxu0
    %v1233 = vadd.f32 0.0, %v1232
    %1234 = vmatprep.mubr.f32.mxu0 0.0
    %1235 = vmatmul.mubr.f32.gmra.mrb[0].mxu0 %v1162
    %v1236 = vpop.f32.mrb[0].mxu0
    %v1237 = vadd.f32 0.0, %v1236
    %v1238 = vpop.f32.mrb[0].mxu0
    %v1239 = vadd.f32 0.0, %v1238
    %1240 = vdwg.mxu0
    %1241 = vmatprep.subr.mxu0 %v55
    %1242 = vmatpush1.msra.mxu0 %v54
    %1243 = vmatprep.subr.mxu0 0.0
    %1244 = vmatpush1.msra.mxu0 0.0
    %1245 = vmatprep.subr.mxu0 0.0
    %1246 = vmatpush1.msra.mxu0 0.0
    %1247 = vmatprep.subr.mxu0 0.0
    %1248 = vmatpush1.msra.mxu0 0.0
    %1249 = vmatprep.subr.mxu0 0.0
    %1250 = vmatpush1.msra.mxu0 0.0
    %1251 = vmatprep.subr.mxu0 0.0
    %1252 = vmatpush1.msra.mxu0 0.0
    %1253 = vmatprep.subr.mxu0 0.0
    %1254 = vmatpush1.msra.mxu0 0.0
    %1255 = vmatprep.subr.mxu0 0.0
    %1256 = vmatpush1.msra.mxu0 0.0
    %1257 = vmatprep.subr.mxu0 0.0
    %1258 = vmatpush1.msra.mxu0 0.0
    %1259 = vmatprep.subr.mxu0 0.0
    %1260 = vmatpush1.msra.mxu0 0.0
    %1261 = vmatprep.subr.mxu0 0.0
    %1262 = vmatpush1.msra.mxu0 0.0
    %1263 = vmatprep.subr.mxu0 0.0
    %1264 = vmatpush1.msra.mxu0 0.0
    %1265 = vmatprep.subr.mxu0 0.0
    %1266 = vmatpush1.msra.mxu0 0.0
    %1267 = vmatprep.subr.mxu0 0.0
    %1268 = vmatpush1.msra.mxu0 0.0
    %1269 = vmatprep.subr.mxu0 0.0
    %1270 = vmatpush1.msra.mxu0 0.0
    %1271 = vmatprep.subr.mxu0 0.0
    %1272 = vmatpush1.msra.mxu0 0.0
    %1273 = vmatprep.subr.mxu0 0.0
    %1274 = vmatpush1.msra.mxu0 0.0
    %1275 = vmatprep.subr.mxu0 0.0
    %1276 = vmatpush1.msra.mxu0 0.0
    %1277 = vmatprep.subr.mxu0 0.0
    %1278 = vmatpush1.msra.mxu0 0.0
    %1279 = vmatprep.subr.mxu0 0.0
    %1280 = vmatpush1.msra.mxu0 0.0
    %1281 = vmatprep.subr.mxu0 0.0
    %1282 = vmatpush1.msra.mxu0 0.0
    %1283 = vmatprep.subr.mxu0 0.0
    %1284 = vmatpush1.msra.mxu0 0.0
    %1285 = vmatprep.subr.mxu0 0.0
    %1286 = vmatpush1.msra.mxu0 0.0
    %1287 = vmatprep.subr.mxu0 0.0
    %1288 = vmatpush1.msra.mxu0 0.0
    %1289 = vmatprep.subr.mxu0 0.0
    %1290 = vmatpush1.msra.mxu0 0.0
    %1291 = vmatprep.subr.mxu0 0.0
    %1292 = vmatpush1.msra.mxu0 0.0
    %1293 = vmatprep.subr.mxu0 0.0
    %1294 = vmatpush1.msra.mxu0 0.0
    %1295 = vmatprep.subr.mxu0 0.0
    %1296 = vmatpush1.msra.mxu0 0.0
    %1297 = vmatprep.subr.mxu0 0.0
    %1298 = vmatpush1.msra.mxu0 0.0
    %1299 = vmatprep.subr.mxu0 0.0
    %1300 = vmatpush1.msra.mxu0 0.0
    %1301 = vmatprep.subr.mxu0 0.0
    %1302 = vmatpush1.msra.mxu0 0.0
    %1303 = vmatprep.subr.mxu0 0.0
    %1304 = vmatpush1.msra.mxu0 0.0
    %1305 = vmatprep.mubr.f32.mxu0 0.0
    %1306 = vmatmul.mubr.f32.gmra.mrb[0].mxu0 %v1159
    %v1307 = vpop.f32.mrb[0].mxu0
    %v1308 = vadd.f32 0.0, %v1307
    %v1309 = vpop.f32.mrb[0].mxu0
    %v1310 = vadd.f32 0.0, %v1309
    %1311 = vmatprep.mubr.f32.mxu0 0.0
    %1312 = vmatmul.mubr.f32.gmra.mrb[0].mxu0 %v1162
    %v1313 = vpop.f32.mrb[0].mxu0
    %v1314 = vadd.f32 0.0, %v1313
    %v1315 = vpop.f32.mrb[0].mxu0
    %v1316 = vadd.f32 0.0, %v1315
    %1317 = vdwg.mxu0
    %1318 = vmatprep.subr.mxu0 %v57
    %1319 = vmatpush1.msra.mxu0 %v56
    %1320 = vmatprep.subr.mxu0 0.0
    %1321 = vmatpush1.msra.mxu0 0.0
    %1322 = vmatprep.subr.mxu0 0.0
    %1323 = vmatpush1.msra.mxu0 0.0
    %1324 = vmatprep.subr.mxu0 0.0
    %1325 = vmatpush1.msra.mxu0 0.0
    %1326 = vmatprep.subr.mxu0 0.0
    %1327 = vmatpush1.msra.mxu0 0.0
    %1328 = vmatprep.subr.mxu0 0.0
    %1329 = vmatpush1.msra.mxu0 0.0
    %1330 = vmatprep.subr.mxu0 0.0
    %1331 = vmatpush1.msra.mxu0 0.0
    %1332 = vmatprep.subr.mxu0 0.0
    %1333 = vmatpush1.msra.mxu0 0.0
    %1334 = vmatprep.subr.mxu0 0.0
    %1335 = vmatpush1.msra.mxu0 0.0
    %1336 = vmatprep.subr.mxu0 0.0
    %1337 = vmatpush1.msra.mxu0 0.0
    %1338 = vmatprep.subr.mxu0 0.0
    %1339 = vmatpush1.msra.mxu0 0.0
    %1340 = vmatprep.subr.mxu0 0.0
    %1341 = vmatpush1.msra.mxu0 0.0
    %1342 = vmatprep.subr.mxu0 0.0
    %1343 = vmatpush1.msra.mxu0 0.0
    %1344 = vmatprep.subr.mxu0 0.0
    %1345 = vmatpush1.msra.mxu0 0.0
    %1346 = vmatprep.subr.mxu0 0.0
    %1347 = vmatpush1.msra.mxu0 0.0
    %1348 = vmatprep.subr.mxu0 0.0
    %1349 = vmatpush1.msra.mxu0 0.0
    %1350 = vmatprep.subr.mxu0 0.0
    %1351 = vmatpush1.msra.mxu0 0.0
    %1352 = vmatprep.subr.mxu0 0.0
    %1353 = vmatpush1.msra.mxu0 0.0
    %1354 = vmatprep.subr.mxu0 0.0
    %1355 = vmatpush1.msra.mxu0 0.0
    %1356 = vmatprep.subr.mxu0 0.0
    %1357 = vmatpush1.msra.mxu0 0.0
    %1358 = vmatprep.subr.mxu0 0.0
    %1359 = vmatpush1.msra.mxu0 0.0
    %1360 = vmatprep.subr.mxu0 0.0
    %1361 = vmatpush1.msra.mxu0 0.0
    %1362 = vmatprep.subr.mxu0 0.0
    %1363 = vmatpush1.msra.mxu0 0.0
    %1364 = vmatprep.subr.mxu0 0.0
    %1365 = vmatpush1.msra.mxu0 0.0
    %1366 = vmatprep.subr.mxu0 0.0
    %1367 = vmatpush1.msra.mxu0 0.0
    %1368 = vmatprep.subr.mxu0 0.0
    %1369 = vmatpush1.msra.mxu0 0.0
    %1370 = vmatprep.subr.mxu0 0.0
    %1371 = vmatpush1.msra.mxu0 0.0
    %1372 = vmatprep.subr.mxu0 0.0
    %1373 = vmatpush1.msra.mxu0 0.0
    %1374 = vmatprep.subr.mxu0 0.0
    %1375 = vmatpush1.msra.mxu0 0.0
    %1376 = vmatprep.subr.mxu0 0.0
    %1377 = vmatpush1.msra.mxu0 0.0
    %1378 = vmatprep.subr.mxu0 0.0
    %1379 = vmatpush1.msra.mxu0 0.0
    %1380 = vmatprep.subr.mxu0 0.0
    %1381 = vmatpush1.msra.mxu0 0.0
    %1382 = vmatprep.mubr.f32.mxu0 0.0
    %1383 = vmatmul.mubr.f32.gmra.mrb[0].mxu0 %v1159
    %v1384 = vpop.f32.mrb[0].mxu0
    %v1385 = vadd.f32 0.0, %v1384
    %v1386 = vpop.f32.mrb[0].mxu0
    %v1387 = vadd.f32 0.0, %v1386
    %1388 = vmatprep.mubr.f32.mxu0 0.0
    %1389 = vmatmul.mubr.f32.gmra.mrb[0].mxu0 %v1162
    %v1390 = vpop.f32.mrb[0].mxu0
    %v1391 = vadd.f32 0.0, %v1390
    %v1392 = vpop.f32.mrb[0].mxu0
    %v1393 = vadd.f32 0.0, %v1392
    %1394 = vdwg.mxu0
    %v1395 = vadd.f32 %v1143, %v1231
    %v1396 = vadd.f32 %v1144, %v1233
    %v1397 = vadd.f32 %v1145, %v1308
    %v1398 = vadd.f32 %v1146, %v1310
    %v1399 = vadd.f32 %v1147, %v1385
    %v1400 = vadd.f32 %v1148, %v1387
    %v1401 = vadd.f32 %v1149, %v1237
    %v1402 = vadd.f32 %v1150, %v1239
    %v1403 = vadd.f32 %v1151, %v1314
    %v1404 = vadd.f32 %v1152, %v1316
    %v1405 = vadd.f32 %v1153, %v1391
    %v1406 = vadd.f32 %v1154, %v1393
    %s1407 = scalar_lea.vmem %s2, 80
    %v1408 = vld [vmem:[%s1407] sm:$0xff]
    %v1409 = vld [vmem:[%s1407 + $0x8] sm:$0xff]
    %v1410 = vld [vmem:[#allocation2 + $0x8] sm:$0xff]
    %v1411 = vld [vmem:[#allocation2 + $0x10] sm:$0xff]
    %v1412 = vld [vmem:[#allocation2 + $0x18] sm:$0xff]
    %v1413 = vld [vmem:[#allocation2 + $0x20] sm:$0xff]
    %v1414 = vld [vmem:[#allocation2 + $0x28] sm:$0xff]
    %v1415 = vld [vmem:[#allocation2 + $0x30] sm:$0xff]
    %v1416 = vld [vmem:[#allocation2 + $0x38] sm:$0xff]
    %1424 = vrot.lane.b32.xlu0 %v1410, 127
    %v1425 = vpop.permute.xlu0 %1424
    %1426 = vrot.lane.b32.xlu0 %v1411, 127
    %v1427 = vpop.permute.xlu0 %1426
    %1428 = vrot.lane.b32.xlu0 %v1412, 127
    %v1429 = vpop.permute.xlu0 %1428
    %1430 = vrot.lane.b32.xlu0 %v1413, 127
    %v1431 = vpop.permute.xlu0 %1430
    %1432 = vrot.lane.b32.xlu0 %v1414, 127
    %v1433 = vpop.permute.xlu0 %1432
    %1434 = vrot.lane.b32.xlu0 %v1415, 127
    %v1435 = vpop.permute.xlu0 %1434
    %1436 = vrot.lane.b32.xlu0 %v1416, 127
    %v1437 = vpop.permute.xlu0 %1436
    %vm1438 = vcmask 1039360
    %v1439 = vsel %vm1438, %v1425, %v1427
    %v1440 = vsel %vm1438, %v1427, %v1429
    %v1441 = vsel %vm1438, %v1429, %v1431
    %v1442 = vsel %vm1438, %v1431, %v1433
    %v1443 = vsel %vm1438, %v1433, %v1435
    %v1444 = vsel %vm1438, %v1435, %v1437
    %v1452 = vsel %vm95, %v1408, 0
    %v1455 = vsel %vm95, %v1409, 0
    %1457 = vmatprep.subr.mxu0 %v1440
    %1458 = vmatpush1.msra.mxu0 %v1439
    %1459 = vmatprep.subr.mxu0 0.0
    %1460 = vmatpush1.msra.mxu0 0.0
    %1461 = vmatprep.subr.mxu0 0.0
    %1462 = vmatpush1.msra.mxu0 0.0
    %1463 = vmatprep.subr.mxu0 0.0
    %1464 = vmatpush1.msra.mxu0 0.0
    %1465 = vmatprep.subr.mxu0 0.0
    %1466 = vmatpush1.msra.mxu0 0.0
    %1467 = vmatprep.subr.mxu0 0.0
    %1468 = vmatpush1.msra.mxu0 0.0
    %1469 = vmatprep.subr.mxu0 0.0
    %1470 = vmatpush1.msra.mxu0 0.0
    %1471 = vmatprep.subr.mxu0 0.0
    %1472 = vmatpush1.msra.mxu0 0.0
    %1473 = vmatprep.subr.mxu0 0.0
    %1474 = vmatpush1.msra.mxu0 0.0
    %1475 = vmatprep.subr.mxu0 0.0
    %1476 = vmatpush1.msra.mxu0 0.0
    %1477 = vmatprep.subr.mxu0 0.0
    %1478 = vmatpush1.msra.mxu0 0.0
    %1479 = vmatprep.subr.mxu0 0.0
    %1480 = vmatpush1.msra.mxu0 0.0
    %1481 = vmatprep.subr.mxu0 0.0
    %1482 = vmatpush1.msra.mxu0 0.0
    %1483 = vmatprep.subr.mxu0 0.0
    %1484 = vmatpush1.msra.mxu0 0.0
    %1485 = vmatprep.subr.mxu0 0.0
    %1486 = vmatpush1.msra.mxu0 0.0
    %1487 = vmatprep.subr.mxu0 0.0
    %1488 = vmatpush1.msra.mxu0 0.0
    %1489 = vmatprep.subr.mxu0 0.0
    %1490 = vmatpush1.msra.mxu0 0.0
    %1491 = vmatprep.subr.mxu0 0.0
    %1492 = vmatpush1.msra.mxu0 0.0
    %1493 = vmatprep.subr.mxu0 0.0
    %1494 = vmatpush1.msra.mxu0 0.0
    %1495 = vmatprep.subr.mxu0 0.0
    %1496 = vmatpush1.msra.mxu0 0.0
    %1497 = vmatprep.subr.mxu0 0.0
    %1498 = vmatpush1.msra.mxu0 0.0
    %1499 = vmatprep.subr.mxu0 0.0
    %1500 = vmatpush1.msra.mxu0 0.0
    %1501 = vmatprep.subr.mxu0 0.0
    %1502 = vmatpush1.msra.mxu0 0.0
    %1503 = vmatprep.subr.mxu0 0.0
    %1504 = vmatpush1.msra.mxu0 0.0
    %1505 = vmatprep.subr.mxu0 0.0
    %1506 = vmatpush1.msra.mxu0 0.0
    %1507 = vmatprep.subr.mxu0 0.0
    %1508 = vmatpush1.msra.mxu0 0.0
    %1509 = vmatprep.subr.mxu0 0.0
    %1510 = vmatpush1.msra.mxu0 0.0
    %1511 = vmatprep.subr.mxu0 0.0
    %1512 = vmatpush1.msra.mxu0 0.0
    %1513 = vmatprep.subr.mxu0 0.0
    %1514 = vmatpush1.msra.mxu0 0.0
    %1515 = vmatprep.subr.mxu0 0.0
    %1516 = vmatpush1.msra.mxu0 0.0
    %1517 = vmatprep.subr.mxu0 0.0
    %1518 = vmatpush1.msra.mxu0 0.0
    %1519 = vmatprep.subr.mxu0 0.0
    %1520 = vmatpush1.msra.mxu0 0.0
    %1521 = vmatprep.mubr.f32.mxu0 0.0
    %1522 = vmatmul.mubr.f32.gmra.mrb[0].mxu0 %v1452
    %v1523 = vpop.f32.mrb[0].mxu0
    %v1524 = vadd.f32 0.0, %v1523
    %v1525 = vpop.f32.mrb[0].mxu0
    %v1526 = vadd.f32 0.0, %v1525
    %1527 = vmatprep.mubr.f32.mxu0 0.0
    %1528 = vmatmul.mubr.f32.gmra.mrb[0].mxu0 %v1455
    %v1529 = vpop.f32.mrb[0].mxu0
    %v1530 = vadd.f32 0.0, %v1529
    %v1531 = vpop.f32.mrb[0].mxu0
    %v1532 = vadd.f32 0.0, %v1531
    %1533 = vdwg.mxu0
    %1534 = vmatprep.subr.mxu0 %v1442
    %1535 = vmatpush1.msra.mxu0 %v1441
    %1536 = vmatprep.subr.mxu0 0.0
    %1537 = vmatpush1.msra.mxu0 0.0
    %1538 = vmatprep.subr.mxu0 0.0
    %1539 = vmatpush1.msra.mxu0 0.0
    %1540 = vmatprep.subr.mxu0 0.0
    %1541 = vmatpush1.msra.mxu0 0.0
    %1542 = vmatprep.subr.mxu0 0.0
    %1543 = vmatpush1.msra.mxu0 0.0
    %1544 = vmatprep.subr.mxu0 0.0
    %1545 = vmatpush1.msra.mxu0 0.0
    %1546 = vmatprep.subr.mxu0 0.0
    %1547 = vmatpush1.msra.mxu0 0.0
    %1548 = vmatprep.subr.mxu0 0.0
    %1549 = vmatpush1.msra.mxu0 0.0
    %1550 = vmatprep.subr.mxu0 0.0
    %1551 = vmatpush1.msra.mxu0 0.0
    %1552 = vmatprep.subr.mxu0 0.0
    %1553 = vmatpush1.msra.mxu0 0.0
    %1554 = vmatprep.subr.mxu0 0.0
    %1555 = vmatpush1.msra.mxu0 0.0
    %1556 = vmatprep.subr.mxu0 0.0
    %1557 = vmatpush1.msra.mxu0 0.0
    %1558 = vmatprep.subr.mxu0 0.0
    %1559 = vmatpush1.msra.mxu0 0.0
    %1560 = vmatprep.subr.mxu0 0.0
    %1561 = vmatpush1.msra.mxu0 0.0
    %1562 = vmatprep.subr.mxu0 0.0
    %1563 = vmatpush1.msra.mxu0 0.0
    %1564 = vmatprep.subr.mxu0 0.0
    %1565 = vmatpush1.msra.mxu0 0.0
    %1566 = vmatprep.subr.mxu0 0.0
    %1567 = vmatpush1.msra.mxu0 0.0
    %1568 = vmatprep.subr.mxu0 0.0
    %1569 = vmatpush1.msra.mxu0 0.0
    %1570 = vmatprep.subr.mxu0 0.0
    %1571 = vmatpush1.msra.mxu0 0.0
    %1572 = vmatprep.subr.mxu0 0.0
    %1573 = vmatpush1.msra.mxu0 0.0
    %1574 = vmatprep.subr.mxu0 0.0
    %1575 = vmatpush1.msra.mxu0 0.0
    %1576 = vmatprep.subr.mxu0 0.0
    %1577 = vmatpush1.msra.mxu0 0.0
    %1578 = vmatprep.subr.mxu0 0.0
    %1579 = vmatpush1.msra.mxu0 0.0
    %1580 = vmatprep.subr.mxu0 0.0
    %1581 = vmatpush1.msra.mxu0 0.0
    %1582 = vmatprep.subr.mxu0 0.0
    %1583 = vmatpush1.msra.mxu0 0.0
    %1584 = vmatprep.subr.mxu0 0.0
    %1585 = vmatpush1.msra.mxu0 0.0
    %1586 = vmatprep.subr.mxu0 0.0
    %1587 = vmatpush1.msra.mxu0 0.0
    %1588 = vmatprep.subr.mxu0 0.0
    %1589 = vmatpush1.msra.mxu0 0.0
    %1590 = vmatprep.subr.mxu0 0.0
    %1591 = vmatpush1.msra.mxu0 0.0
    %1592 = vmatprep.subr.mxu0 0.0
    %1593 = vmatpush1.msra.mxu0 0.0
    %1594 = vmatprep.subr.mxu0 0.0
    %1595 = vmatpush1.msra.mxu0 0.0
    %1596 = vmatprep.subr.mxu0 0.0
    %1597 = vmatpush1.msra.mxu0 0.0
    %1598 = vmatprep.mubr.f32.mxu0 0.0
    %1599 = vmatmul.mubr.f32.gmra.mrb[0].mxu0 %v1452
    %v1600 = vpop.f32.mrb[0].mxu0
    %v1601 = vadd.f32 0.0, %v1600
    %v1602 = vpop.f32.mrb[0].mxu0
    %v1603 = vadd.f32 0.0, %v1602
    %1604 = vmatprep.mubr.f32.mxu0 0.0
    %1605 = vmatmul.mubr.f32.gmra.mrb[0].mxu0 %v1455
    %v1606 = vpop.f32.mrb[0].mxu0
    %v1607 = vadd.f32 0.0, %v1606
    %v1608 = vpop.f32.mrb[0].mxu0
    %v1609 = vadd.f32 0.0, %v1608
    %1610 = vdwg.mxu0
    %1611 = vmatprep.subr.mxu0 %v1444
    %1612 = vmatpush1.msra.mxu0 %v1443
    %1613 = vmatprep.subr.mxu0 0.0
    %1614 = vmatpush1.msra.mxu0 0.0
    %1615 = vmatprep.subr.mxu0 0.0
    %1616 = vmatpush1.msra.mxu0 0.0
    %1617 = vmatprep.subr.mxu0 0.0
    %1618 = vmatpush1.msra.mxu0 0.0
    %1619 = vmatprep.subr.mxu0 0.0
    %1620 = vmatpush1.msra.mxu0 0.0
    %1621 = vmatprep.subr.mxu0 0.0
    %1622 = vmatpush1.msra.mxu0 0.0
    %1623 = vmatprep.subr.mxu0 0.0
    %1624 = vmatpush1.msra.mxu0 0.0
    %1625 = vmatprep.subr.mxu0 0.0
    %1626 = vmatpush1.msra.mxu0 0.0
    %1627 = vmatprep.subr.mxu0 0.0
    %1628 = vmatpush1.msra.mxu0 0.0
    %1629 = vmatprep.subr.mxu0 0.0
    %1630 = vmatpush1.msra.mxu0 0.0
    %1631 = vmatprep.subr.mxu0 0.0
    %1632 = vmatpush1.msra.mxu0 0.0
    %1633 = vmatprep.subr.mxu0 0.0
    %1634 = vmatpush1.msra.mxu0 0.0
    %1635 = vmatprep.subr.mxu0 0.0
    %1636 = vmatpush1.msra.mxu0 0.0
    %1637 = vmatprep.subr.mxu0 0.0
    %1638 = vmatpush1.msra.mxu0 0.0
    %1639 = vmatprep.subr.mxu0 0.0
    %1640 = vmatpush1.msra.mxu0 0.0
    %1641 = vmatprep.subr.mxu0 0.0
    %1642 = vmatpush1.msra.mxu0 0.0
    %1643 = vmatprep.subr.mxu0 0.0
    %1644 = vmatpush1.msra.mxu0 0.0
    %1645 = vmatprep.subr.mxu0 0.0
    %1646 = vmatpush1.msra.mxu0 0.0
    %1647 = vmatprep.subr.mxu0 0.0
    %1648 = vmatpush1.msra.mxu0 0.0
    %1649 = vmatprep.subr.mxu0 0.0
    %1650 = vmatpush1.msra.mxu0 0.0
    %1651 = vmatprep.subr.mxu0 0.0
    %1652 = vmatpush1.msra.mxu0 0.0
    %1653 = vmatprep.subr.mxu0 0.0
    %1654 = vmatpush1.msra.mxu0 0.0
    %1655 = vmatprep.subr.mxu0 0.0
    %1656 = vmatpush1.msra.mxu0 0.0
    %1657 = vmatprep.subr.mxu0 0.0
    %1658 = vmatpush1.msra.mxu0 0.0
    %1659 = vmatprep.subr.mxu0 0.0
    %1660 = vmatpush1.msra.mxu0 0.0
    %1661 = vmatprep.subr.mxu0 0.0
    %1662 = vmatpush1.msra.mxu0 0.0
    %1663 = vmatprep.subr.mxu0 0.0
    %1664 = vmatpush1.msra.mxu0 0.0
    %1665 = vmatprep.subr.mxu0 0.0
    %1666 = vmatpush1.msra.mxu0 0.0
    %1667 = vmatprep.subr.mxu0 0.0
    %1668 = vmatpush1.msra.mxu0 0.0
    %1669 = vmatprep.subr.mxu0 0.0
    %1670 = vmatpush1.msra.mxu0 0.0
    %1671 = vmatprep.subr.mxu0 0.0
    %1672 = vmatpush1.msra.mxu0 0.0
    %1673 = vmatprep.subr.mxu0 0.0
    %1674 = vmatpush1.msra.mxu0 0.0
    %1675 = vmatprep.mubr.f32.mxu0 0.0
    %1676 = vmatmul.mubr.f32.gmra.mrb[0].mxu0 %v1452
    %v1677 = vpop.f32.mrb[0].mxu0
    %v1678 = vadd.f32 0.0, %v1677
    %v1679 = vpop.f32.mrb[0].mxu0
    %v1680 = vadd.f32 0.0, %v1679
    %1681 = vmatprep.mubr.f32.mxu0 0.0
    %1682 = vmatmul.mubr.f32.gmra.mrb[0].mxu0 %v1455
    %v1683 = vpop.f32.mrb[0].mxu0
    %v1684 = vadd.f32 0.0, %v1683
    %v1685 = vpop.f32.mrb[0].mxu0
    %v1686 = vadd.f32 0.0, %v1685
    %1687 = vdwg.mxu0
    %v1688 = vadd.f32 %v1395, %v1524
    %v1689 = vadd.f32 %v1396, %v1526
    %v1690 = vadd.f32 %v1397, %v1601
    %v1691 = vadd.f32 %v1398, %v1603
    %v1692 = vadd.f32 %v1399, %v1678
    %v1693 = vadd.f32 %v1400, %v1680
    %v1694 = vadd.f32 %v1401, %v1530
    %v1695 = vadd.f32 %v1402, %v1532
    %v1696 = vadd.f32 %v1403, %v1607
    %v1697 = vadd.f32 %v1404, %v1609
    %v1698 = vadd.f32 %v1405, %v1684
    %v1699 = vadd.f32 %v1406, %v1686
    %s1700 = scalar_lea.vmem %s2, 96
    %v1701 = vld [vmem:[%s1700] sm:$0xff]
    %v1702 = vld [vmem:[%s1700 + $0x8] sm:$0xff]
    %1703 = vrot.lane.b32.xlu0 %v1410, 111
    %v1704 = vpop.permute.xlu0 %1703
    %1705 = vrot.lane.b32.xlu0 %v1411, 111
    %v1706 = vpop.permute.xlu0 %1705
    %1707 = vrot.lane.b32.xlu0 %v1412, 111
    %v1708 = vpop.permute.xlu0 %1707
    %1709 = vrot.lane.b32.xlu0 %v1413, 111
    %v1710 = vpop.permute.xlu0 %1709
    %1711 = vrot.lane.b32.xlu0 %v1414, 111
    %v1712 = vpop.permute.xlu0 %1711
    %1713 = vrot.lane.b32.xlu0 %v1415, 111
    %v1714 = vpop.permute.xlu0 %1713
    %1715 = vrot.lane.b32.xlu0 %v1416, 111
    %v1716 = vpop.permute.xlu0 %1715
    %vm1717 = vcmask 908288
    %v1718 = vsel %vm1717, %v1704, %v1706
    %v1719 = vsel %vm1717, %v1706, %v1708
    %v1720 = vsel %vm1717, %v1708, %v1710
    %v1721 = vsel %vm1717, %v1710, %v1712
    %v1722 = vsel %vm1717, %v1712, %v1714
    %v1723 = vsel %vm1717, %v1714, %v1716
    %v1731 = vsel %vm95, %v1701, 0
    %v1734 = vsel %vm95, %v1702, 0
    %1736 = vmatprep.subr.mxu0 %v1719
    %1737 = vmatpush1.msra.mxu0 %v1718
    %1738 = vmatprep.subr.mxu0 0.0
    %1739 = vmatpush1.msra.mxu0 0.0
    %1740 = vmatprep.subr.mxu0 0.0
    %1741 = vmatpush1.msra.mxu0 0.0
    %1742 = vmatprep.subr.mxu0 0.0
    %1743 = vmatpush1.msra.mxu0 0.0
    %1744 = vmatprep.subr.mxu0 0.0
    %1745 = vmatpush1.msra.mxu0 0.0
    %1746 = vmatprep.subr.mxu0 0.0
    %1747 = vmatpush1.msra.mxu0 0.0
    %1748 = vmatprep.subr.mxu0 0.0
    %1749 = vmatpush1.msra.mxu0 0.0
    %1750 = vmatprep.subr.mxu0 0.0
    %1751 = vmatpush1.msra.mxu0 0.0
    %1752 = vmatprep.subr.mxu0 0.0
    %1753 = vmatpush1.msra.mxu0 0.0
    %1754 = vmatprep.subr.mxu0 0.0
    %1755 = vmatpush1.msra.mxu0 0.0
    %1756 = vmatprep.subr.mxu0 0.0
    %1757 = vmatpush1.msra.mxu0 0.0
    %1758 = vmatprep.subr.mxu0 0.0
    %1759 = vmatpush1.msra.mxu0 0.0
    %1760 = vmatprep.subr.mxu0 0.0
    %1761 = vmatpush1.msra.mxu0 0.0
    %1762 = vmatprep.subr.mxu0 0.0
    %1763 = vmatpush1.msra.mxu0 0.0
    %1764 = vmatprep.subr.mxu0 0.0
    %1765 = vmatpush1.msra.mxu0 0.0
    %1766 = vmatprep.subr.mxu0 0.0
    %1767 = vmatpush1.msra.mxu0 0.0
    %1768 = vmatprep.subr.mxu0 0.0
    %1769 = vmatpush1.msra.mxu0 0.0
    %1770 = vmatprep.subr.mxu0 0.0
    %1771 = vmatpush1.msra.mxu0 0.0
    %1772 = vmatprep.subr.mxu0 0.0
    %1773 = vmatpush1.msra.mxu0 0.0
    %1774 = vmatprep.subr.mxu0 0.0
    %1775 = vmatpush1.msra.mxu0 0.0
    %1776 = vmatprep.subr.mxu0 0.0
    %1777 = vmatpush1.msra.mxu0 0.0
    %1778 = vmatprep.subr.mxu0 0.0
    %1779 = vmatpush1.msra.mxu0 0.0
    %1780 = vmatprep.subr.mxu0 0.0
    %1781 = vmatpush1.msra.mxu0 0.0
    %1782 = vmatprep.subr.mxu0 0.0
    %1783 = vmatpush1.msra.mxu0 0.0
    %1784 = vmatprep.subr.mxu0 0.0
    %1785 = vmatpush1.msra.mxu0 0.0
    %1786 = vmatprep.subr.mxu0 0.0
    %1787 = vmatpush1.msra.mxu0 0.0
    %1788 = vmatprep.subr.mxu0 0.0
    %1789 = vmatpush1.msra.mxu0 0.0
    %1790 = vmatprep.subr.mxu0 0.0
    %1791 = vmatpush1.msra.mxu0 0.0
    %1792 = vmatprep.subr.mxu0 0.0
    %1793 = vmatpush1.msra.mxu0 0.0
    %1794 = vmatprep.subr.mxu0 0.0
    %1795 = vmatpush1.msra.mxu0 0.0
    %1796 = vmatprep.subr.mxu0 0.0
    %1797 = vmatpush1.msra.mxu0 0.0
    %1798 = vmatprep.subr.mxu0 0.0
    %1799 = vmatpush1.msra.mxu0 0.0
    %1800 = vmatprep.mubr.f32.mxu0 0.0
    %1801 = vmatmul.mubr.f32.gmra.mrb[0].mxu0 %v1731
    %v1802 = vpop.f32.mrb[0].mxu0
    %v1803 = vadd.f32 0.0, %v1802
    %v1804 = vpop.f32.mrb[0].mxu0
    %v1805 = vadd.f32 0.0, %v1804
    %1806 = vmatprep.mubr.f32.mxu0 0.0
    %1807 = vmatmul.mubr.f32.gmra.mrb[0].mxu0 %v1734
    %v1808 = vpop.f32.mrb[0].mxu0
    %v1809 = vadd.f32 0.0, %v1808
    %v1810 = vpop.f32.mrb[0].mxu0
    %v1811 = vadd.f32 0.0, %v1810
    %1812 = vdwg.mxu0
    %1813 = vmatprep.subr.mxu0 %v1721
    %1814 = vmatpush1.msra.mxu0 %v1720
    %1815 = vmatprep.subr.mxu0 0.0
    %1816 = vmatpush1.msra.mxu0 0.0
    %1817 = vmatprep.subr.mxu0 0.0
    %1818 = vmatpush1.msra.mxu0 0.0
    %1819 = vmatprep.subr.mxu0 0.0
    %1820 = vmatpush1.msra.mxu0 0.0
    %1821 = vmatprep.subr.mxu0 0.0
    %1822 = vmatpush1.msra.mxu0 0.0
    %1823 = vmatprep.subr.mxu0 0.0
    %1824 = vmatpush1.msra.mxu0 0.0
    %1825 = vmatprep.subr.mxu0 0.0
    %1826 = vmatpush1.msra.mxu0 0.0
    %1827 = vmatprep.subr.mxu0 0.0
    %1828 = vmatpush1.msra.mxu0 0.0
    %1829 = vmatprep.subr.mxu0 0.0
    %1830 = vmatpush1.msra.mxu0 0.0
    %1831 = vmatprep.subr.mxu0 0.0
    %1832 = vmatpush1.msra.mxu0 0.0
    %1833 = vmatprep.subr.mxu0 0.0
    %1834 = vmatpush1.msra.mxu0 0.0
    %1835 = vmatprep.subr.mxu0 0.0
    %1836 = vmatpush1.msra.mxu0 0.0
    %1837 = vmatprep.subr.mxu0 0.0
    %1838 = vmatpush1.msra.mxu0 0.0
    %1839 = vmatprep.subr.mxu0 0.0
    %1840 = vmatpush1.msra.mxu0 0.0
    %1841 = vmatprep.subr.mxu0 0.0
    %1842 = vmatpush1.msra.mxu0 0.0
    %1843 = vmatprep.subr.mxu0 0.0
    %1844 = vmatpush1.msra.mxu0 0.0
    %1845 = vmatprep.subr.mxu0 0.0
    %1846 = vmatpush1.msra.mxu0 0.0
    %1847 = vmatprep.subr.mxu0 0.0
    %1848 = vmatpush1.msra.mxu0 0.0
    %1849 = vmatprep.subr.mxu0 0.0
    %1850 = vmatpush1.msra.mxu0 0.0
    %1851 = vmatprep.subr.mxu0 0.0
    %1852 = vmatpush1.msra.mxu0 0.0
    %1853 = vmatprep.subr.mxu0 0.0
    %1854 = vmatpush1.msra.mxu0 0.0
    %1855 = vmatprep.subr.mxu0 0.0
    %1856 = vmatpush1.msra.mxu0 0.0
    %1857 = vmatprep.subr.mxu0 0.0
    %1858 = vmatpush1.msra.mxu0 0.0
    %1859 = vmatprep.subr.mxu0 0.0
    %1860 = vmatpush1.msra.mxu0 0.0
    %1861 = vmatprep.subr.mxu0 0.0
    %1862 = vmatpush1.msra.mxu0 0.0
    %1863 = vmatprep.subr.mxu0 0.0
    %1864 = vmatpush1.msra.mxu0 0.0
    %1865 = vmatprep.subr.mxu0 0.0
    %1866 = vmatpush1.msra.mxu0 0.0
    %1867 = vmatprep.subr.mxu0 0.0
    %1868 = vmatpush1.msra.mxu0 0.0
    %1869 = vmatprep.subr.mxu0 0.0
    %1870 = vmatpush1.msra.mxu0 0.0
    %1871 = vmatprep.subr.mxu0 0.0
    %1872 = vmatpush1.msra.mxu0 0.0
    %1873 = vmatprep.subr.mxu0 0.0
    %1874 = vmatpush1.msra.mxu0 0.0
    %1875 = vmatprep.subr.mxu0 0.0
    %1876 = vmatpush1.msra.mxu0 0.0
    %1877 = vmatprep.mubr.f32.mxu0 0.0
    %1878 = vmatmul.mubr.f32.gmra.mrb[0].mxu0 %v1731
    %v1879 = vpop.f32.mrb[0].mxu0
    %v1880 = vadd.f32 0.0, %v1879
    %v1881 = vpop.f32.mrb[0].mxu0
    %v1882 = vadd.f32 0.0, %v1881
    %1883 = vmatprep.mubr.f32.mxu0 0.0
    %1884 = vmatmul.mubr.f32.gmra.mrb[0].mxu0 %v1734
    %v1885 = vpop.f32.mrb[0].mxu0
    %v1886 = vadd.f32 0.0, %v1885
    %v1887 = vpop.f32.mrb[0].mxu0
    %v1888 = vadd.f32 0.0, %v1887
    %1889 = vdwg.mxu0
    %1890 = vmatprep.subr.mxu0 %v1723
    %1891 = vmatpush1.msra.mxu0 %v1722
    %1892 = vmatprep.subr.mxu0 0.0
    %1893 = vmatpush1.msra.mxu0 0.0
    %1894 = vmatprep.subr.mxu0 0.0
    %1895 = vmatpush1.msra.mxu0 0.0
    %1896 = vmatprep.subr.mxu0 0.0
    %1897 = vmatpush1.msra.mxu0 0.0
    %1898 = vmatprep.subr.mxu0 0.0
    %1899 = vmatpush1.msra.mxu0 0.0
    %1900 = vmatprep.subr.mxu0 0.0
    %1901 = vmatpush1.msra.mxu0 0.0
    %1902 = vmatprep.subr.mxu0 0.0
    %1903 = vmatpush1.msra.mxu0 0.0
    %1904 = vmatprep.subr.mxu0 0.0
    %1905 = vmatpush1.msra.mxu0 0.0
    %1906 = vmatprep.subr.mxu0 0.0
    %1907 = vmatpush1.msra.mxu0 0.0
    %1908 = vmatprep.subr.mxu0 0.0
    %1909 = vmatpush1.msra.mxu0 0.0
    %1910 = vmatprep.subr.mxu0 0.0
    %1911 = vmatpush1.msra.mxu0 0.0
    %1912 = vmatprep.subr.mxu0 0.0
    %1913 = vmatpush1.msra.mxu0 0.0
    %1914 = vmatprep.subr.mxu0 0.0
    %1915 = vmatpush1.msra.mxu0 0.0
    %1916 = vmatprep.subr.mxu0 0.0
    %1917 = vmatpush1.msra.mxu0 0.0
    %1918 = vmatprep.subr.mxu0 0.0
    %1919 = vmatpush1.msra.mxu0 0.0
    %1920 = vmatprep.subr.mxu0 0.0
    %1921 = vmatpush1.msra.mxu0 0.0
    %1922 = vmatprep.subr.mxu0 0.0
    %1923 = vmatpush1.msra.mxu0 0.0
    %1924 = vmatprep.subr.mxu0 0.0
    %1925 = vmatpush1.msra.mxu0 0.0
    %1926 = vmatprep.subr.mxu0 0.0
    %1927 = vmatpush1.msra.mxu0 0.0
    %1928 = vmatprep.subr.mxu0 0.0
    %1929 = vmatpush1.msra.mxu0 0.0
    %1930 = vmatprep.subr.mxu0 0.0
    %1931 = vmatpush1.msra.mxu0 0.0
    %1932 = vmatprep.subr.mxu0 0.0
    %1933 = vmatpush1.msra.mxu0 0.0
    %1934 = vmatprep.subr.mxu0 0.0
    %1935 = vmatpush1.msra.mxu0 0.0
    %1936 = vmatprep.subr.mxu0 0.0
    %1937 = vmatpush1.msra.mxu0 0.0
    %1938 = vmatprep.subr.mxu0 0.0
    %1939 = vmatpush1.msra.mxu0 0.0
    %1940 = vmatprep.subr.mxu0 0.0
    %1941 = vmatpush1.msra.mxu0 0.0
    %1942 = vmatprep.subr.mxu0 0.0
    %1943 = vmatpush1.msra.mxu0 0.0
    %1944 = vmatprep.subr.mxu0 0.0
    %1945 = vmatpush1.msra.mxu0 0.0
    %1946 = vmatprep.subr.mxu0 0.0
    %1947 = vmatpush1.msra.mxu0 0.0
    %1948 = vmatprep.subr.mxu0 0.0
    %1949 = vmatpush1.msra.mxu0 0.0
    %1950 = vmatprep.subr.mxu0 0.0
    %1951 = vmatpush1.msra.mxu0 0.0
    %1952 = vmatprep.subr.mxu0 0.0
    %1953 = vmatpush1.msra.mxu0 0.0
    %1954 = vmatprep.mubr.f32.mxu0 0.0
    %1955 = vmatmul.mubr.f32.gmra.mrb[0].mxu0 %v1731
    %v1956 = vpop.f32.mrb[0].mxu0
    %v1957 = vadd.f32 0.0, %v1956
    %v1958 = vpop.f32.mrb[0].mxu0
    %v1959 = vadd.f32 0.0, %v1958
    %1960 = vmatprep.mubr.f32.mxu0 0.0
    %1961 = vmatmul.mubr.f32.gmra.mrb[0].mxu0 %v1734
    %v1962 = vpop.f32.mrb[0].mxu0
    %v1963 = vadd.f32 0.0, %v1962
    %v1964 = vpop.f32.mrb[0].mxu0
    %v1965 = vadd.f32 0.0, %v1964
    %1966 = vdwg.mxu0
    %v1967 = vadd.f32 %v1688, %v1803
    %v1968 = vadd.f32 %v1689, %v1805
    %v1969 = vadd.f32 %v1690, %v1880
    %v1970 = vadd.f32 %v1691, %v1882
    %v1971 = vadd.f32 %v1692, %v1957
    %v1972 = vadd.f32 %v1693, %v1959
    %v1973 = vadd.f32 %v1694, %v1809
    %v1974 = vadd.f32 %v1695, %v1811
    %v1975 = vadd.f32 %v1696, %v1886
    %v1976 = vadd.f32 %v1697, %v1888
    %v1977 = vadd.f32 %v1698, %v1963
    %v1978 = vadd.f32 %v1699, %v1965
    %s1979 = scalar_lea.vmem %s2, 112
    %v1980 = vld [vmem:[%s1979] sm:$0xff]
    %v1981 = vld [vmem:[%s1979 + $0x8] sm:$0xff]
    %1982 = vrot.lane.b32.xlu0 %v1410, 110
    %v1983 = vpop.permute.xlu0 %1982
    %1984 = vrot.lane.b32.xlu0 %v1411, 110
    %v1985 = vpop.permute.xlu0 %1984
    %1986 = vrot.lane.b32.xlu0 %v1412, 110
    %v1987 = vpop.permute.xlu0 %1986
    %1988 = vrot.lane.b32.xlu0 %v1413, 110
    %v1989 = vpop.permute.xlu0 %1988
    %1990 = vrot.lane.b32.xlu0 %v1414, 110
    %v1991 = vpop.permute.xlu0 %1990
    %1992 = vrot.lane.b32.xlu0 %v1415, 110
    %v1993 = vpop.permute.xlu0 %1992
    %1994 = vrot.lane.b32.xlu0 %v1416, 110
    %v1995 = vpop.permute.xlu0 %1994
    %vm1996 = vcmask 900096
    %v1997 = vsel %vm1996, %v1983, %v1985
    %v1998 = vsel %vm1996, %v1985, %v1987
    %v1999 = vsel %vm1996, %v1987, %v1989
    %v2000 = vsel %vm1996, %v1989, %v1991
    %v2001 = vsel %vm1996, %v1991, %v1993
    %v2002 = vsel %vm1996, %v1993, %v1995
    %v2010 = vsel %vm95, %v1980, 0
    %v2013 = vsel %vm95, %v1981, 0
    %2015 = vmatprep.subr.mxu0 %v1998
    %2016 = vmatpush1.msra.mxu0 %v1997
    %2017 = vmatprep.subr.mxu0 0.0
    %2018 = vmatpush1.msra.mxu0 0.0
    %2019 = vmatprep.subr.mxu0 0.0
    %2020 = vmatpush1.msra.mxu0 0.0
    %2021 = vmatprep.subr.mxu0 0.0
    %2022 = vmatpush1.msra.mxu0 0.0
    %2023 = vmatprep.subr.mxu0 0.0
    %2024 = vmatpush1.msra.mxu0 0.0
    %2025 = vmatprep.subr.mxu0 0.0
    %2026 = vmatpush1.msra.mxu0 0.0
    %2027 = vmatprep.subr.mxu0 0.0
    %2028 = vmatpush1.msra.mxu0 0.0
    %2029 = vmatprep.subr.mxu0 0.0
    %2030 = vmatpush1.msra.mxu0 0.0
    %2031 = vmatprep.subr.mxu0 0.0
    %2032 = vmatpush1.msra.mxu0 0.0
    %2033 = vmatprep.subr.mxu0 0.0
    %2034 = vmatpush1.msra.mxu0 0.0
    %2035 = vmatprep.subr.mxu0 0.0
    %2036 = vmatpush1.msra.mxu0 0.0
    %2037 = vmatprep.subr.mxu0 0.0
    %2038 = vmatpush1.msra.mxu0 0.0
    %2039 = vmatprep.subr.mxu0 0.0
    %2040 = vmatpush1.msra.mxu0 0.0
    %2041 = vmatprep.subr.mxu0 0.0
    %2042 = vmatpush1.msra.mxu0 0.0
    %2043 = vmatprep.subr.mxu0 0.0
    %2044 = vmatpush1.msra.mxu0 0.0
    %2045 = vmatprep.subr.mxu0 0.0
    %2046 = vmatpush1.msra.mxu0 0.0
    %2047 = vmatprep.subr.mxu0 0.0
    %2048 = vmatpush1.msra.mxu0 0.0
    %2049 = vmatprep.subr.mxu0 0.0
    %2050 = vmatpush1.msra.mxu0 0.0
    %2051 = vmatprep.subr.mxu0 0.0
    %2052 = vmatpush1.msra.mxu0 0.0
    %2053 = vmatprep.subr.mxu0 0.0
    %2054 = vmatpush1.msra.mxu0 0.0
    %2055 = vmatprep.subr.mxu0 0.0
    %2056 = vmatpush1.msra.mxu0 0.0
    %2057 = vmatprep.subr.mxu0 0.0
    %2058 = vmatpush1.msra.mxu0 0.0
    %2059 = vmatprep.subr.mxu0 0.0
    %2060 = vmatpush1.msra.mxu0 0.0
    %2061 = vmatprep.subr.mxu0 0.0
    %2062 = vmatpush1.msra.mxu0 0.0
    %2063 = vmatprep.subr.mxu0 0.0
    %2064 = vmatpush1.msra.mxu0 0.0
    %2065 = vmatprep.subr.mxu0 0.0
    %2066 = vmatpush1.msra.mxu0 0.0
    %2067 = vmatprep.subr.mxu0 0.0
    %2068 = vmatpush1.msra.mxu0 0.0
    %2069 = vmatprep.subr.mxu0 0.0
    %2070 = vmatpush1.msra.mxu0 0.0
    %2071 = vmatprep.subr.mxu0 0.0
    %2072 = vmatpush1.msra.mxu0 0.0
    %2073 = vmatprep.subr.mxu0 0.0
    %2074 = vmatpush1.msra.mxu0 0.0
    %2075 = vmatprep.subr.mxu0 0.0
    %2076 = vmatpush1.msra.mxu0 0.0
    %2077 = vmatprep.subr.mxu0 0.0
    %2078 = vmatpush1.msra.mxu0 0.0
    %2079 = vmatprep.mubr.f32.mxu0 0.0
    %2080 = vmatmul.mubr.f32.gmra.mrb[0].mxu0 %v2010
    %v2081 = vpop.f32.mrb[0].mxu0
    %v2082 = vadd.f32 0.0, %v2081
    %v2083 = vpop.f32.mrb[0].mxu0
    %v2084 = vadd.f32 0.0, %v2083
    %2085 = vmatprep.mubr.f32.mxu0 0.0
    %2086 = vmatmul.mubr.f32.gmra.mrb[0].mxu0 %v2013
    %v2087 = vpop.f32.mrb[0].mxu0
    %v2088 = vadd.f32 0.0, %v2087
    %v2089 = vpop.f32.mrb[0].mxu0
    %v2090 = vadd.f32 0.0, %v2089
    %2091 = vdwg.mxu0
    %2092 = vmatprep.subr.mxu0 %v2000
    %2093 = vmatpush1.msra.mxu0 %v1999
    %2094 = vmatprep.subr.mxu0 0.0
    %2095 = vmatpush1.msra.mxu0 0.0
    %2096 = vmatprep.subr.mxu0 0.0
    %2097 = vmatpush1.msra.mxu0 0.0
    %2098 = vmatprep.subr.mxu0 0.0
    %2099 = vmatpush1.msra.mxu0 0.0
    %2100 = vmatprep.subr.mxu0 0.0
    %2101 = vmatpush1.msra.mxu0 0.0
    %2102 = vmatprep.subr.mxu0 0.0
    %2103 = vmatpush1.msra.mxu0 0.0
    %2104 = vmatprep.subr.mxu0 0.0
    %2105 = vmatpush1.msra.mxu0 0.0
    %2106 = vmatprep.subr.mxu0 0.0
    %2107 = vmatpush1.msra.mxu0 0.0
    %2108 = vmatprep.subr.mxu0 0.0
    %2109 = vmatpush1.msra.mxu0 0.0
    %2110 = vmatprep.subr.mxu0 0.0
    %2111 = vmatpush1.msra.mxu0 0.0
    %2112 = vmatprep.subr.mxu0 0.0
    %2113 = vmatpush1.msra.mxu0 0.0
    %2114 = vmatprep.subr.mxu0 0.0
    %2115 = vmatpush1.msra.mxu0 0.0
    %2116 = vmatprep.subr.mxu0 0.0
    %2117 = vmatpush1.msra.mxu0 0.0
    %2118 = vmatprep.subr.mxu0 0.0
    %2119 = vmatpush1.msra.mxu0 0.0
    %2120 = vmatprep.subr.mxu0 0.0
    %2121 = vmatpush1.msra.mxu0 0.0
    %2122 = vmatprep.subr.mxu0 0.0
    %2123 = vmatpush1.msra.mxu0 0.0
    %2124 = vmatprep.subr.mxu0 0.0
    %2125 = vmatpush1.msra.mxu0 0.0
    %2126 = vmatprep.subr.mxu0 0.0
    %2127 = vmatpush1.msra.mxu0 0.0
    %2128 = vmatprep.subr.mxu0 0.0
    %2129 = vmatpush1.msra.mxu0 0.0
    %2130 = vmatprep.subr.mxu0 0.0
    %2131 = vmatpush1.msra.mxu0 0.0
    %2132 = vmatprep.subr.mxu0 0.0
    %2133 = vmatpush1.msra.mxu0 0.0
    %2134 = vmatprep.subr.mxu0 0.0
    %2135 = vmatpush1.msra.mxu0 0.0
    %2136 = vmatprep.subr.mxu0 0.0
    %2137 = vmatpush1.msra.mxu0 0.0
    %2138 = vmatprep.subr.mxu0 0.0
    %2139 = vmatpush1.msra.mxu0 0.0
    %2140 = vmatprep.subr.mxu0 0.0
    %2141 = vmatpush1.msra.mxu0 0.0
    %2142 = vmatprep.subr.mxu0 0.0
    %2143 = vmatpush1.msra.mxu0 0.0
    %2144 = vmatprep.subr.mxu0 0.0
    %2145 = vmatpush1.msra.mxu0 0.0
    %2146 = vmatprep.subr.mxu0 0.0
    %2147 = vmatpush1.msra.mxu0 0.0
    %2148 = vmatprep.subr.mxu0 0.0
    %2149 = vmatpush1.msra.mxu0 0.0
    %2150 = vmatprep.subr.mxu0 0.0
    %2151 = vmatpush1.msra.mxu0 0.0
    %2152 = vmatprep.subr.mxu0 0.0
    %2153 = vmatpush1.msra.mxu0 0.0
    %2154 = vmatprep.subr.mxu0 0.0
    %2155 = vmatpush1.msra.mxu0 0.0
    %2156 = vmatprep.mubr.f32.mxu0 0.0
    %2157 = vmatmul.mubr.f32.gmra.mrb[0].mxu0 %v2010
    %v2158 = vpop.f32.mrb[0].mxu0
    %v2159 = vadd.f32 0.0, %v2158
    %v2160 = vpop.f32.mrb[0].mxu0
    %v2161 = vadd.f32 0.0, %v2160
    %2162 = vmatprep.mubr.f32.mxu0 0.0
    %2163 = vmatmul.mubr.f32.gmra.mrb[0].mxu0 %v2013
    %v2164 = vpop.f32.mrb[0].mxu0
    %v2165 = vadd.f32 0.0, %v2164
    %v2166 = vpop.f32.mrb[0].mxu0
    %v2167 = vadd.f32 0.0, %v2166
    %2168 = vdwg.mxu0
    %2169 = vmatprep.subr.mxu0 %v2002
    %2170 = vmatpush1.msra.mxu0 %v2001
    %2171 = vmatprep.subr.mxu0 0.0
    %2172 = vmatpush1.msra.mxu0 0.0
    %2173 = vmatprep.subr.mxu0 0.0
    %2174 = vmatpush1.msra.mxu0 0.0
    %2175 = vmatprep.subr.mxu0 0.0
    %2176 = vmatpush1.msra.mxu0 0.0
    %2177 = vmatprep.subr.mxu0 0.0
    %2178 = vmatpush1.msra.mxu0 0.0
    %2179 = vmatprep.subr.mxu0 0.0
    %2180 = vmatpush1.msra.mxu0 0.0
    %2181 = vmatprep.subr.mxu0 0.0
    %2182 = vmatpush1.msra.mxu0 0.0
    %2183 = vmatprep.subr.mxu0 0.0
    %2184 = vmatpush1.msra.mxu0 0.0
    %2185 = vmatprep.subr.mxu0 0.0
    %2186 = vmatpush1.msra.mxu0 0.0
    %2187 = vmatprep.subr.mxu0 0.0
    %2188 = vmatpush1.msra.mxu0 0.0
    %2189 = vmatprep.subr.mxu0 0.0
    %2190 = vmatpush1.msra.mxu0 0.0
    %2191 = vmatprep.subr.mxu0 0.0
    %2192 = vmatpush1.msra.mxu0 0.0
    %2193 = vmatprep.subr.mxu0 0.0
    %2194 = vmatpush1.msra.mxu0 0.0
    %2195 = vmatprep.subr.mxu0 0.0
    %2196 = vmatpush1.msra.mxu0 0.0
    %2197 = vmatprep.subr.mxu0 0.0
    %2198 = vmatpush1.msra.mxu0 0.0
    %2199 = vmatprep.subr.mxu0 0.0
    %2200 = vmatpush1.msra.mxu0 0.0
    %2201 = vmatprep.subr.mxu0 0.0
    %2202 = vmatpush1.msra.mxu0 0.0
    %2203 = vmatprep.subr.mxu0 0.0
    %2204 = vmatpush1.msra.mxu0 0.0
    %2205 = vmatprep.subr.mxu0 0.0
    %2206 = vmatpush1.msra.mxu0 0.0
    %2207 = vmatprep.subr.mxu0 0.0
    %2208 = vmatpush1.msra.mxu0 0.0
    %2209 = vmatprep.subr.mxu0 0.0
    %2210 = vmatpush1.msra.mxu0 0.0
    %2211 = vmatprep.subr.mxu0 0.0
    %2212 = vmatpush1.msra.mxu0 0.0
    %2213 = vmatprep.subr.mxu0 0.0
    %2214 = vmatpush1.msra.mxu0 0.0
    %2215 = vmatprep.subr.mxu0 0.0
    %2216 = vmatpush1.msra.mxu0 0.0
    %2217 = vmatprep.subr.mxu0 0.0
    %2218 = vmatpush1.msra.mxu0 0.0
    %2219 = vmatprep.subr.mxu0 0.0
    %2220 = vmatpush1.msra.mxu0 0.0
    %2221 = vmatprep.subr.mxu0 0.0
    %2222 = vmatpush1.msra.mxu0 0.0
    %2223 = vmatprep.subr.mxu0 0.0
    %2224 = vmatpush1.msra.mxu0 0.0
    %2225 = vmatprep.subr.mxu0 0.0
    %2226 = vmatpush1.msra.mxu0 0.0
    %2227 = vmatprep.subr.mxu0 0.0
    %2228 = vmatpush1.msra.mxu0 0.0
    %2229 = vmatprep.subr.mxu0 0.0
    %2230 = vmatpush1.msra.mxu0 0.0
    %2231 = vmatprep.subr.mxu0 0.0
    %2232 = vmatpush1.msra.mxu0 0.0
    %2233 = vmatprep.mubr.f32.mxu0 0.0
    %2234 = vmatmul.mubr.f32.gmra.mrb[0].mxu0 %v2010
    %v2235 = vpop.f32.mrb[0].mxu0
    %v2236 = vadd.f32 0.0, %v2235
    %v2237 = vpop.f32.mrb[0].mxu0
    %v2238 = vadd.f32 0.0, %v2237
    %2239 = vmatprep.mubr.f32.mxu0 0.0
    %2240 = vmatmul.mubr.f32.gmra.mrb[0].mxu0 %v2013
    %v2241 = vpop.f32.mrb[0].mxu0
    %v2242 = vadd.f32 0.0, %v2241
    %v2243 = vpop.f32.mrb[0].mxu0
    %v2244 = vadd.f32 0.0, %v2243
    %2245 = vdwg.mxu0
    %v2246 = vadd.f32 %v1967, %v2082
    %v2247 = vadd.f32 %v1968, %v2084
    %v2248 = vadd.f32 %v1969, %v2159
    %v2249 = vadd.f32 %v1970, %v2161
    %v2250 = vadd.f32 %v1971, %v2236
    %v2251 = vadd.f32 %v1972, %v2238
    %v2252 = vadd.f32 %v1973, %v2088
    %v2253 = vadd.f32 %v1974, %v2090
    %v2254 = vadd.f32 %v1975, %v2165
    %v2255 = vadd.f32 %v1976, %v2167
    %v2256 = vadd.f32 %v1977, %v2242
    %v2257 = vadd.f32 %v1978, %v2244
    %s2258 = scalar_lea.vmem %s2, 128
    %v2259 = vld [vmem:[%s2258] sm:$0xff]
    %v2260 = vld [vmem:[%s2258 + $0x8] sm:$0xff]
    %2261 = vrot.lane.b32.xlu0 %v1410, 109
    %v2262 = vpop.permute.xlu0 %2261
    %2263 = vrot.lane.b32.xlu0 %v1411, 109
    %v2264 = vpop.permute.xlu0 %2263
    %2265 = vrot.lane.b32.xlu0 %v1412, 109
    %v2266 = vpop.permute.xlu0 %2265
    %2267 = vrot.lane.b32.xlu0 %v1413, 109
    %v2268 = vpop.permute.xlu0 %2267
    %2269 = vrot.lane.b32.xlu0 %v1414, 109
    %v2270 = vpop.permute.xlu0 %2269
    %2271 = vrot.lane.b32.xlu0 %v1415, 109
    %v2272 = vpop.permute.xlu0 %2271
    %2273 = vrot.lane.b32.xlu0 %v1416, 109
    %v2274 = vpop.permute.xlu0 %2273
    %vm2275 = vcmask 891904
    %v2276 = vsel %vm2275, %v2262, %v2264
    %v2277 = vsel %vm2275, %v2264, %v2266
    %v2278 = vsel %vm2275, %v2266, %v2268
    %v2279 = vsel %vm2275, %v2268, %v2270
    %v2280 = vsel %vm2275, %v2270, %v2272
    %v2281 = vsel %vm2275, %v2272, %v2274
    %v2289 = vsel %vm95, %v2259, 0
    %v2292 = vsel %vm95, %v2260, 0
    %2294 = vmatprep.subr.mxu0 %v2277
    %2295 = vmatpush1.msra.mxu0 %v2276
    %2296 = vmatprep.subr.mxu0 0.0
    %2297 = vmatpush1.msra.mxu0 0.0
    %2298 = vmatprep.subr.mxu0 0.0
    %2299 = vmatpush1.msra.mxu0 0.0
    %2300 = vmatprep.subr.mxu0 0.0
    %2301 = vmatpush1.msra.mxu0 0.0
    %2302 = vmatprep.subr.mxu0 0.0
    %2303 = vmatpush1.msra.mxu0 0.0
    %2304 = vmatprep.subr.mxu0 0.0
    %2305 = vmatpush1.msra.mxu0 0.0
    %2306 = vmatprep.subr.mxu0 0.0
    %2307 = vmatpush1.msra.mxu0 0.0
    %2308 = vmatprep.subr.mxu0 0.0
    %2309 = vmatpush1.msra.mxu0 0.0
    %2310 = vmatprep.subr.mxu0 0.0
    %2311 = vmatpush1.msra.mxu0 0.0
    %2312 = vmatprep.subr.mxu0 0.0
    %2313 = vmatpush1.msra.mxu0 0.0
    %2314 = vmatprep.subr.mxu0 0.0
    %2315 = vmatpush1.msra.mxu0 0.0
    %2316 = vmatprep.subr.mxu0 0.0
    %2317 = vmatpush1.msra.mxu0 0.0
    %2318 = vmatprep.subr.mxu0 0.0
    %2319 = vmatpush1.msra.mxu0 0.0
    %2320 = vmatprep.subr.mxu0 0.0
    %2321 = vmatpush1.msra.mxu0 0.0
    %2322 = vmatprep.subr.mxu0 0.0
    %2323 = vmatpush1.msra.mxu0 0.0
    %2324 = vmatprep.subr.mxu0 0.0
    %2325 = vmatpush1.msra.mxu0 0.0
    %2326 = vmatprep.subr.mxu0 0.0
    %2327 = vmatpush1.msra.mxu0 0.0
    %2328 = vmatprep.subr.mxu0 0.0
    %2329 = vmatpush1.msra.mxu0 0.0
    %2330 = vmatprep.subr.mxu0 0.0
    %2331 = vmatpush1.msra.mxu0 0.0
    %2332 = vmatprep.subr.mxu0 0.0
    %2333 = vmatpush1.msra.mxu0 0.0
    %2334 = vmatprep.subr.mxu0 0.0
    %2335 = vmatpush1.msra.mxu0 0.0
    %2336 = vmatprep.subr.mxu0 0.0
    %2337 = vmatpush1.msra.mxu0 0.0
    %2338 = vmatprep.subr.mxu0 0.0
    %2339 = vmatpush1.msra.mxu0 0.0
    %2340 = vmatprep.subr.mxu0 0.0
    %2341 = vmatpush1.msra.mxu0 0.0
    %2342 = vmatprep.subr.mxu0 0.0
    %2343 = vmatpush1.msra.mxu0 0.0
    %2344 = vmatprep.subr.mxu0 0.0
    %2345 = vmatpush1.msra.mxu0 0.0
    %2346 = vmatprep.subr.mxu0 0.0
    %2347 = vmatpush1.msra.mxu0 0.0
    %2348 = vmatprep.subr.mxu0 0.0
    %2349 = vmatpush1.msra.mxu0 0.0
    %2350 = vmatprep.subr.mxu0 0.0
    %2351 = vmatpush1.msra.mxu0 0.0
    %2352 = vmatprep.subr.mxu0 0.0
    %2353 = vmatpush1.msra.mxu0 0.0
    %2354 = vmatprep.subr.mxu0 0.0
    %2355 = vmatpush1.msra.mxu0 0.0
    %2356 = vmatprep.subr.mxu0 0.0
    %2357 = vmatpush1.msra.mxu0 0.0
    %2358 = vmatprep.mubr.f32.mxu0 0.0
    %2359 = vmatmul.mubr.f32.gmra.mrb[0].mxu0 %v2289
    %v2360 = vpop.f32.mrb[0].mxu0
    %v2361 = vadd.f32 0.0, %v2360
    %v2362 = vpop.f32.mrb[0].mxu0
    %v2363 = vadd.f32 0.0, %v2362
    %2364 = vmatprep.mubr.f32.mxu0 0.0
    %2365 = vmatmul.mubr.f32.gmra.mrb[0].mxu0 %v2292
    %v2366 = vpop.f32.mrb[0].mxu0
    %v2367 = vadd.f32 0.0, %v2366
    %v2368 = vpop.f32.mrb[0].mxu0
    %v2369 = vadd.f32 0.0, %v2368
    %2370 = vdwg.mxu0
    %2371 = vmatprep.subr.mxu0 %v2279
    %2372 = vmatpush1.msra.mxu0 %v2278
    %2373 = vmatprep.subr.mxu0 0.0
    %2374 = vmatpush1.msra.mxu0 0.0
    %2375 = vmatprep.subr.mxu0 0.0
    %2376 = vmatpush1.msra.mxu0 0.0
    %2377 = vmatprep.subr.mxu0 0.0
    %2378 = vmatpush1.msra.mxu0 0.0
    %2379 = vmatprep.subr.mxu0 0.0
    %2380 = vmatpush1.msra.mxu0 0.0
    %2381 = vmatprep.subr.mxu0 0.0
    %2382 = vmatpush1.msra.mxu0 0.0
    %2383 = vmatprep.subr.mxu0 0.0
    %2384 = vmatpush1.msra.mxu0 0.0
    %2385 = vmatprep.subr.mxu0 0.0
    %2386 = vmatpush1.msra.mxu0 0.0
    %2387 = vmatprep.subr.mxu0 0.0
    %2388 = vmatpush1.msra.mxu0 0.0
    %2389 = vmatprep.subr.mxu0 0.0
    %2390 = vmatpush1.msra.mxu0 0.0
    %2391 = vmatprep.subr.mxu0 0.0
    %2392 = vmatpush1.msra.mxu0 0.0
    %2393 = vmatprep.subr.mxu0 0.0
    %2394 = vmatpush1.msra.mxu0 0.0
    %2395 = vmatprep.subr.mxu0 0.0
    %2396 = vmatpush1.msra.mxu0 0.0
    %2397 = vmatprep.subr.mxu0 0.0
    %2398 = vmatpush1.msra.mxu0 0.0
    %2399 = vmatprep.subr.mxu0 0.0
    %2400 = vmatpush1.msra.mxu0 0.0
    %2401 = vmatprep.subr.mxu0 0.0
    %2402 = vmatpush1.msra.mxu0 0.0
    %2403 = vmatprep.subr.mxu0 0.0
    %2404 = vmatpush1.msra.mxu0 0.0
    %2405 = vmatprep.subr.mxu0 0.0
    %2406 = vmatpush1.msra.mxu0 0.0
    %2407 = vmatprep.subr.mxu0 0.0
    %2408 = vmatpush1.msra.mxu0 0.0
    %2409 = vmatprep.subr.mxu0 0.0
    %2410 = vmatpush1.msra.mxu0 0.0
    %2411 = vmatprep.subr.mxu0 0.0
    %2412 = vmatpush1.msra.mxu0 0.0
    %2413 = vmatprep.subr.mxu0 0.0
    %2414 = vmatpush1.msra.mxu0 0.0
    %2415 = vmatprep.subr.mxu0 0.0
    %2416 = vmatpush1.msra.mxu0 0.0
    %2417 = vmatprep.subr.mxu0 0.0
    %2418 = vmatpush1.msra.mxu0 0.0
    %2419 = vmatprep.subr.mxu0 0.0
    %2420 = vmatpush1.msra.mxu0 0.0
    %2421 = vmatprep.subr.mxu0 0.0
    %2422 = vmatpush1.msra.mxu0 0.0
    %2423 = vmatprep.subr.mxu0 0.0
    %2424 = vmatpush1.msra.mxu0 0.0
    %2425 = vmatprep.subr.mxu0 0.0
    %2426 = vmatpush1.msra.mxu0 0.0
    %2427 = vmatprep.subr.mxu0 0.0
    %2428 = vmatpush1.msra.mxu0 0.0
    %2429 = vmatprep.subr.mxu0 0.0
    %2430 = vmatpush1.msra.mxu0 0.0
    %2431 = vmatprep.subr.mxu0 0.0
    %2432 = vmatpush1.msra.mxu0 0.0
    %2433 = vmatprep.subr.mxu0 0.0
    %2434 = vmatpush1.msra.mxu0 0.0
    %2435 = vmatprep.mubr.f32.mxu0 0.0
    %2436 = vmatmul.mubr.f32.gmra.mrb[0].mxu0 %v2289
    %v2437 = vpop.f32.mrb[0].mxu0
    %v2438 = vadd.f32 0.0, %v2437
    %v2439 = vpop.f32.mrb[0].mxu0
    %v2440 = vadd.f32 0.0, %v2439
    %2441 = vmatprep.mubr.f32.mxu0 0.0
    %2442 = vmatmul.mubr.f32.gmra.mrb[0].mxu0 %v2292
    %v2443 = vpop.f32.mrb[0].mxu0
    %v2444 = vadd.f32 0.0, %v2443
    %v2445 = vpop.f32.mrb[0].mxu0
    %v2446 = vadd.f32 0.0, %v2445
    %2447 = vdwg.mxu0
    %2448 = vmatprep.subr.mxu0 %v2281
    %2449 = vmatpush1.msra.mxu0 %v2280
    %2450 = vmatprep.subr.mxu0 0.0
    %2451 = vmatpush1.msra.mxu0 0.0
    %2452 = vmatprep.subr.mxu0 0.0
    %2453 = vmatpush1.msra.mxu0 0.0
    %2454 = vmatprep.subr.mxu0 0.0
    %2455 = vmatpush1.msra.mxu0 0.0
    %2456 = vmatprep.subr.mxu0 0.0
    %2457 = vmatpush1.msra.mxu0 0.0
    %2458 = vmatprep.subr.mxu0 0.0
    %2459 = vmatpush1.msra.mxu0 0.0
    %2460 = vmatprep.subr.mxu0 0.0
    %2461 = vmatpush1.msra.mxu0 0.0
    %2462 = vmatprep.subr.mxu0 0.0
    %2463 = vmatpush1.msra.mxu0 0.0
    %2464 = vmatprep.subr.mxu0 0.0
    %2465 = vmatpush1.msra.mxu0 0.0
    %2466 = vmatprep.subr.mxu0 0.0
    %2467 = vmatpush1.msra.mxu0 0.0
    %2468 = vmatprep.subr.mxu0 0.0
    %2469 = vmatpush1.msra.mxu0 0.0
    %2470 = vmatprep.subr.mxu0 0.0
    %2471 = vmatpush1.msra.mxu0 0.0
    %2472 = vmatprep.subr.mxu0 0.0
    %2473 = vmatpush1.msra.mxu0 0.0
    %2474 = vmatprep.subr.mxu0 0.0
    %2475 = vmatpush1.msra.mxu0 0.0
    %2476 = vmatprep.subr.mxu0 0.0
    %2477 = vmatpush1.msra.mxu0 0.0
    %2478 = vmatprep.subr.mxu0 0.0
    %2479 = vmatpush1.msra.mxu0 0.0
    %2480 = vmatprep.subr.mxu0 0.0
    %2481 = vmatpush1.msra.mxu0 0.0
    %2482 = vmatprep.subr.mxu0 0.0
    %2483 = vmatpush1.msra.mxu0 0.0
    %2484 = vmatprep.subr.mxu0 0.0
    %2485 = vmatpush1.msra.mxu0 0.0
    %2486 = vmatprep.subr.mxu0 0.0
    %2487 = vmatpush1.msra.mxu0 0.0
    %2488 = vmatprep.subr.mxu0 0.0
    %2489 = vmatpush1.msra.mxu0 0.0
    %2490 = vmatprep.subr.mxu0 0.0
    %2491 = vmatpush1.msra.mxu0 0.0
    %2492 = vmatprep.subr.mxu0 0.0
    %2493 = vmatpush1.msra.mxu0 0.0
    %2494 = vmatprep.subr.mxu0 0.0
    %2495 = vmatpush1.msra.mxu0 0.0
    %2496 = vmatprep.subr.mxu0 0.0
    %2497 = vmatpush1.msra.mxu0 0.0
    %2498 = vmatprep.subr.mxu0 0.0
    %2499 = vmatpush1.msra.mxu0 0.0
    %2500 = vmatprep.subr.mxu0 0.0
    %2501 = vmatpush1.msra.mxu0 0.0
    %2502 = vmatprep.subr.mxu0 0.0
    %2503 = vmatpush1.msra.mxu0 0.0
    %2504 = vmatprep.subr.mxu0 0.0
    %2505 = vmatpush1.msra.mxu0 0.0
    %2506 = vmatprep.subr.mxu0 0.0
    %2507 = vmatpush1.msra.mxu0 0.0
    %2508 = vmatprep.subr.mxu0 0.0
    %2509 = vmatpush1.msra.mxu0 0.0
    %2510 = vmatprep.subr.mxu0 0.0
    %2511 = vmatpush1.msra.mxu0 0.0
    %2512 = vmatprep.mubr.f32.mxu0 0.0
    %2513 = vmatmul.mubr.f32.gmra.mrb[0].mxu0 %v2289
    %v2514 = vpop.f32.mrb[0].mxu0
    %v2515 = vadd.f32 0.0, %v2514
    %v2516 = vpop.f32.mrb[0].mxu0
    %v2517 = vadd.f32 0.0, %v2516
    %2518 = vmatprep.mubr.f32.mxu0 0.0
    %2519 = vmatmul.mubr.f32.gmra.mrb[0].mxu0 %v2292
    %v2520 = vpop.f32.mrb[0].mxu0
    %v2521 = vadd.f32 0.0, %v2520
    %v2522 = vpop.f32.mrb[0].mxu0
    %v2523 = vadd.f32 0.0, %v2522
    %2524 = vdwg.mxu0
    %v2525 = vadd.f32 %v2246, %v2361
    %v2526 = vadd.f32 %v2247, %v2363
    %v2527 = vadd.f32 %v2248, %v2438
    %v2528 = vadd.f32 %v2249, %v2440
    %v2529 = vadd.f32 %v2250, %v2515
    %v2530 = vadd.f32 %v2251, %v2517
    %v2531 = vadd.f32 %v2252, %v2367
    %v2532 = vadd.f32 %v2253, %v2369
    %v2533 = vadd.f32 %v2254, %v2444
    %v2534 = vadd.f32 %v2255, %v2446
    %v2535 = vadd.f32 %v2256, %v2521
    %v2536 = vadd.f32 %v2257, %v2523
    %v2537 = vld [vmem:[%s8] sm:$0xff]
    %2539 = vset.pattern.permute.xlu0 0
    %2540 = vperm.xlu0 %2539, %v2537
    %v2541 = vpop.permute.xlu0 %2540
    %v2543 = vadd.f32 %v2531, %v2541
    %v2544 = vadd.f32 %v2532, %v2541
    %v2545 = vadd.f32 %v2533, %v2541
    %v2546 = vadd.f32 %v2534, %v2541
    %v2547 = vadd.f32 %v2535, %v2541
    %v2548 = vadd.f32 %v2536, %v2541
    %v2549 = vsel %vm34, 1, 0
    %v2550 = vlaneseq
    %v2551 = vshrl.u32 %v2550, 7
    %v2552 = vsub.s32 0, %v2551
    %v2553 = vrot.slane %v2549, %v2552
    %v2554 = vlaneseq
    %v2555 = vshrl.u32 %v2554, 7
    %v2556 = vsub.s32 1, %v2555
    %v2557 = vrot.slane %v2549, %v2556
    %v2558 = vlaneseq
    %v2559 = vshrl.u32 %v2558, 7
    %v2560 = vsub.s32 2, %v2559
    %v2561 = vrot.slane %v2549, %v2560
    %v2562 = vlaneseq
    %v2563 = vshrl.u32 %v2562, 7
    %v2564 = vsub.s32 3, %v2563
    %v2565 = vrot.slane %v2549, %v2564
    %v2566 = vlaneseq
    %v2567 = vshrl.u32 %v2566, 7
    %v2568 = vsub.s32 4, %v2567
    %v2569 = vrot.slane %v2549, %v2568
    %v2570 = vlaneseq
    %v2571 = vshrl.u32 %v2570, 7
    %v2572 = vsub.s32 5, %v2571
    %v2573 = vrot.slane %v2549, %v2572
    %vm2574 = vcmp.eq.s32.totalorder %v2553, 1
    %vm2575 = vcmp.eq.s32.totalorder %v2557, 1
    %vm2576 = vcmp.eq.s32.totalorder %v2561, 1
    %vm2577 = vcmp.eq.s32.totalorder %v2565, 1
    %vm2578 = vcmp.eq.s32.totalorder %v2569, 1
    %vm2579 = vcmp.eq.s32.totalorder %v2573, 1
    %v2580 = vsel %vm2574, %v2525, 0.0
    %v2581 = vsel %vm2575, %v2526, 0.0
    %v2582 = vsel %vm2576, %v2527, 0.0
    %v2583 = vsel %vm2577, %v2528, 0.0
    %v2584 = vsel %vm2578, %v2529, 0.0
    %v2585 = vsel %vm2579, %v2530, 0.0
    %v2586 = vadd.f32 %v2580, %v2581
    %v2587 = vadd.f32 %v2586, %v2582
    %v2588 = vadd.f32 %v2587, %v2583
    %v2589 = vadd.f32 %v2588, %v2584
    %v2590 = vadd.f32 %v2589, %v2585
    %2591 = vadd.xlane.f32.xlu0 %v2590
    %v2592 = vpop.xlane.xlu0 %2591
    %v2593 = vmul.f32 %v2580, %v2580
    %v2594 = vmul.f32 %v2581, %v2581
    %v2595 = vmul.f32 %v2582, %v2582
    %v2596 = vmul.f32 %v2583, %v2583
    %v2597 = vmul.f32 %v2584, %v2584
    %v2598 = vmul.f32 %v2585, %v2585
    %v2599 = vadd.f32 %v2593, %v2594
    %v2600 = vadd.f32 %v2599, %v2595
    %v2601 = vadd.f32 %v2600, %v2596
    %v2602 = vadd.f32 %v2601, %v2597
    %v2603 = vadd.f32 %v2602, %v2598
    %2604 = vadd.xlane.f32.xlu0 %v2603
    %v2605 = vpop.xlane.xlu0 %2604
    %v2606 = vmul.f32 %v2592, 0.001953125
    %v2607 = vmul.f32 %v2605, 0.001953125
    %v2608 = vmul.f32 %v2606, %v2606
    %v2609 = vsub.f32 %v2607, %v2608
    %v2610 = vld [vmem:[%s3] sm:$0xff]
    %v2611 = vadd.f32 %v2609, 1e-05
    %v2612 = vrsqrt.pop %v2611
    %v2613 = vmul.f32 %v2610, %v2612
    %v2614 = vld [vmem:[%s4] sm:$0xff]
    %v2615 = vmul.f32 %v2606, %v2613
    %v2616 = vsub.f32 %v2614, %v2615
    %2618 = vset.pattern.permute.xlu0 0
    %2619 = vperm.xlu0 %2618, %v2613
    %v2620 = vpop.permute.xlu0 %2619
    %v2622 = vmul.f32 %v2525, %v2620
    %v2623 = vmul.f32 %v2526, %v2620
    %v2624 = vmul.f32 %v2527, %v2620
    %v2625 = vmul.f32 %v2528, %v2620
    %v2626 = vmul.f32 %v2529, %v2620
    %v2627 = vmul.f32 %v2530, %v2620
    %2629 = vset.pattern.permute.xlu0 0
    %2630 = vperm.xlu0 %2629, %v2616
    %v2631 = vpop.permute.xlu0 %2630
    %v2633 = vadd.f32 %v2622, %v2631
    %v2634 = vadd.f32 %v2623, %v2631
    %v2635 = vadd.f32 %v2624, %v2631
    %v2636 = vadd.f32 %v2625, %v2631
    %v2637 = vadd.f32 %v2626, %v2631
    %v2638 = vadd.f32 %v2627, %v2631
    %vm2639 = vcmp.gt.f32.partialorder %v2633, 0.0
    %vm2640 = vcmp.gt.f32.partialorder %v2634, 0.0
    %vm2641 = vcmp.gt.f32.partialorder %v2635, 0.0
    %vm2642 = vcmp.gt.f32.partialorder %v2636, 0.0
    %vm2643 = vcmp.gt.f32.partialorder %v2637, 0.0
    %vm2644 = vcmp.gt.f32.partialorder %v2638, 0.0
    %v2645 = vmul.f32 %v2633, 0.01
    %v2646 = vmul.f32 %v2634, 0.01
    %v2647 = vmul.f32 %v2635, 0.01
    %v2648 = vmul.f32 %v2636, 0.01
    %v2649 = vmul.f32 %v2637, 0.01
    %v2650 = vmul.f32 %v2638, 0.01
    %v2651 = vsel %vm2639, %v2633, %v2645
    %v2652 = vsel %vm2640, %v2634, %v2646
    %v2653 = vsel %vm2641, %v2635, %v2647
    %v2654 = vsel %vm2642, %v2636, %v2648
    %v2655 = vsel %vm2643, %v2637, %v2649
    %v2656 = vsel %vm2644, %v2638, %v2650
    %v2657 = vsel %vm2574, %v2651, 0.0
    %v2658 = vsel %vm2575, %v2652, 0.0
    %v2659 = vsel %vm2576, %v2653, 0.0
    %v2660 = vsel %vm2577, %v2654, 0.0
    %v2661 = vsel %vm2578, %v2655, 0.0
    %v2662 = vsel %vm2579, %v2656, 0.0
    %2663 = vst [vmem:[#allocation2 + $0x8] sm:$0xff] %v2657
    %2664 = vst [vmem:[#allocation2 + $0x10] sm:$0xff] %v2658
    %2665 = vst [vmem:[#allocation2 + $0x18] sm:$0xff] %v2659
    %2666 = vst [vmem:[#allocation2 + $0x20] sm:$0xff] %v2660
    %2667 = vst [vmem:[#allocation2 + $0x28] sm:$0xff] %v2661
    %2668 = vst [vmem:[#allocation2 + $0x30] sm:$0xff] %v2662
    %v2669 = vld [vmem:[%s5] sm:$0xff]
    %v2670 = vld [vmem:[#allocation2] sm:$0xff]
    %v2671 = vld [vmem:[#allocation2 + $0x8] sm:$0xff]
    %v2672 = vld [vmem:[#allocation2 + $0x10] sm:$0xff]
    %v2673 = vld [vmem:[#allocation2 + $0x18] sm:$0xff]
    %v2674 = vld [vmem:[#allocation2 + $0x20] sm:$0xff]
    %v2675 = vld [vmem:[#allocation2 + $0x28] sm:$0xff]
    %v2676 = vld [vmem:[#allocation2 + $0x30] sm:$0xff]
    %s2677 = scalar_lea.vmem %s5, 8
    %v2678 = vld [vmem:[%s2677] sm:$0xff]
    %2686 = vrot.lane.b32.xlu0 %v2670, 18
    %v2687 = vpop.permute.xlu0 %2686
    %2688 = vrot.lane.b32.xlu0 %v2671, 18
    %v2689 = vpop.permute.xlu0 %2688
    %2690 = vrot.lane.b32.xlu0 %v2672, 18
    %v2691 = vpop.permute.xlu0 %2690
    %2692 = vrot.lane.b32.xlu0 %v2673, 18
    %v2693 = vpop.permute.xlu0 %2692
    %2694 = vrot.lane.b32.xlu0 %v2674, 18
    %v2695 = vpop.permute.xlu0 %2694
    %2696 = vrot.lane.b32.xlu0 %v2675, 18
    %v2697 = vpop.permute.xlu0 %2696
    %2698 = vrot.lane.b32.xlu0 %v2676, 18
    %v2699 = vpop.permute.xlu0 %2698
    %v2700 = vsel %vm82, %v2687, %v2689
    %v2701 = vsel %vm82, %v2689, %v2691
    %v2702 = vsel %vm82, %v2691, %v2693
    %v2703 = vsel %vm82, %v2693, %v2695
    %v2704 = vsel %vm82, %v2695, %v2697
    %v2705 = vsel %vm82, %v2697, %v2699
    %v2713 = vsel %vm95, %v2678, 0
    %2715 = vmatprep.subr.mxu0 %v2701
    %2716 = vmatpush1.msra.mxu0 %v2700
    %2717 = vmatprep.subr.mxu0 0.0
    %2718 = vmatpush1.msra.mxu0 0.0
    %2719 = vmatprep.subr.mxu0 0.0
    %2720 = vmatpush1.msra.mxu0 0.0
    %2721 = vmatprep.subr.mxu0 0.0
    %2722 = vmatpush1.msra.mxu0 0.0
    %2723 = vmatprep.subr.mxu0 0.0
    %2724 = vmatpush1.msra.mxu0 0.0
    %2725 = vmatprep.subr.mxu0 0.0
    %2726 = vmatpush1.msra.mxu0 0.0
    %2727 = vmatprep.subr.mxu0 0.0
    %2728 = vmatpush1.msra.mxu0 0.0
    %2729 = vmatprep.subr.mxu0 0.0
    %2730 = vmatpush1.msra.mxu0 0.0
    %2731 = vmatprep.subr.mxu0 0.0
    %2732 = vmatpush1.msra.mxu0 0.0
    %2733 = vmatprep.subr.mxu0 0.0
    %2734 = vmatpush1.msra.mxu0 0.0
    %2735 = vmatprep.subr.mxu0 0.0
    %2736 = vmatpush1.msra.mxu0 0.0
    %2737 = vmatprep.subr.mxu0 0.0
    %2738 = vmatpush1.msra.mxu0 0.0
    %2739 = vmatprep.subr.mxu0 0.0
    %2740 = vmatpush1.msra.mxu0 0.0
    %2741 = vmatprep.subr.mxu0 0.0
    %2742 = vmatpush1.msra.mxu0 0.0
    %2743 = vmatprep.subr.mxu0 0.0
    %2744 = vmatpush1.msra.mxu0 0.0
    %2745 = vmatprep.subr.mxu0 0.0
    %2746 = vmatpush1.msra.mxu0 0.0
    %2747 = vmatprep.subr.mxu0 0.0
    %2748 = vmatpush1.msra.mxu0 0.0
    %2749 = vmatprep.subr.mxu0 0.0
    %2750 = vmatpush1.msra.mxu0 0.0
    %2751 = vmatprep.subr.mxu0 0.0
    %2752 = vmatpush1.msra.mxu0 0.0
    %2753 = vmatprep.subr.mxu0 0.0
    %2754 = vmatpush1.msra.mxu0 0.0
    %2755 = vmatprep.subr.mxu0 0.0
    %2756 = vmatpush1.msra.mxu0 0.0
    %2757 = vmatprep.subr.mxu0 0.0
    %2758 = vmatpush1.msra.mxu0 0.0
    %2759 = vmatprep.subr.mxu0 0.0
    %2760 = vmatpush1.msra.mxu0 0.0
    %2761 = vmatprep.subr.mxu0 0.0
    %2762 = vmatpush1.msra.mxu0 0.0
    %2763 = vmatprep.subr.mxu0 0.0
    %2764 = vmatpush1.msra.mxu0 0.0
    %2765 = vmatprep.subr.mxu0 0.0
    %2766 = vmatpush1.msra.mxu0 0.0
    %2767 = vmatprep.subr.mxu0 0.0
    %2768 = vmatpush1.msra.mxu0 0.0
    %2769 = vmatprep.subr.mxu0 0.0
    %2770 = vmatpush1.msra.mxu0 0.0
    %2771 = vmatprep.subr.mxu0 0.0
    %2772 = vmatpush1.msra.mxu0 0.0
    %2773 = vmatprep.subr.mxu0 0.0
    %2774 = vmatpush1.msra.mxu0 0.0
    %2775 = vmatprep.subr.mxu0 0.0
    %2776 = vmatpush1.msra.mxu0 0.0
    %2777 = vmatprep.subr.mxu0 0.0
    %2778 = vmatpush1.msra.mxu0 0.0
    %2779 = vmatprep.mubr.f32.mxu0 0.0
    %2780 = vmatmul.mubr.f32.gmra.mrb[0].mxu0 %v2713
    %v2781 = vpop.f32.mrb[0].mxu0
    %v2782 = vadd.f32 0.0, %v2781
    %v2783 = vpop.f32.mrb[0].mxu0
    %v2784 = vadd.f32 0.0, %v2783
    %2785 = vdwg.mxu0
    %2786 = vmatprep.subr.mxu0 %v2703
    %2787 = vmatpush1.msra.mxu0 %v2702
    %2788 = vmatprep.subr.mxu0 0.0
    %2789 = vmatpush1.msra.mxu0 0.0
    %2790 = vmatprep.subr.mxu0 0.0
    %2791 = vmatpush1.msra.mxu0 0.0
    %2792 = vmatprep.subr.mxu0 0.0
    %2793 = vmatpush1.msra.mxu0 0.0
    %2794 = vmatprep.subr.mxu0 0.0
    %2795 = vmatpush1.msra.mxu0 0.0
    %2796 = vmatprep.subr.mxu0 0.0
    %2797 = vmatpush1.msra.mxu0 0.0
    %2798 = vmatprep.subr.mxu0 0.0
    %2799 = vmatpush1.msra.mxu0 0.0
    %2800 = vmatprep.subr.mxu0 0.0
    %2801 = vmatpush1.msra.mxu0 0.0
    %2802 = vmatprep.subr.mxu0 0.0
    %2803 = vmatpush1.msra.mxu0 0.0
    %2804 = vmatprep.subr.mxu0 0.0
    %2805 = vmatpush1.msra.mxu0 0.0
    %2806 = vmatprep.subr.mxu0 0.0
    %2807 = vmatpush1.msra.mxu0 0.0
    %2808 = vmatprep.subr.mxu0 0.0
    %2809 = vmatpush1.msra.mxu0 0.0
    %2810 = vmatprep.subr.mxu0 0.0
    %2811 = vmatpush1.msra.mxu0 0.0
    %2812 = vmatprep.subr.mxu0 0.0
    %2813 = vmatpush1.msra.mxu0 0.0
    %2814 = vmatprep.subr.mxu0 0.0
    %2815 = vmatpush1.msra.mxu0 0.0
    %2816 = vmatprep.subr.mxu0 0.0
    %2817 = vmatpush1.msra.mxu0 0.0
    %2818 = vmatprep.subr.mxu0 0.0
    %2819 = vmatpush1.msra.mxu0 0.0
    %2820 = vmatprep.subr.mxu0 0.0
    %2821 = vmatpush1.msra.mxu0 0.0
    %2822 = vmatprep.subr.mxu0 0.0
    %2823 = vmatpush1.msra.mxu0 0.0
    %2824 = vmatprep.subr.mxu0 0.0
    %2825 = vmatpush1.msra.mxu0 0.0
    %2826 = vmatprep.subr.mxu0 0.0
    %2827 = vmatpush1.msra.mxu0 0.0
    %2828 = vmatprep.subr.mxu0 0.0
    %2829 = vmatpush1.msra.mxu0 0.0
    %2830 = vmatprep.subr.mxu0 0.0
    %2831 = vmatpush1.msra.mxu0 0.0
    %2832 = vmatprep.subr.mxu0 0.0
    %2833 = vmatpush1.msra.mxu0 0.0
    %2834 = vmatprep.subr.mxu0 0.0
    %2835 = vmatpush1.msra.mxu0 0.0
    %2836 = vmatprep.subr.mxu0 0.0
    %2837 = vmatpush1.msra.mxu0 0.0
    %2838 = vmatprep.subr.mxu0 0.0
    %2839 = vmatpush1.msra.mxu0 0.0
    %2840 = vmatprep.subr.mxu0 0.0
    %2841 = vmatpush1.msra.mxu0 0.0
    %2842 = vmatprep.subr.mxu0 0.0
    %2843 = vmatpush1.msra.mxu0 0.0
    %2844 = vmatprep.subr.mxu0 0.0
    %2845 = vmatpush1.msra.mxu0 0.0
    %2846 = vmatprep.subr.mxu0 0.0
    %2847 = vmatpush1.msra.mxu0 0.0
    %2848 = vmatprep.subr.mxu0 0.0
    %2849 = vmatpush1.msra.mxu0 0.0
    %2850 = vmatprep.mubr.f32.mxu0 0.0
    %2851 = vmatmul.mubr.f32.gmra.mrb[0].mxu0 %v2713
    %v2852 = vpop.f32.mrb[0].mxu0
    %v2853 = vadd.f32 0.0, %v2852
    %v2854 = vpop.f32.mrb[0].mxu0
    %v2855 = vadd.f32 0.0, %v2854
    %2856 = vdwg.mxu0
    %2857 = vmatprep.subr.mxu0 %v2705
    %2858 = vmatpush1.msra.mxu0 %v2704
    %2859 = vmatprep.subr.mxu0 0.0
    %2860 = vmatpush1.msra.mxu0 0.0
    %2861 = vmatprep.subr.mxu0 0.0
    %2862 = vmatpush1.msra.mxu0 0.0
    %2863 = vmatprep.subr.mxu0 0.0
    %2864 = vmatpush1.msra.mxu0 0.0
    %2865 = vmatprep.subr.mxu0 0.0
    %2866 = vmatpush1.msra.mxu0 0.0
    %2867 = vmatprep.subr.mxu0 0.0
    %2868 = vmatpush1.msra.mxu0 0.0
    %2869 = vmatprep.subr.mxu0 0.0
    %2870 = vmatpush1.msra.mxu0 0.0
    %2871 = vmatprep.subr.mxu0 0.0
    %2872 = vmatpush1.msra.mxu0 0.0
    %2873 = vmatprep.subr.mxu0 0.0
    %2874 = vmatpush1.msra.mxu0 0.0
    %2875 = vmatprep.subr.mxu0 0.0
    %2876 = vmatpush1.msra.mxu0 0.0
    %2877 = vmatprep.subr.mxu0 0.0
    %2878 = vmatpush1.msra.mxu0 0.0
    %2879 = vmatprep.subr.mxu0 0.0
    %2880 = vmatpush1.msra.mxu0 0.0
    %2881 = vmatprep.subr.mxu0 0.0
    %2882 = vmatpush1.msra.mxu0 0.0
    %2883 = vmatprep.subr.mxu0 0.0
    %2884 = vmatpush1.msra.mxu0 0.0
    %2885 = vmatprep.subr.mxu0 0.0
    %2886 = vmatpush1.msra.mxu0 0.0
    %2887 = vmatprep.subr.mxu0 0.0
    %2888 = vmatpush1.msra.mxu0 0.0
    %2889 = vmatprep.subr.mxu0 0.0
    %2890 = vmatpush1.msra.mxu0 0.0
    %2891 = vmatprep.subr.mxu0 0.0
    %2892 = vmatpush1.msra.mxu0 0.0
    %2893 = vmatprep.subr.mxu0 0.0
    %2894 = vmatpush1.msra.mxu0 0.0
    %2895 = vmatprep.subr.mxu0 0.0
    %2896 = vmatpush1.msra.mxu0 0.0
    %2897 = vmatprep.subr.mxu0 0.0
    %2898 = vmatpush1.msra.mxu0 0.0
    %2899 = vmatprep.subr.mxu0 0.0
    %2900 = vmatpush1.msra.mxu0 0.0
    %2901 = vmatprep.subr.mxu0 0.0
    %2902 = vmatpush1.msra.mxu0 0.0
    %2903 = vmatprep.subr.mxu0 0.0
    %2904 = vmatpush1.msra.mxu0 0.0
    %2905 = vmatprep.subr.mxu0 0.0
    %2906 = vmatpush1.msra.mxu0 0.0
    %2907 = vmatprep.subr.mxu0 0.0
    %2908 = vmatpush1.msra.mxu0 0.0
    %2909 = vmatprep.subr.mxu0 0.0
    %2910 = vmatpush1.msra.mxu0 0.0
    %2911 = vmatprep.subr.mxu0 0.0
    %2912 = vmatpush1.msra.mxu0 0.0
    %2913 = vmatprep.subr.mxu0 0.0
    %2914 = vmatpush1.msra.mxu0 0.0
    %2915 = vmatprep.subr.mxu0 0.0
    %2916 = vmatpush1.msra.mxu0 0.0
    %2917 = vmatprep.subr.mxu0 0.0
    %2918 = vmatpush1.msra.mxu0 0.0
    %2919 = vmatprep.subr.mxu0 0.0
    %2920 = vmatpush1.msra.mxu0 0.0
    %2921 = vmatprep.mubr.f32.mxu0 0.0
    %2922 = vmatmul.mubr.f32.gmra.mrb[0].mxu0 %v2713
    %v2923 = vpop.f32.mrb[0].mxu0
    %v2924 = vadd.f32 0.0, %v2923
    %v2925 = vpop.f32.mrb[0].mxu0
    %v2926 = vadd.f32 0.0, %v2925
    %2927 = vdwg.mxu0
    %2928 = vrot.lane.b32.xlu0 %v2670, 19
    %v2929 = vpop.permute.xlu0 %2928
    %2930 = vrot.lane.b32.xlu0 %v2671, 19
    %v2931 = vpop.permute.xlu0 %2930
    %2932 = vrot.lane.b32.xlu0 %v2672, 19
    %v2933 = vpop.permute.xlu0 %2932
    %2934 = vrot.lane.b32.xlu0 %v2673, 19
    %v2935 = vpop.permute.xlu0 %2934
    %2936 = vrot.lane.b32.xlu0 %v2674, 19
    %v2937 = vpop.permute.xlu0 %2936
    %2938 = vrot.lane.b32.xlu0 %v2675, 19
    %v2939 = vpop.permute.xlu0 %2938
    %2940 = vrot.lane.b32.xlu0 %v2676, 19
    %v2941 = vpop.permute.xlu0 %2940
    %v2942 = vsel %vm347, %v2929, %v2931
    %v2943 = vsel %vm347, %v2931, %v2933
    %v2944 = vsel %vm347, %v2933, %v2935
    %v2945 = vsel %vm347, %v2935, %v2937
    %v2946 = vsel %vm347, %v2937, %v2939
    %v2947 = vsel %vm347, %v2939, %v2941
    %v2955 = vsel %vm95, %v2669, 0
    %2957 = vmatprep.subr.mxu0 %v2943
    %2958 = vmatpush1.msra.mxu0 %v2942
    %2959 = vmatprep.subr.mxu0 0.0
    %2960 = vmatpush1.msra.mxu0 0.0
    %2961 = vmatprep.subr.mxu0 0.0
    %2962 = vmatpush1.msra.mxu0 0.0
    %2963 = vmatprep.subr.mxu0 0.0
    %2964 = vmatpush1.msra.mxu0 0.0
    %2965 = vmatprep.subr.mxu0 0.0
    %2966 = vmatpush1.msra.mxu0 0.0
    %2967 = vmatprep.subr.mxu0 0.0
    %2968 = vmatpush1.msra.mxu0 0.0
    %2969 = vmatprep.subr.mxu0 0.0
    %2970 = vmatpush1.msra.mxu0 0.0
    %2971 = vmatprep.subr.mxu0 0.0
    %2972 = vmatpush1.msra.mxu0 0.0
    %2973 = vmatprep.subr.mxu0 0.0
    %2974 = vmatpush1.msra.mxu0 0.0
    %2975 = vmatprep.subr.mxu0 0.0
    %2976 = vmatpush1.msra.mxu0 0.0
    %2977 = vmatprep.subr.mxu0 0.0
    %2978 = vmatpush1.msra.mxu0 0.0
    %2979 = vmatprep.subr.mxu0 0.0
    %2980 = vmatpush1.msra.mxu0 0.0
    %2981 = vmatprep.subr.mxu0 0.0
    %2982 = vmatpush1.msra.mxu0 0.0
    %2983 = vmatprep.subr.mxu0 0.0
    %2984 = vmatpush1.msra.mxu0 0.0
    %2985 = vmatprep.subr.mxu0 0.0
    %2986 = vmatpush1.msra.mxu0 0.0
    %2987 = vmatprep.subr.mxu0 0.0
    %2988 = vmatpush1.msra.mxu0 0.0
    %2989 = vmatprep.subr.mxu0 0.0
    %2990 = vmatpush1.msra.mxu0 0.0
    %2991 = vmatprep.subr.mxu0 0.0
    %2992 = vmatpush1.msra.mxu0 0.0
    %2993 = vmatprep.subr.mxu0 0.0
    %2994 = vmatpush1.msra.mxu0 0.0
    %2995 = vmatprep.subr.mxu0 0.0
    %2996 = vmatpush1.msra.mxu0 0.0
    %2997 = vmatprep.subr.mxu0 0.0
    %2998 = vmatpush1.msra.mxu0 0.0
    %2999 = vmatprep.subr.mxu0 0.0
    %3000 = vmatpush1.msra.mxu0 0.0
    %3001 = vmatprep.subr.mxu0 0.0
    %3002 = vmatpush1.msra.mxu0 0.0
    %3003 = vmatprep.subr.mxu0 0.0
    %3004 = vmatpush1.msra.mxu0 0.0
    %3005 = vmatprep.subr.mxu0 0.0
    %3006 = vmatpush1.msra.mxu0 0.0
    %3007 = vmatprep.subr.mxu0 0.0
    %3008 = vmatpush1.msra.mxu0 0.0
    %3009 = vmatprep.subr.mxu0 0.0
    %3010 = vmatpush1.msra.mxu0 0.0
    %3011 = vmatprep.subr.mxu0 0.0
    %3012 = vmatpush1.msra.mxu0 0.0
    %3013 = vmatprep.subr.mxu0 0.0
    %3014 = vmatpush1.msra.mxu0 0.0
    %3015 = vmatprep.subr.mxu0 0.0
    %3016 = vmatpush1.msra.mxu0 0.0
    %3017 = vmatprep.subr.mxu0 0.0
    %3018 = vmatpush1.msra.mxu0 0.0
    %3019 = vmatprep.subr.mxu0 0.0
    %3020 = vmatpush1.msra.mxu0 0.0
    %3021 = vmatprep.mubr.f32.mxu0 0.0
    %3022 = vmatmul.mubr.f32.gmra.mrb[0].mxu0 %v2955
    %v3023 = vpop.f32.mrb[0].mxu0
    %v3024 = vadd.f32 %v2782, %v3023
    %v3025 = vpop.f32.mrb[0].mxu0
    %v3026 = vadd.f32 %v2784, %v3025
    %3027 = vdwg.mxu0
    %3028 = vmatprep.subr.mxu0 %v2945
    %3029 = vmatpush1.msra.mxu0 %v2944
    %3030 = vmatprep.subr.mxu0 0.0
    %3031 = vmatpush1.msra.mxu0 0.0
    %3032 = vmatprep.subr.mxu0 0.0
    %3033 = vmatpush1.msra.mxu0 0.0
    %3034 = vmatprep.subr.mxu0 0.0
    %3035 = vmatpush1.msra.mxu0 0.0
    %3036 = vmatprep.subr.mxu0 0.0
    %3037 = vmatpush1.msra.mxu0 0.0
    %3038 = vmatprep.subr.mxu0 0.0
    %3039 = vmatpush1.msra.mxu0 0.0
    %3040 = vmatprep.subr.mxu0 0.0
    %3041 = vmatpush1.msra.mxu0 0.0
    %3042 = vmatprep.subr.mxu0 0.0
    %3043 = vmatpush1.msra.mxu0 0.0
    %3044 = vmatprep.subr.mxu0 0.0
    %3045 = vmatpush1.msra.mxu0 0.0
    %3046 = vmatprep.subr.mxu0 0.0
    %3047 = vmatpush1.msra.mxu0 0.0
    %3048 = vmatprep.subr.mxu0 0.0
    %3049 = vmatpush1.msra.mxu0 0.0
    %3050 = vmatprep.subr.mxu0 0.0
    %3051 = vmatpush1.msra.mxu0 0.0
    %3052 = vmatprep.subr.mxu0 0.0
    %3053 = vmatpush1.msra.mxu0 0.0
    %3054 = vmatprep.subr.mxu0 0.0
    %3055 = vmatpush1.msra.mxu0 0.0
    %3056 = vmatprep.subr.mxu0 0.0
    %3057 = vmatpush1.msra.mxu0 0.0
    %3058 = vmatprep.subr.mxu0 0.0
    %3059 = vmatpush1.msra.mxu0 0.0
    %3060 = vmatprep.subr.mxu0 0.0
    %3061 = vmatpush1.msra.mxu0 0.0
    %3062 = vmatprep.subr.mxu0 0.0
    %3063 = vmatpush1.msra.mxu0 0.0
    %3064 = vmatprep.subr.mxu0 0.0
    %3065 = vmatpush1.msra.mxu0 0.0
    %3066 = vmatprep.subr.mxu0 0.0
    %3067 = vmatpush1.msra.mxu0 0.0
    %3068 = vmatprep.subr.mxu0 0.0
    %3069 = vmatpush1.msra.mxu0 0.0
    %3070 = vmatprep.subr.mxu0 0.0
    %3071 = vmatpush1.msra.mxu0 0.0
    %3072 = vmatprep.subr.mxu0 0.0
    %3073 = vmatpush1.msra.mxu0 0.0
    %3074 = vmatprep.subr.mxu0 0.0
    %3075 = vmatpush1.msra.mxu0 0.0
    %3076 = vmatprep.subr.mxu0 0.0
    %3077 = vmatpush1.msra.mxu0 0.0
    %3078 = vmatprep.subr.mxu0 0.0
    %3079 = vmatpush1.msra.mxu0 0.0
    %3080 = vmatprep.subr.mxu0 0.0
    %3081 = vmatpush1.msra.mxu0 0.0
    %3082 = vmatprep.subr.mxu0 0.0
    %3083 = vmatpush1.msra.mxu0 0.0
    %3084 = vmatprep.subr.mxu0 0.0
    %3085 = vmatpush1.msra.mxu0 0.0
    %3086 = vmatprep.subr.mxu0 0.0
    %3087 = vmatpush1.msra.mxu0 0.0
    %3088 = vmatprep.subr.mxu0 0.0
    %3089 = vmatpush1.msra.mxu0 0.0
    %3090 = vmatprep.subr.mxu0 0.0
    %3091 = vmatpush1.msra.mxu0 0.0
    %3092 = vmatprep.mubr.f32.mxu0 0.0
    %3093 = vmatmul.mubr.f32.gmra.mrb[0].mxu0 %v2955
    %v3094 = vpop.f32.mrb[0].mxu0
    %v3095 = vadd.f32 %v2853, %v3094
    %v3096 = vpop.f32.mrb[0].mxu0
    %v3097 = vadd.f32 %v2855, %v3096
    %3098 = vdwg.mxu0
    %3099 = vmatprep.subr.mxu0 %v2947
    %3100 = vmatpush1.msra.mxu0 %v2946
    %3101 = vmatprep.subr.mxu0 0.0
    %3102 = vmatpush1.msra.mxu0 0.0
    %3103 = vmatprep.subr.mxu0 0.0
    %3104 = vmatpush1.msra.mxu0 0.0
    %3105 = vmatprep.subr.mxu0 0.0
    %3106 = vmatpush1.msra.mxu0 0.0
    %3107 = vmatprep.subr.mxu0 0.0
    %3108 = vmatpush1.msra.mxu0 0.0
    %3109 = vmatprep.subr.mxu0 0.0
    %3110 = vmatpush1.msra.mxu0 0.0
    %3111 = vmatprep.subr.mxu0 0.0
    %3112 = vmatpush1.msra.mxu0 0.0
    %3113 = vmatprep.subr.mxu0 0.0
    %3114 = vmatpush1.msra.mxu0 0.0
    %3115 = vmatprep.subr.mxu0 0.0
    %3116 = vmatpush1.msra.mxu0 0.0
    %3117 = vmatprep.subr.mxu0 0.0
    %3118 = vmatpush1.msra.mxu0 0.0
    %3119 = vmatprep.subr.mxu0 0.0
    %3120 = vmatpush1.msra.mxu0 0.0
    %3121 = vmatprep.subr.mxu0 0.0
    %3122 = vmatpush1.msra.mxu0 0.0
    %3123 = vmatprep.subr.mxu0 0.0
    %3124 = vmatpush1.msra.mxu0 0.0
    %3125 = vmatprep.subr.mxu0 0.0
    %3126 = vmatpush1.msra.mxu0 0.0
    %3127 = vmatprep.subr.mxu0 0.0
    %3128 = vmatpush1.msra.mxu0 0.0
    %3129 = vmatprep.subr.mxu0 0.0
    %3130 = vmatpush1.msra.mxu0 0.0
    %3131 = vmatprep.subr.mxu0 0.0
    %3132 = vmatpush1.msra.mxu0 0.0
    %3133 = vmatprep.subr.mxu0 0.0
    %3134 = vmatpush1.msra.mxu0 0.0
    %3135 = vmatprep.subr.mxu0 0.0
    %3136 = vmatpush1.msra.mxu0 0.0
    %3137 = vmatprep.subr.mxu0 0.0
    %3138 = vmatpush1.msra.mxu0 0.0
    %3139 = vmatprep.subr.mxu0 0.0
    %3140 = vmatpush1.msra.mxu0 0.0
    %3141 = vmatprep.subr.mxu0 0.0
    %3142 = vmatpush1.msra.mxu0 0.0
    %3143 = vmatprep.subr.mxu0 0.0
    %3144 = vmatpush1.msra.mxu0 0.0
    %3145 = vmatprep.subr.mxu0 0.0
    %3146 = vmatpush1.msra.mxu0 0.0
    %3147 = vmatprep.subr.mxu0 0.0
    %3148 = vmatpush1.msra.mxu0 0.0
    %3149 = vmatprep.subr.mxu0 0.0
    %3150 = vmatpush1.msra.mxu0 0.0
    %3151 = vmatprep.subr.mxu0 0.0
    %3152 = vmatpush1.msra.mxu0 0.0
    %3153 = vmatprep.subr.mxu0 0.0
    %3154 = vmatpush1.msra.mxu0 0.0
    %3155 = vmatprep.subr.mxu0 0.0
    %3156 = vmatpush1.msra.mxu0 0.0
    %3157 = vmatprep.subr.mxu0 0.0
    %3158 = vmatpush1.msra.mxu0 0.0
    %3159 = vmatprep.subr.mxu0 0.0
    %3160 = vmatpush1.msra.mxu0 0.0
    %3161 = vmatprep.subr.mxu0 0.0
    %3162 = vmatpush1.msra.mxu0 0.0
    %3163 = vmatprep.mubr.f32.mxu0 0.0
    %3164 = vmatmul.mubr.f32.gmra.mrb[0].mxu0 %v2955
    %v3165 = vpop.f32.mrb[0].mxu0
    %v3166 = vadd.f32 %v2924, %v3165
    %v3167 = vpop.f32.mrb[0].mxu0
    %v3168 = vadd.f32 %v2926, %v3167
    %3169 = vdwg.mxu0
    %s3170 = scalar_lea.vmem %s5, 16
    %v3171 = vld [vmem:[%s3170] sm:$0xff]
    %3172 = vrot.lane.b32.xlu0 %v2670, 17
    %v3173 = vpop.permute.xlu0 %3172
    %3174 = vrot.lane.b32.xlu0 %v2671, 17
    %v3175 = vpop.permute.xlu0 %3174
    %3176 = vrot.lane.b32.xlu0 %v2672, 17
    %v3177 = vpop.permute.xlu0 %3176
    %3178 = vrot.lane.b32.xlu0 %v2673, 17
    %v3179 = vpop.permute.xlu0 %3178
    %3180 = vrot.lane.b32.xlu0 %v2674, 17
    %v3181 = vpop.permute.xlu0 %3180
    %3182 = vrot.lane.b32.xlu0 %v2675, 17
    %v3183 = vpop.permute.xlu0 %3182
    %3184 = vrot.lane.b32.xlu0 %v2676, 17
    %v3185 = vpop.permute.xlu0 %3184
    %v3186 = vsel %vm614, %v3173, %v3175
    %v3187 = vsel %vm614, %v3175, %v3177
    %v3188 = vsel %vm614, %v3177, %v3179
    %v3189 = vsel %vm614, %v3179, %v3181
    %v3190 = vsel %vm614, %v3181, %v3183
    %v3191 = vsel %vm614, %v3183, %v3185
    %v3199 = vsel %vm95, %v3171, 0
    %3201 = vmatprep.subr.mxu0 %v3187
    %3202 = vmatpush1.msra.mxu0 %v3186
    %3203 = vmatprep.subr.mxu0 0.0
    %3204 = vmatpush1.msra.mxu0 0.0
    %3205 = vmatprep.subr.mxu0 0.0
    %3206 = vmatpush1.msra.mxu0 0.0
    %3207 = vmatprep.subr.mxu0 0.0
    %3208 = vmatpush1.msra.mxu0 0.0
    %3209 = vmatprep.subr.mxu0 0.0
    %3210 = vmatpush1.msra.mxu0 0.0
    %3211 = vmatprep.subr.mxu0 0.0
    %3212 = vmatpush1.msra.mxu0 0.0
    %3213 = vmatprep.subr.mxu0 0.0
    %3214 = vmatpush1.msra.mxu0 0.0
    %3215 = vmatprep.subr.mxu0 0.0
    %3216 = vmatpush1.msra.mxu0 0.0
    %3217 = vmatprep.subr.mxu0 0.0
    %3218 = vmatpush1.msra.mxu0 0.0
    %3219 = vmatprep.subr.mxu0 0.0
    %3220 = vmatpush1.msra.mxu0 0.0
    %3221 = vmatprep.subr.mxu0 0.0
    %3222 = vmatpush1.msra.mxu0 0.0
    %3223 = vmatprep.subr.mxu0 0.0
    %3224 = vmatpush1.msra.mxu0 0.0
    %3225 = vmatprep.subr.mxu0 0.0
    %3226 = vmatpush1.msra.mxu0 0.0
    %3227 = vmatprep.subr.mxu0 0.0
    %3228 = vmatpush1.msra.mxu0 0.0
    %3229 = vmatprep.subr.mxu0 0.0
    %3230 = vmatpush1.msra.mxu0 0.0
    %3231 = vmatprep.subr.mxu0 0.0
    %3232 = vmatpush1.msra.mxu0 0.0
    %3233 = vmatprep.subr.mxu0 0.0
    %3234 = vmatpush1.msra.mxu0 0.0
    %3235 = vmatprep.subr.mxu0 0.0
    %3236 = vmatpush1.msra.mxu0 0.0
    %3237 = vmatprep.subr.mxu0 0.0
    %3238 = vmatpush1.msra.mxu0 0.0
    %3239 = vmatprep.subr.mxu0 0.0
    %3240 = vmatpush1.msra.mxu0 0.0
    %3241 = vmatprep.subr.mxu0 0.0
    %3242 = vmatpush1.msra.mxu0 0.0
    %3243 = vmatprep.subr.mxu0 0.0
    %3244 = vmatpush1.msra.mxu0 0.0
    %3245 = vmatprep.subr.mxu0 0.0
    %3246 = vmatpush1.msra.mxu0 0.0
    %3247 = vmatprep.subr.mxu0 0.0
    %3248 = vmatpush1.msra.mxu0 0.0
    %3249 = vmatprep.subr.mxu0 0.0
    %3250 = vmatpush1.msra.mxu0 0.0
    %3251 = vmatprep.subr.mxu0 0.0
    %3252 = vmatpush1.msra.mxu0 0.0
    %3253 = vmatprep.subr.mxu0 0.0
    %3254 = vmatpush1.msra.mxu0 0.0
    %3255 = vmatprep.subr.mxu0 0.0
    %3256 = vmatpush1.msra.mxu0 0.0
    %3257 = vmatprep.subr.mxu0 0.0
    %3258 = vmatpush1.msra.mxu0 0.0
    %3259 = vmatprep.subr.mxu0 0.0
    %3260 = vmatpush1.msra.mxu0 0.0
    %3261 = vmatprep.subr.mxu0 0.0
    %3262 = vmatpush1.msra.mxu0 0.0
    %3263 = vmatprep.subr.mxu0 0.0
    %3264 = vmatpush1.msra.mxu0 0.0
    %3265 = vmatprep.mubr.f32.mxu0 0.0
    %3266 = vmatmul.mubr.f32.gmra.mrb[0].mxu0 %v3199
    %v3267 = vpop.f32.mrb[0].mxu0
    %v3268 = vadd.f32 0.0, %v3267
    %v3269 = vpop.f32.mrb[0].mxu0
    %v3270 = vadd.f32 0.0, %v3269
    %3271 = vdwg.mxu0
    %3272 = vmatprep.subr.mxu0 %v3189
    %3273 = vmatpush1.msra.mxu0 %v3188
    %3274 = vmatprep.subr.mxu0 0.0
    %3275 = vmatpush1.msra.mxu0 0.0
    %3276 = vmatprep.subr.mxu0 0.0
    %3277 = vmatpush1.msra.mxu0 0.0
    %3278 = vmatprep.subr.mxu0 0.0
    %3279 = vmatpush1.msra.mxu0 0.0
    %3280 = vmatprep.subr.mxu0 0.0
    %3281 = vmatpush1.msra.mxu0 0.0
    %3282 = vmatprep.subr.mxu0 0.0
    %3283 = vmatpush1.msra.mxu0 0.0
    %3284 = vmatprep.subr.mxu0 0.0
    %3285 = vmatpush1.msra.mxu0 0.0
    %3286 = vmatprep.subr.mxu0 0.0
    %3287 = vmatpush1.msra.mxu0 0.0
    %3288 = vmatprep.subr.mxu0 0.0
    %3289 = vmatpush1.msra.mxu0 0.0
    %3290 = vmatprep.subr.mxu0 0.0
    %3291 = vmatpush1.msra.mxu0 0.0
    %3292 = vmatprep.subr.mxu0 0.0
    %3293 = vmatpush1.msra.mxu0 0.0
    %3294 = vmatprep.subr.mxu0 0.0
    %3295 = vmatpush1.msra.mxu0 0.0
    %3296 = vmatprep.subr.mxu0 0.0
    %3297 = vmatpush1.msra.mxu0 0.0
    %3298 = vmatprep.subr.mxu0 0.0
    %3299 = vmatpush1.msra.mxu0 0.0
    %3300 = vmatprep.subr.mxu0 0.0
    %3301 = vmatpush1.msra.mxu0 0.0
    %3302 = vmatprep.subr.mxu0 0.0
    %3303 = vmatpush1.msra.mxu0 0.0
    %3304 = vmatprep.subr.mxu0 0.0
    %3305 = vmatpush1.msra.mxu0 0.0
    %3306 = vmatprep.subr.mxu0 0.0
    %3307 = vmatpush1.msra.mxu0 0.0
    %3308 = vmatprep.subr.mxu0 0.0
    %3309 = vmatpush1.msra.mxu0 0.0
    %3310 = vmatprep.subr.mxu0 0.0
    %3311 = vmatpush1.msra.mxu0 0.0
    %3312 = vmatprep.subr.mxu0 0.0
    %3313 = vmatpush1.msra.mxu0 0.0
    %3314 = vmatprep.subr.mxu0 0.0
    %3315 = vmatpush1.msra.mxu0 0.0
    %3316 = vmatprep.subr.mxu0 0.0
    %3317 = vmatpush1.msra.mxu0 0.0
    %3318 = vmatprep.subr.mxu0 0.0
    %3319 = vmatpush1.msra.mxu0 0.0
    %3320 = vmatprep.subr.mxu0 0.0
    %3321 = vmatpush1.msra.mxu0 0.0
    %3322 = vmatprep.subr.mxu0 0.0
    %3323 = vmatpush1.msra.mxu0 0.0
    %3324 = vmatprep.subr.mxu0 0.0
    %3325 = vmatpush1.msra.mxu0 0.0
    %3326 = vmatprep.subr.mxu0 0.0
    %3327 = vmatpush1.msra.mxu0 0.0
    %3328 = vmatprep.subr.mxu0 0.0
    %3329 = vmatpush1.msra.mxu0 0.0
    %3330 = vmatprep.subr.mxu0 0.0
    %3331 = vmatpush1.msra.mxu0 0.0
    %3332 = vmatprep.subr.mxu0 0.0
    %3333 = vmatpush1.msra.mxu0 0.0
    %3334 = vmatprep.subr.mxu0 0.0
    %3335 = vmatpush1.msra.mxu0 0.0
    %3336 = vmatprep.mubr.f32.mxu0 0.0
    %3337 = vmatmul.mubr.f32.gmra.mrb[0].mxu0 %v3199
    %v3338 = vpop.f32.mrb[0].mxu0
    %v3339 = vadd.f32 0.0, %v3338
    %v3340 = vpop.f32.mrb[0].mxu0
    %v3341 = vadd.f32 0.0, %v3340
    %3342 = vdwg.mxu0
    %3343 = vmatprep.subr.mxu0 %v3191
    %3344 = vmatpush1.msra.mxu0 %v3190
    %3345 = vmatprep.subr.mxu0 0.0
    %3346 = vmatpush1.msra.mxu0 0.0
    %3347 = vmatprep.subr.mxu0 0.0
    %3348 = vmatpush1.msra.mxu0 0.0
    %3349 = vmatprep.subr.mxu0 0.0
    %3350 = vmatpush1.msra.mxu0 0.0
    %3351 = vmatprep.subr.mxu0 0.0
    %3352 = vmatpush1.msra.mxu0 0.0
    %3353 = vmatprep.subr.mxu0 0.0
    %3354 = vmatpush1.msra.mxu0 0.0
    %3355 = vmatprep.subr.mxu0 0.0
    %3356 = vmatpush1.msra.mxu0 0.0
    %3357 = vmatprep.subr.mxu0 0.0
    %3358 = vmatpush1.msra.mxu0 0.0
    %3359 = vmatprep.subr.mxu0 0.0
    %3360 = vmatpush1.msra.mxu0 0.0
    %3361 = vmatprep.subr.mxu0 0.0
    %3362 = vmatpush1.msra.mxu0 0.0
    %3363 = vmatprep.subr.mxu0 0.0
    %3364 = vmatpush1.msra.mxu0 0.0
    %3365 = vmatprep.subr.mxu0 0.0
    %3366 = vmatpush1.msra.mxu0 0.0
    %3367 = vmatprep.subr.mxu0 0.0
    %3368 = vmatpush1.msra.mxu0 0.0
    %3369 = vmatprep.subr.mxu0 0.0
    %3370 = vmatpush1.msra.mxu0 0.0
    %3371 = vmatprep.subr.mxu0 0.0
    %3372 = vmatpush1.msra.mxu0 0.0
    %3373 = vmatprep.subr.mxu0 0.0
    %3374 = vmatpush1.msra.mxu0 0.0
    %3375 = vmatprep.subr.mxu0 0.0
    %3376 = vmatpush1.msra.mxu0 0.0
    %3377 = vmatprep.subr.mxu0 0.0
    %3378 = vmatpush1.msra.mxu0 0.0
    %3379 = vmatprep.subr.mxu0 0.0
    %3380 = vmatpush1.msra.mxu0 0.0
    %3381 = vmatprep.subr.mxu0 0.0
    %3382 = vmatpush1.msra.mxu0 0.0
    %3383 = vmatprep.subr.mxu0 0.0
    %3384 = vmatpush1.msra.mxu0 0.0
    %3385 = vmatprep.subr.mxu0 0.0
    %3386 = vmatpush1.msra.mxu0 0.0
    %3387 = vmatprep.subr.mxu0 0.0
    %3388 = vmatpush1.msra.mxu0 0.0
    %3389 = vmatprep.subr.mxu0 0.0
    %3390 = vmatpush1.msra.mxu0 0.0
    %3391 = vmatprep.subr.mxu0 0.0
    %3392 = vmatpush1.msra.mxu0 0.0
    %3393 = vmatprep.subr.mxu0 0.0
    %3394 = vmatpush1.msra.mxu0 0.0
    %3395 = vmatprep.subr.mxu0 0.0
    %3396 = vmatpush1.msra.mxu0 0.0
    %3397 = vmatprep.subr.mxu0 0.0
    %3398 = vmatpush1.msra.mxu0 0.0
    %3399 = vmatprep.subr.mxu0 0.0
    %3400 = vmatpush1.msra.mxu0 0.0
    %3401 = vmatprep.subr.mxu0 0.0
    %3402 = vmatpush1.msra.mxu0 0.0
    %3403 = vmatprep.subr.mxu0 0.0
    %3404 = vmatpush1.msra.mxu0 0.0
    %3405 = vmatprep.subr.mxu0 0.0
    %3406 = vmatpush1.msra.mxu0 0.0
    %3407 = vmatprep.mubr.f32.mxu0 0.0
    %3408 = vmatmul.mubr.f32.gmra.mrb[0].mxu0 %v3199
    %v3409 = vpop.f32.mrb[0].mxu0
    %v3410 = vadd.f32 0.0, %v3409
    %v3411 = vpop.f32.mrb[0].mxu0
    %v3412 = vadd.f32 0.0, %v3411
    %3413 = vdwg.mxu0
    %v3414 = vadd.f32 %v3024, %v3268
    %v3415 = vadd.f32 %v3026, %v3270
    %v3416 = vadd.f32 %v3095, %v3339
    %v3417 = vadd.f32 %v3097, %v3341
    %v3418 = vadd.f32 %v3166, %v3410
    %v3419 = vadd.f32 %v3168, %v3412
    %s3420 = scalar_lea.vmem %s5, 24
    %v3421 = vld [vmem:[%s3420] sm:$0xff]
    %3422 = vrot.lane.b32.xlu0 %v2670, 1
    %v3423 = vpop.permute.xlu0 %3422
    %3424 = vrot.lane.b32.xlu0 %v2671, 1
    %v3425 = vpop.permute.xlu0 %3424
    %3426 = vrot.lane.b32.xlu0 %v2672, 1
    %v3427 = vpop.permute.xlu0 %3426
    %3428 = vrot.lane.b32.xlu0 %v2673, 1
    %v3429 = vpop.permute.xlu0 %3428
    %3430 = vrot.lane.b32.xlu0 %v2674, 1
    %v3431 = vpop.permute.xlu0 %3430
    %3432 = vrot.lane.b32.xlu0 %v2675, 1
    %v3433 = vpop.permute.xlu0 %3432
    %3434 = vrot.lane.b32.xlu0 %v2676, 1
    %v3435 = vpop.permute.xlu0 %3434
    %v3436 = vsel %vm893, %v3423, %v3425
    %v3437 = vsel %vm893, %v3425, %v3427
    %v3438 = vsel %vm893, %v3427, %v3429
    %v3439 = vsel %vm893, %v3429, %v3431
    %v3440 = vsel %vm893, %v3431, %v3433
    %v3441 = vsel %vm893, %v3433, %v3435
    %v3449 = vsel %vm95, %v3421, 0
    %3451 = vmatprep.subr.mxu0 %v3437
    %3452 = vmatpush1.msra.mxu0 %v3436
    %3453 = vmatprep.subr.mxu0 0.0
    %3454 = vmatpush1.msra.mxu0 0.0
    %3455 = vmatprep.subr.mxu0 0.0
    %3456 = vmatpush1.msra.mxu0 0.0
    %3457 = vmatprep.subr.mxu0 0.0
    %3458 = vmatpush1.msra.mxu0 0.0
    %3459 = vmatprep.subr.mxu0 0.0
    %3460 = vmatpush1.msra.mxu0 0.0
    %3461 = vmatprep.subr.mxu0 0.0
    %3462 = vmatpush1.msra.mxu0 0.0
    %3463 = vmatprep.subr.mxu0 0.0
    %3464 = vmatpush1.msra.mxu0 0.0
    %3465 = vmatprep.subr.mxu0 0.0
    %3466 = vmatpush1.msra.mxu0 0.0
    %3467 = vmatprep.subr.mxu0 0.0
    %3468 = vmatpush1.msra.mxu0 0.0
    %3469 = vmatprep.subr.mxu0 0.0
    %3470 = vmatpush1.msra.mxu0 0.0
    %3471 = vmatprep.subr.mxu0 0.0
    %3472 = vmatpush1.msra.mxu0 0.0
    %3473 = vmatprep.subr.mxu0 0.0
    %3474 = vmatpush1.msra.mxu0 0.0
    %3475 = vmatprep.subr.mxu0 0.0
    %3476 = vmatpush1.msra.mxu0 0.0
    %3477 = vmatprep.subr.mxu0 0.0
    %3478 = vmatpush1.msra.mxu0 0.0
    %3479 = vmatprep.subr.mxu0 0.0
    %3480 = vmatpush1.msra.mxu0 0.0
    %3481 = vmatprep.subr.mxu0 0.0
    %3482 = vmatpush1.msra.mxu0 0.0
    %3483 = vmatprep.subr.mxu0 0.0
    %3484 = vmatpush1.msra.mxu0 0.0
    %3485 = vmatprep.subr.mxu0 0.0
    %3486 = vmatpush1.msra.mxu0 0.0
    %3487 = vmatprep.subr.mxu0 0.0
    %3488 = vmatpush1.msra.mxu0 0.0
    %3489 = vmatprep.subr.mxu0 0.0
    %3490 = vmatpush1.msra.mxu0 0.0
    %3491 = vmatprep.subr.mxu0 0.0
    %3492 = vmatpush1.msra.mxu0 0.0
    %3493 = vmatprep.subr.mxu0 0.0
    %3494 = vmatpush1.msra.mxu0 0.0
    %3495 = vmatprep.subr.mxu0 0.0
    %3496 = vmatpush1.msra.mxu0 0.0
    %3497 = vmatprep.subr.mxu0 0.0
    %3498 = vmatpush1.msra.mxu0 0.0
    %3499 = vmatprep.subr.mxu0 0.0
    %3500 = vmatpush1.msra.mxu0 0.0
    %3501 = vmatprep.subr.mxu0 0.0
    %3502 = vmatpush1.msra.mxu0 0.0
    %3503 = vmatprep.subr.mxu0 0.0
    %3504 = vmatpush1.msra.mxu0 0.0
    %3505 = vmatprep.subr.mxu0 0.0
    %3506 = vmatpush1.msra.mxu0 0.0
    %3507 = vmatprep.subr.mxu0 0.0
    %3508 = vmatpush1.msra.mxu0 0.0
    %3509 = vmatprep.subr.mxu0 0.0
    %3510 = vmatpush1.msra.mxu0 0.0
    %3511 = vmatprep.subr.mxu0 0.0
    %3512 = vmatpush1.msra.mxu0 0.0
    %3513 = vmatprep.subr.mxu0 0.0
    %3514 = vmatpush1.msra.mxu0 0.0
    %3515 = vmatprep.mubr.f32.mxu0 0.0
    %3516 = vmatmul.mubr.f32.gmra.mrb[0].mxu0 %v3449
    %v3517 = vpop.f32.mrb[0].mxu0
    %v3518 = vadd.f32 0.0, %v3517
    %v3519 = vpop.f32.mrb[0].mxu0
    %v3520 = vadd.f32 0.0, %v3519
    %3521 = vdwg.mxu0
    %3522 = vmatprep.subr.mxu0 %v3439
    %3523 = vmatpush1.msra.mxu0 %v3438
    %3524 = vmatprep.subr.mxu0 0.0
    %3525 = vmatpush1.msra.mxu0 0.0
    %3526 = vmatprep.subr.mxu0 0.0
    %3527 = vmatpush1.msra.mxu0 0.0
    %3528 = vmatprep.subr.mxu0 0.0
    %3529 = vmatpush1.msra.mxu0 0.0
    %3530 = vmatprep.subr.mxu0 0.0
    %3531 = vmatpush1.msra.mxu0 0.0
    %3532 = vmatprep.subr.mxu0 0.0
    %3533 = vmatpush1.msra.mxu0 0.0
    %3534 = vmatprep.subr.mxu0 0.0
    %3535 = vmatpush1.msra.mxu0 0.0
    %3536 = vmatprep.subr.mxu0 0.0
    %3537 = vmatpush1.msra.mxu0 0.0
    %3538 = vmatprep.subr.mxu0 0.0
    %3539 = vmatpush1.msra.mxu0 0.0
    %3540 = vmatprep.subr.mxu0 0.0
    %3541 = vmatpush1.msra.mxu0 0.0
    %3542 = vmatprep.subr.mxu0 0.0
    %3543 = vmatpush1.msra.mxu0 0.0
    %3544 = vmatprep.subr.mxu0 0.0
    %3545 = vmatpush1.msra.mxu0 0.0
    %3546 = vmatprep.subr.mxu0 0.0
    %3547 = vmatpush1.msra.mxu0 0.0
    %3548 = vmatprep.subr.mxu0 0.0
    %3549 = vmatpush1.msra.mxu0 0.0
    %3550 = vmatprep.subr.mxu0 0.0
    %3551 = vmatpush1.msra.mxu0 0.0
    %3552 = vmatprep.subr.mxu0 0.0
    %3553 = vmatpush1.msra.mxu0 0.0
    %3554 = vmatprep.subr.mxu0 0.0
    %3555 = vmatpush1.msra.mxu0 0.0
    %3556 = vmatprep.subr.mxu0 0.0
    %3557 = vmatpush1.msra.mxu0 0.0
    %3558 = vmatprep.subr.mxu0 0.0
    %3559 = vmatpush1.msra.mxu0 0.0
    %3560 = vmatprep.subr.mxu0 0.0
    %3561 = vmatpush1.msra.mxu0 0.0
    %3562 = vmatprep.subr.mxu0 0.0
    %3563 = vmatpush1.msra.mxu0 0.0
    %3564 = vmatprep.subr.mxu0 0.0
    %3565 = vmatpush1.msra.mxu0 0.0
    %3566 = vmatprep.subr.mxu0 0.0
    %3567 = vmatpush1.msra.mxu0 0.0
    %3568 = vmatprep.subr.mxu0 0.0
    %3569 = vmatpush1.msra.mxu0 0.0
    %3570 = vmatprep.subr.mxu0 0.0
    %3571 = vmatpush1.msra.mxu0 0.0
    %3572 = vmatprep.subr.mxu0 0.0
    %3573 = vmatpush1.msra.mxu0 0.0
    %3574 = vmatprep.subr.mxu0 0.0
    %3575 = vmatpush1.msra.mxu0 0.0
    %3576 = vmatprep.subr.mxu0 0.0
    %3577 = vmatpush1.msra.mxu0 0.0
    %3578 = vmatprep.subr.mxu0 0.0
    %3579 = vmatpush1.msra.mxu0 0.0
    %3580 = vmatprep.subr.mxu0 0.0
    %3581 = vmatpush1.msra.mxu0 0.0
    %3582 = vmatprep.subr.mxu0 0.0
    %3583 = vmatpush1.msra.mxu0 0.0
    %3584 = vmatprep.subr.mxu0 0.0
    %3585 = vmatpush1.msra.mxu0 0.0
    %3586 = vmatprep.mubr.f32.mxu0 0.0
    %3587 = vmatmul.mubr.f32.gmra.mrb[0].mxu0 %v3449
    %v3588 = vpop.f32.mrb[0].mxu0
    %v3589 = vadd.f32 0.0, %v3588
    %v3590 = vpop.f32.mrb[0].mxu0
    %v3591 = vadd.f32 0.0, %v3590
    %3592 = vdwg.mxu0
    %3593 = vmatprep.subr.mxu0 %v3441
    %3594 = vmatpush1.msra.mxu0 %v3440
    %3595 = vmatprep.subr.mxu0 0.0
    %3596 = vmatpush1.msra.mxu0 0.0
    %3597 = vmatprep.subr.mxu0 0.0
    %3598 = vmatpush1.msra.mxu0 0.0
    %3599 = vmatprep.subr.mxu0 0.0
    %3600 = vmatpush1.msra.mxu0 0.0
    %3601 = vmatprep.subr.mxu0 0.0
    %3602 = vmatpush1.msra.mxu0 0.0
    %3603 = vmatprep.subr.mxu0 0.0
    %3604 = vmatpush1.msra.mxu0 0.0
    %3605 = vmatprep.subr.mxu0 0.0
    %3606 = vmatpush1.msra.mxu0 0.0
    %3607 = vmatprep.subr.mxu0 0.0
    %3608 = vmatpush1.msra.mxu0 0.0
    %3609 = vmatprep.subr.mxu0 0.0
    %3610 = vmatpush1.msra.mxu0 0.0
    %3611 = vmatprep.subr.mxu0 0.0
    %3612 = vmatpush1.msra.mxu0 0.0
    %3613 = vmatprep.subr.mxu0 0.0
    %3614 = vmatpush1.msra.mxu0 0.0
    %3615 = vmatprep.subr.mxu0 0.0
    %3616 = vmatpush1.msra.mxu0 0.0
    %3617 = vmatprep.subr.mxu0 0.0
    %3618 = vmatpush1.msra.mxu0 0.0
    %3619 = vmatprep.subr.mxu0 0.0
    %3620 = vmatpush1.msra.mxu0 0.0
    %3621 = vmatprep.subr.mxu0 0.0
    %3622 = vmatpush1.msra.mxu0 0.0
    %3623 = vmatprep.subr.mxu0 0.0
    %3624 = vmatpush1.msra.mxu0 0.0
    %3625 = vmatprep.subr.mxu0 0.0
    %3626 = vmatpush1.msra.mxu0 0.0
    %3627 = vmatprep.subr.mxu0 0.0
    %3628 = vmatpush1.msra.mxu0 0.0
    %3629 = vmatprep.subr.mxu0 0.0
    %3630 = vmatpush1.msra.mxu0 0.0
    %3631 = vmatprep.subr.mxu0 0.0
    %3632 = vmatpush1.msra.mxu0 0.0
    %3633 = vmatprep.subr.mxu0 0.0
    %3634 = vmatpush1.msra.mxu0 0.0
    %3635 = vmatprep.subr.mxu0 0.0
    %3636 = vmatpush1.msra.mxu0 0.0
    %3637 = vmatprep.subr.mxu0 0.0
    %3638 = vmatpush1.msra.mxu0 0.0
    %3639 = vmatprep.subr.mxu0 0.0
    %3640 = vmatpush1.msra.mxu0 0.0
    %3641 = vmatprep.subr.mxu0 0.0
    %3642 = vmatpush1.msra.mxu0 0.0
    %3643 = vmatprep.subr.mxu0 0.0
    %3644 = vmatpush1.msra.mxu0 0.0
    %3645 = vmatprep.subr.mxu0 0.0
    %3646 = vmatpush1.msra.mxu0 0.0
    %3647 = vmatprep.subr.mxu0 0.0
    %3648 = vmatpush1.msra.mxu0 0.0
    %3649 = vmatprep.subr.mxu0 0.0
    %3650 = vmatpush1.msra.mxu0 0.0
    %3651 = vmatprep.subr.mxu0 0.0
    %3652 = vmatpush1.msra.mxu0 0.0
    %3653 = vmatprep.subr.mxu0 0.0
    %3654 = vmatpush1.msra.mxu0 0.0
    %3655 = vmatprep.subr.mxu0 0.0
    %3656 = vmatpush1.msra.mxu0 0.0
    %3657 = vmatprep.mubr.f32.mxu0 0.0
    %3658 = vmatmul.mubr.f32.gmra.mrb[0].mxu0 %v3449
    %v3659 = vpop.f32.mrb[0].mxu0
    %v3660 = vadd.f32 0.0, %v3659
    %v3661 = vpop.f32.mrb[0].mxu0
    %v3662 = vadd.f32 0.0, %v3661
    %3663 = vdwg.mxu0
    %v3664 = vadd.f32 %v3414, %v3518
    %v3665 = vadd.f32 %v3415, %v3520
    %v3666 = vadd.f32 %v3416, %v3589
    %v3667 = vadd.f32 %v3417, %v3591
    %v3668 = vadd.f32 %v3418, %v3660
    %v3669 = vadd.f32 %v3419, %v3662
    %s3670 = scalar_lea.vmem %s5, 32
    %v3671 = vld [vmem:[%s3670] sm:$0xff]
    %v3673 = vsel %vm95, %v3671, 0
    %3675 = vmatprep.subr.mxu0 %v2672
    %3676 = vmatpush1.msra.mxu0 %v2671
    %3677 = vmatprep.subr.mxu0 0.0
    %3678 = vmatpush1.msra.mxu0 0.0
    %3679 = vmatprep.subr.mxu0 0.0
    %3680 = vmatpush1.msra.mxu0 0.0
    %3681 = vmatprep.subr.mxu0 0.0
    %3682 = vmatpush1.msra.mxu0 0.0
    %3683 = vmatprep.subr.mxu0 0.0
    %3684 = vmatpush1.msra.mxu0 0.0
    %3685 = vmatprep.subr.mxu0 0.0
    %3686 = vmatpush1.msra.mxu0 0.0
    %3687 = vmatprep.subr.mxu0 0.0
    %3688 = vmatpush1.msra.mxu0 0.0
    %3689 = vmatprep.subr.mxu0 0.0
    %3690 = vmatpush1.msra.mxu0 0.0
    %3691 = vmatprep.subr.mxu0 0.0
    %3692 = vmatpush1.msra.mxu0 0.0
    %3693 = vmatprep.subr.mxu0 0.0
    %3694 = vmatpush1.msra.mxu0 0.0
    %3695 = vmatprep.subr.mxu0 0.0
    %3696 = vmatpush1.msra.mxu0 0.0
    %3697 = vmatprep.subr.mxu0 0.0
    %3698 = vmatpush1.msra.mxu0 0.0
    %3699 = vmatprep.subr.mxu0 0.0
    %3700 = vmatpush1.msra.mxu0 0.0
    %3701 = vmatprep.subr.mxu0 0.0
    %3702 = vmatpush1.msra.mxu0 0.0
    %3703 = vmatprep.subr.mxu0 0.0
    %3704 = vmatpush1.msra.mxu0 0.0
    %3705 = vmatprep.subr.mxu0 0.0
    %3706 = vmatpush1.msra.mxu0 0.0
    %3707 = vmatprep.subr.mxu0 0.0
    %3708 = vmatpush1.msra.mxu0 0.0
    %3709 = vmatprep.subr.mxu0 0.0
    %3710 = vmatpush1.msra.mxu0 0.0
    %3711 = vmatprep.subr.mxu0 0.0
    %3712 = vmatpush1.msra.mxu0 0.0
    %3713 = vmatprep.subr.mxu0 0.0
    %3714 = vmatpush1.msra.mxu0 0.0
    %3715 = vmatprep.subr.mxu0 0.0
    %3716 = vmatpush1.msra.mxu0 0.0
    %3717 = vmatprep.subr.mxu0 0.0
    %3718 = vmatpush1.msra.mxu0 0.0
    %3719 = vmatprep.subr.mxu0 0.0
    %3720 = vmatpush1.msra.mxu0 0.0
    %3721 = vmatprep.subr.mxu0 0.0
    %3722 = vmatpush1.msra.mxu0 0.0
    %3723 = vmatprep.subr.mxu0 0.0
    %3724 = vmatpush1.msra.mxu0 0.0
    %3725 = vmatprep.subr.mxu0 0.0
    %3726 = vmatpush1.msra.mxu0 0.0
    %3727 = vmatprep.subr.mxu0 0.0
    %3728 = vmatpush1.msra.mxu0 0.0
    %3729 = vmatprep.subr.mxu0 0.0
    %3730 = vmatpush1.msra.mxu0 0.0
    %3731 = vmatprep.subr.mxu0 0.0
    %3732 = vmatpush1.msra.mxu0 0.0
    %3733 = vmatprep.subr.mxu0 0.0
    %3734 = vmatpush1.msra.mxu0 0.0
    %3735 = vmatprep.subr.mxu0 0.0
    %3736 = vmatpush1.msra.mxu0 0.0
    %3737 = vmatprep.subr.mxu0 0.0
    %3738 = vmatpush1.msra.mxu0 0.0
    %3739 = vmatprep.mubr.f32.mxu0 0.0
    %3740 = vmatmul.mubr.f32.gmra.mrb[0].mxu0 %v3673
    %v3741 = vpop.f32.mrb[0].mxu0
    %v3742 = vadd.f32 0.0, %v3741
    %v3743 = vpop.f32.mrb[0].mxu0
    %v3744 = vadd.f32 0.0, %v3743
    %3745 = vdwg.mxu0
    %3746 = vmatprep.subr.mxu0 %v2674
    %3747 = vmatpush1.msra.mxu0 %v2673
    %3748 = vmatprep.subr.mxu0 0.0
    %3749 = vmatpush1.msra.mxu0 0.0
    %3750 = vmatprep.subr.mxu0 0.0
    %3751 = vmatpush1.msra.mxu0 0.0
    %3752 = vmatprep.subr.mxu0 0.0
    %3753 = vmatpush1.msra.mxu0 0.0
    %3754 = vmatprep.subr.mxu0 0.0
    %3755 = vmatpush1.msra.mxu0 0.0
    %3756 = vmatprep.subr.mxu0 0.0
    %3757 = vmatpush1.msra.mxu0 0.0
    %3758 = vmatprep.subr.mxu0 0.0
    %3759 = vmatpush1.msra.mxu0 0.0
    %3760 = vmatprep.subr.mxu0 0.0
    %3761 = vmatpush1.msra.mxu0 0.0
    %3762 = vmatprep.subr.mxu0 0.0
    %3763 = vmatpush1.msra.mxu0 0.0
    %3764 = vmatprep.subr.mxu0 0.0
    %3765 = vmatpush1.msra.mxu0 0.0
    %3766 = vmatprep.subr.mxu0 0.0
    %3767 = vmatpush1.msra.mxu0 0.0
    %3768 = vmatprep.subr.mxu0 0.0
    %3769 = vmatpush1.msra.mxu0 0.0
    %3770 = vmatprep.subr.mxu0 0.0
    %3771 = vmatpush1.msra.mxu0 0.0
    %3772 = vmatprep.subr.mxu0 0.0
    %3773 = vmatpush1.msra.mxu0 0.0
    %3774 = vmatprep.subr.mxu0 0.0
    %3775 = vmatpush1.msra.mxu0 0.0
    %3776 = vmatprep.subr.mxu0 0.0
    %3777 = vmatpush1.msra.mxu0 0.0
    %3778 = vmatprep.subr.mxu0 0.0
    %3779 = vmatpush1.msra.mxu0 0.0
    %3780 = vmatprep.subr.mxu0 0.0
    %3781 = vmatpush1.msra.mxu0 0.0
    %3782 = vmatprep.subr.mxu0 0.0
    %3783 = vmatpush1.msra.mxu0 0.0
    %3784 = vmatprep.subr.mxu0 0.0
    %3785 = vmatpush1.msra.mxu0 0.0
    %3786 = vmatprep.subr.mxu0 0.0
    %3787 = vmatpush1.msra.mxu0 0.0
    %3788 = vmatprep.subr.mxu0 0.0
    %3789 = vmatpush1.msra.mxu0 0.0
    %3790 = vmatprep.subr.mxu0 0.0
    %3791 = vmatpush1.msra.mxu0 0.0
    %3792 = vmatprep.subr.mxu0 0.0
    %3793 = vmatpush1.msra.mxu0 0.0
    %3794 = vmatprep.subr.mxu0 0.0
    %3795 = vmatpush1.msra.mxu0 0.0
    %3796 = vmatprep.subr.mxu0 0.0
    %3797 = vmatpush1.msra.mxu0 0.0
    %3798 = vmatprep.subr.mxu0 0.0
    %3799 = vmatpush1.msra.mxu0 0.0
    %3800 = vmatprep.subr.mxu0 0.0
    %3801 = vmatpush1.msra.mxu0 0.0
    %3802 = vmatprep.subr.mxu0 0.0
    %3803 = vmatpush1.msra.mxu0 0.0
    %3804 = vmatprep.subr.mxu0 0.0
    %3805 = vmatpush1.msra.mxu0 0.0
    %3806 = vmatprep.subr.mxu0 0.0
    %3807 = vmatpush1.msra.mxu0 0.0
    %3808 = vmatprep.subr.mxu0 0.0
    %3809 = vmatpush1.msra.mxu0 0.0
    %3810 = vmatprep.mubr.f32.mxu0 0.0
    %3811 = vmatmul.mubr.f32.gmra.mrb[0].mxu0 %v3673
    %v3812 = vpop.f32.mrb[0].mxu0
    %v3813 = vadd.f32 0.0, %v3812
    %v3814 = vpop.f32.mrb[0].mxu0
    %v3815 = vadd.f32 0.0, %v3814
    %3816 = vdwg.mxu0
    %3817 = vmatprep.subr.mxu0 %v2676
    %3818 = vmatpush1.msra.mxu0 %v2675
    %3819 = vmatprep.subr.mxu0 0.0
    %3820 = vmatpush1.msra.mxu0 0.0
    %3821 = vmatprep.subr.mxu0 0.0
    %3822 = vmatpush1.msra.mxu0 0.0
    %3823 = vmatprep.subr.mxu0 0.0
    %3824 = vmatpush1.msra.mxu0 0.0
    %3825 = vmatprep.subr.mxu0 0.0
    %3826 = vmatpush1.msra.mxu0 0.0
    %3827 = vmatprep.subr.mxu0 0.0
    %3828 = vmatpush1.msra.mxu0 0.0
    %3829 = vmatprep.subr.mxu0 0.0
    %3830 = vmatpush1.msra.mxu0 0.0
    %3831 = vmatprep.subr.mxu0 0.0
    %3832 = vmatpush1.msra.mxu0 0.0
    %3833 = vmatprep.subr.mxu0 0.0
    %3834 = vmatpush1.msra.mxu0 0.0
    %3835 = vmatprep.subr.mxu0 0.0
    %3836 = vmatpush1.msra.mxu0 0.0
    %3837 = vmatprep.subr.mxu0 0.0
    %3838 = vmatpush1.msra.mxu0 0.0
    %3839 = vmatprep.subr.mxu0 0.0
    %3840 = vmatpush1.msra.mxu0 0.0
    %3841 = vmatprep.subr.mxu0 0.0
    %3842 = vmatpush1.msra.mxu0 0.0
    %3843 = vmatprep.subr.mxu0 0.0
    %3844 = vmatpush1.msra.mxu0 0.0
    %3845 = vmatprep.subr.mxu0 0.0
    %3846 = vmatpush1.msra.mxu0 0.0
    %3847 = vmatprep.subr.mxu0 0.0
    %3848 = vmatpush1.msra.mxu0 0.0
    %3849 = vmatprep.subr.mxu0 0.0
    %3850 = vmatpush1.msra.mxu0 0.0
    %3851 = vmatprep.subr.mxu0 0.0
    %3852 = vmatpush1.msra.mxu0 0.0
    %3853 = vmatprep.subr.mxu0 0.0
    %3854 = vmatpush1.msra.mxu0 0.0
    %3855 = vmatprep.subr.mxu0 0.0
    %3856 = vmatpush1.msra.mxu0 0.0
    %3857 = vmatprep.subr.mxu0 0.0
    %3858 = vmatpush1.msra.mxu0 0.0
    %3859 = vmatprep.subr.mxu0 0.0
    %3860 = vmatpush1.msra.mxu0 0.0
    %3861 = vmatprep.subr.mxu0 0.0
    %3862 = vmatpush1.msra.mxu0 0.0
    %3863 = vmatprep.subr.mxu0 0.0
    %3864 = vmatpush1.msra.mxu0 0.0
    %3865 = vmatprep.subr.mxu0 0.0
    %3866 = vmatpush1.msra.mxu0 0.0
    %3867 = vmatprep.subr.mxu0 0.0
    %3868 = vmatpush1.msra.mxu0 0.0
    %3869 = vmatprep.subr.mxu0 0.0
    %3870 = vmatpush1.msra.mxu0 0.0
    %3871 = vmatprep.subr.mxu0 0.0
    %3872 = vmatpush1.msra.mxu0 0.0
    %3873 = vmatprep.subr.mxu0 0.0
    %3874 = vmatpush1.msra.mxu0 0.0
    %3875 = vmatprep.subr.mxu0 0.0
    %3876 = vmatpush1.msra.mxu0 0.0
    %3877 = vmatprep.subr.mxu0 0.0
    %3878 = vmatpush1.msra.mxu0 0.0
    %3879 = vmatprep.subr.mxu0 0.0
    %3880 = vmatpush1.msra.mxu0 0.0
    %3881 = vmatprep.mubr.f32.mxu0 0.0
    %3882 = vmatmul.mubr.f32.gmra.mrb[0].mxu0 %v3673
    %v3883 = vpop.f32.mrb[0].mxu0
    %v3884 = vadd.f32 0.0, %v3883
    %v3885 = vpop.f32.mrb[0].mxu0
    %v3886 = vadd.f32 0.0, %v3885
    %3887 = vdwg.mxu0
    %v3888 = vadd.f32 %v3664, %v3742
    %v3889 = vadd.f32 %v3665, %v3744
    %v3890 = vadd.f32 %v3666, %v3813
    %v3891 = vadd.f32 %v3667, %v3815
    %v3892 = vadd.f32 %v3668, %v3884
    %v3893 = vadd.f32 %v3669, %v3886
    %s3894 = scalar_lea.vmem %s5, 40
    %v3895 = vld [vmem:[%s3894] sm:$0xff]
    %v3896 = vld [vmem:[#allocation2 + $0x8] sm:$0xff]
    %v3897 = vld [vmem:[#allocation2 + $0x10] sm:$0xff]
    %v3898 = vld [vmem:[#allocation2 + $0x18] sm:$0xff]
    %v3899 = vld [vmem:[#allocation2 + $0x20] sm:$0xff]
    %v3900 = vld [vmem:[#allocation2 + $0x28] sm:$0xff]
    %v3901 = vld [vmem:[#allocation2 + $0x30] sm:$0xff]
    %v3902 = vld [vmem:[#allocation2 + $0x38] sm:$0xff]
    %3910 = vrot.lane.b32.xlu0 %v3896, 127
    %v3911 = vpop.permute.xlu0 %3910
    %3912 = vrot.lane.b32.xlu0 %v3897, 127
    %v3913 = vpop.permute.xlu0 %3912
    %3914 = vrot.lane.b32.xlu0 %v3898, 127
    %v3915 = vpop.permute.xlu0 %3914
    %3916 = vrot.lane.b32.xlu0 %v3899, 127
    %v3917 = vpop.permute.xlu0 %3916
    %3918 = vrot.lane.b32.xlu0 %v3900, 127
    %v3919 = vpop.permute.xlu0 %3918
    %3920 = vrot.lane.b32.xlu0 %v3901, 127
    %v3921 = vpop.permute.xlu0 %3920
    %3922 = vrot.lane.b32.xlu0 %v3902, 127
    %v3923 = vpop.permute.xlu0 %3922
    %v3924 = vsel %vm1438, %v3911, %v3913
    %v3925 = vsel %vm1438, %v3913, %v3915
    %v3926 = vsel %vm1438, %v3915, %v3917
    %v3927 = vsel %vm1438, %v3917, %v3919
    %v3928 = vsel %vm1438, %v3919, %v3921
    %v3929 = vsel %vm1438, %v3921, %v3923
    %v3937 = vsel %vm95, %v3895, 0
    %3939 = vmatprep.subr.mxu0 %v3925
    %3940 = vmatpush1.msra.mxu0 %v3924
    %3941 = vmatprep.subr.mxu0 0.0
    %3942 = vmatpush1.msra.mxu0 0.0
    %3943 = vmatprep.subr.mxu0 0.0
    %3944 = vmatpush1.msra.mxu0 0.0
    %3945 = vmatprep.subr.mxu0 0.0
    %3946 = vmatpush1.msra.mxu0 0.0
    %3947 = vmatprep.subr.mxu0 0.0
    %3948 = vmatpush1.msra.mxu0 0.0
    %3949 = vmatprep.subr.mxu0 0.0
    %3950 = vmatpush1.msra.mxu0 0.0
    %3951 = vmatprep.subr.mxu0 0.0
    %3952 = vmatpush1.msra.mxu0 0.0
    %3953 = vmatprep.subr.mxu0 0.0
    %3954 = vmatpush1.msra.mxu0 0.0
    %3955 = vmatprep.subr.mxu0 0.0
    %3956 = vmatpush1.msra.mxu0 0.0
    %3957 = vmatprep.subr.mxu0 0.0
    %3958 = vmatpush1.msra.mxu0 0.0
    %3959 = vmatprep.subr.mxu0 0.0
    %3960 = vmatpush1.msra.mxu0 0.0
    %3961 = vmatprep.subr.mxu0 0.0
    %3962 = vmatpush1.msra.mxu0 0.0
    %3963 = vmatprep.subr.mxu0 0.0
    %3964 = vmatpush1.msra.mxu0 0.0
    %3965 = vmatprep.subr.mxu0 0.0
    %3966 = vmatpush1.msra.mxu0 0.0
    %3967 = vmatprep.subr.mxu0 0.0
    %3968 = vmatpush1.msra.mxu0 0.0
    %3969 = vmatprep.subr.mxu0 0.0
    %3970 = vmatpush1.msra.mxu0 0.0
    %3971 = vmatprep.subr.mxu0 0.0
    %3972 = vmatpush1.msra.mxu0 0.0
    %3973 = vmatprep.subr.mxu0 0.0
    %3974 = vmatpush1.msra.mxu0 0.0
    %3975 = vmatprep.subr.mxu0 0.0
    %3976 = vmatpush1.msra.mxu0 0.0
    %3977 = vmatprep.subr.mxu0 0.0
    %3978 = vmatpush1.msra.mxu0 0.0
    %3979 = vmatprep.subr.mxu0 0.0
    %3980 = vmatpush1.msra.mxu0 0.0
    %3981 = vmatprep.subr.mxu0 0.0
    %3982 = vmatpush1.msra.mxu0 0.0
    %3983 = vmatprep.subr.mxu0 0.0
    %3984 = vmatpush1.msra.mxu0 0.0
    %3985 = vmatprep.subr.mxu0 0.0
    %3986 = vmatpush1.msra.mxu0 0.0
    %3987 = vmatprep.subr.mxu0 0.0
    %3988 = vmatpush1.msra.mxu0 0.0
    %3989 = vmatprep.subr.mxu0 0.0
    %3990 = vmatpush1.msra.mxu0 0.0
    %3991 = vmatprep.subr.mxu0 0.0
    %3992 = vmatpush1.msra.mxu0 0.0
    %3993 = vmatprep.subr.mxu0 0.0
    %3994 = vmatpush1.msra.mxu0 0.0
    %3995 = vmatprep.subr.mxu0 0.0
    %3996 = vmatpush1.msra.mxu0 0.0
    %3997 = vmatprep.subr.mxu0 0.0
    %3998 = vmatpush1.msra.mxu0 0.0
    %3999 = vmatprep.subr.mxu0 0.0
    %4000 = vmatpush1.msra.mxu0 0.0
    %4001 = vmatprep.subr.mxu0 0.0
    %4002 = vmatpush1.msra.mxu0 0.0
    %4003 = vmatprep.mubr.f32.mxu0 0.0
    %4004 = vmatmul.mubr.f32.gmra.mrb[0].mxu0 %v3937
    %v4005 = vpop.f32.mrb[0].mxu0
    %v4006 = vadd.f32 0.0, %v4005
    %v4007 = vpop.f32.mrb[0].mxu0
    %v4008 = vadd.f32 0.0, %v4007
    %4009 = vdwg.mxu0
    %4010 = vmatprep.subr.mxu0 %v3927
    %4011 = vmatpush1.msra.mxu0 %v3926
    %4012 = vmatprep.subr.mxu0 0.0
    %4013 = vmatpush1.msra.mxu0 0.0
    %4014 = vmatprep.subr.mxu0 0.0
    %4015 = vmatpush1.msra.mxu0 0.0
    %4016 = vmatprep.subr.mxu0 0.0
    %4017 = vmatpush1.msra.mxu0 0.0
    %4018 = vmatprep.subr.mxu0 0.0
    %4019 = vmatpush1.msra.mxu0 0.0
    %4020 = vmatprep.subr.mxu0 0.0
    %4021 = vmatpush1.msra.mxu0 0.0
    %4022 = vmatprep.subr.mxu0 0.0
    %4023 = vmatpush1.msra.mxu0 0.0
    %4024 = vmatprep.subr.mxu0 0.0
    %4025 = vmatpush1.msra.mxu0 0.0
    %4026 = vmatprep.subr.mxu0 0.0
    %4027 = vmatpush1.msra.mxu0 0.0
    %4028 = vmatprep.subr.mxu0 0.0
    %4029 = vmatpush1.msra.mxu0 0.0
    %4030 = vmatprep.subr.mxu0 0.0
    %4031 = vmatpush1.msra.mxu0 0.0
    %4032 = vmatprep.subr.mxu0 0.0
    %4033 = vmatpush1.msra.mxu0 0.0
    %4034 = vmatprep.subr.mxu0 0.0
    %4035 = vmatpush1.msra.mxu0 0.0
    %4036 = vmatprep.subr.mxu0 0.0
    %4037 = vmatpush1.msra.mxu0 0.0
    %4038 = vmatprep.subr.mxu0 0.0
    %4039 = vmatpush1.msra.mxu0 0.0
    %4040 = vmatprep.subr.mxu0 0.0
    %4041 = vmatpush1.msra.mxu0 0.0
    %4042 = vmatprep.subr.mxu0 0.0
    %4043 = vmatpush1.msra.mxu0 0.0
    %4044 = vmatprep.subr.mxu0 0.0
    %4045 = vmatpush1.msra.mxu0 0.0
    %4046 = vmatprep.subr.mxu0 0.0
    %4047 = vmatpush1.msra.mxu0 0.0
    %4048 = vmatprep.subr.mxu0 0.0
    %4049 = vmatpush1.msra.mxu0 0.0
    %4050 = vmatprep.subr.mxu0 0.0
    %4051 = vmatpush1.msra.mxu0 0.0
    %4052 = vmatprep.subr.mxu0 0.0
    %4053 = vmatpush1.msra.mxu0 0.0
    %4054 = vmatprep.subr.mxu0 0.0
    %4055 = vmatpush1.msra.mxu0 0.0
    %4056 = vmatprep.subr.mxu0 0.0
    %4057 = vmatpush1.msra.mxu0 0.0
    %4058 = vmatprep.subr.mxu0 0.0
    %4059 = vmatpush1.msra.mxu0 0.0
    %4060 = vmatprep.subr.mxu0 0.0
    %4061 = vmatpush1.msra.mxu0 0.0
    %4062 = vmatprep.subr.mxu0 0.0
    %4063 = vmatpush1.msra.mxu0 0.0
    %4064 = vmatprep.subr.mxu0 0.0
    %4065 = vmatpush1.msra.mxu0 0.0
    %4066 = vmatprep.subr.mxu0 0.0
    %4067 = vmatpush1.msra.mxu0 0.0
    %4068 = vmatprep.subr.mxu0 0.0
    %4069 = vmatpush1.msra.mxu0 0.0
    %4070 = vmatprep.subr.mxu0 0.0
    %4071 = vmatpush1.msra.mxu0 0.0
    %4072 = vmatprep.subr.mxu0 0.0
    %4073 = vmatpush1.msra.mxu0 0.0
    %4074 = vmatprep.mubr.f32.mxu0 0.0
    %4075 = vmatmul.mubr.f32.gmra.mrb[0].mxu0 %v3937
    %v4076 = vpop.f32.mrb[0].mxu0
    %v4077 = vadd.f32 0.0, %v4076
    %v4078 = vpop.f32.mrb[0].mxu0
    %v4079 = vadd.f32 0.0, %v4078
    %4080 = vdwg.mxu0
    %4081 = vmatprep.subr.mxu0 %v3929
    %4082 = vmatpush1.msra.mxu0 %v3928
    %4083 = vmatprep.subr.mxu0 0.0
    %4084 = vmatpush1.msra.mxu0 0.0
    %4085 = vmatprep.subr.mxu0 0.0
    %4086 = vmatpush1.msra.mxu0 0.0
    %4087 = vmatprep.subr.mxu0 0.0
    %4088 = vmatpush1.msra.mxu0 0.0
    %4089 = vmatprep.subr.mxu0 0.0
    %4090 = vmatpush1.msra.mxu0 0.0
    %4091 = vmatprep.subr.mxu0 0.0
    %4092 = vmatpush1.msra.mxu0 0.0
    %4093 = vmatprep.subr.mxu0 0.0
    %4094 = vmatpush1.msra.mxu0 0.0
    %4095 = vmatprep.subr.mxu0 0.0
    %4096 = vmatpush1.msra.mxu0 0.0
    %4097 = vmatprep.subr.mxu0 0.0
    %4098 = vmatpush1.msra.mxu0 0.0
    %4099 = vmatprep.subr.mxu0 0.0
    %4100 = vmatpush1.msra.mxu0 0.0
    %4101 = vmatprep.subr.mxu0 0.0
    %4102 = vmatpush1.msra.mxu0 0.0
    %4103 = vmatprep.subr.mxu0 0.0
    %4104 = vmatpush1.msra.mxu0 0.0
    %4105 = vmatprep.subr.mxu0 0.0
    %4106 = vmatpush1.msra.mxu0 0.0
    %4107 = vmatprep.subr.mxu0 0.0
    %4108 = vmatpush1.msra.mxu0 0.0
    %4109 = vmatprep.subr.mxu0 0.0
    %4110 = vmatpush1.msra.mxu0 0.0
    %4111 = vmatprep.subr.mxu0 0.0
    %4112 = vmatpush1.msra.mxu0 0.0
    %4113 = vmatprep.subr.mxu0 0.0
    %4114 = vmatpush1.msra.mxu0 0.0
    %4115 = vmatprep.subr.mxu0 0.0
    %4116 = vmatpush1.msra.mxu0 0.0
    %4117 = vmatprep.subr.mxu0 0.0
    %4118 = vmatpush1.msra.mxu0 0.0
    %4119 = vmatprep.subr.mxu0 0.0
    %4120 = vmatpush1.msra.mxu0 0.0
    %4121 = vmatprep.subr.mxu0 0.0
    %4122 = vmatpush1.msra.mxu0 0.0
    %4123 = vmatprep.subr.mxu0 0.0
    %4124 = vmatpush1.msra.mxu0 0.0
    %4125 = vmatprep.subr.mxu0 0.0
    %4126 = vmatpush1.msra.mxu0 0.0
    %4127 = vmatprep.subr.mxu0 0.0
    %4128 = vmatpush1.msra.mxu0 0.0
    %4129 = vmatprep.subr.mxu0 0.0
    %4130 = vmatpush1.msra.mxu0 0.0
    %4131 = vmatprep.subr.mxu0 0.0
    %4132 = vmatpush1.msra.mxu0 0.0
    %4133 = vmatprep.subr.mxu0 0.0
    %4134 = vmatpush1.msra.mxu0 0.0
    %4135 = vmatprep.subr.mxu0 0.0
    %4136 = vmatpush1.msra.mxu0 0.0
    %4137 = vmatprep.subr.mxu0 0.0
    %4138 = vmatpush1.msra.mxu0 0.0
    %4139 = vmatprep.subr.mxu0 0.0
    %4140 = vmatpush1.msra.mxu0 0.0
    %4141 = vmatprep.subr.mxu0 0.0
    %4142 = vmatpush1.msra.mxu0 0.0
    %4143 = vmatprep.subr.mxu0 0.0
    %4144 = vmatpush1.msra.mxu0 0.0
    %4145 = vmatprep.mubr.f32.mxu0 0.0
    %4146 = vmatmul.mubr.f32.gmra.mrb[0].mxu0 %v3937
    %v4147 = vpop.f32.mrb[0].mxu0
    %v4148 = vadd.f32 0.0, %v4147
    %v4149 = vpop.f32.mrb[0].mxu0
    %v4150 = vadd.f32 0.0, %v4149
    %4151 = vdwg.mxu0
    %v4152 = vadd.f32 %v3888, %v4006
    %v4153 = vadd.f32 %v3889, %v4008
    %v4154 = vadd.f32 %v3890, %v4077
    %v4155 = vadd.f32 %v3891, %v4079
    %v4156 = vadd.f32 %v3892, %v4148
    %v4157 = vadd.f32 %v3893, %v4150
    %s4158 = scalar_lea.vmem %s5, 48
    %v4159 = vld [vmem:[%s4158] sm:$0xff]
    %4160 = vrot.lane.b32.xlu0 %v3896, 111
    %v4161 = vpop.permute.xlu0 %4160
    %4162 = vrot.lane.b32.xlu0 %v3897, 111
    %v4163 = vpop.permute.xlu0 %4162
    %4164 = vrot.lane.b32.xlu0 %v3898, 111
    %v4165 = vpop.permute.xlu0 %4164
    %4166 = vrot.lane.b32.xlu0 %v3899, 111
    %v4167 = vpop.permute.xlu0 %4166
    %4168 = vrot.lane.b32.xlu0 %v3900, 111
    %v4169 = vpop.permute.xlu0 %4168
    %4170 = vrot.lane.b32.xlu0 %v3901, 111
    %v4171 = vpop.permute.xlu0 %4170
    %4172 = vrot.lane.b32.xlu0 %v3902, 111
    %v4173 = vpop.permute.xlu0 %4172
    %v4174 = vsel %vm1717, %v4161, %v4163
    %v4175 = vsel %vm1717, %v4163, %v4165
    %v4176 = vsel %vm1717, %v4165, %v4167
    %v4177 = vsel %vm1717, %v4167, %v4169
    %v4178 = vsel %vm1717, %v4169, %v4171
    %v4179 = vsel %vm1717, %v4171, %v4173
    %v4187 = vsel %vm95, %v4159, 0
    %4189 = vmatprep.subr.mxu0 %v4175
    %4190 = vmatpush1.msra.mxu0 %v4174
    %4191 = vmatprep.subr.mxu0 0.0
    %4192 = vmatpush1.msra.mxu0 0.0
    %4193 = vmatprep.subr.mxu0 0.0
    %4194 = vmatpush1.msra.mxu0 0.0
    %4195 = vmatprep.subr.mxu0 0.0
    %4196 = vmatpush1.msra.mxu0 0.0
    %4197 = vmatprep.subr.mxu0 0.0
    %4198 = vmatpush1.msra.mxu0 0.0
    %4199 = vmatprep.subr.mxu0 0.0
    %4200 = vmatpush1.msra.mxu0 0.0
    %4201 = vmatprep.subr.mxu0 0.0
    %4202 = vmatpush1.msra.mxu0 0.0
    %4203 = vmatprep.subr.mxu0 0.0
    %4204 = vmatpush1.msra.mxu0 0.0
    %4205 = vmatprep.subr.mxu0 0.0
    %4206 = vmatpush1.msra.mxu0 0.0
    %4207 = vmatprep.subr.mxu0 0.0
    %4208 = vmatpush1.msra.mxu0 0.0
    %4209 = vmatprep.subr.mxu0 0.0
    %4210 = vmatpush1.msra.mxu0 0.0
    %4211 = vmatprep.subr.mxu0 0.0
    %4212 = vmatpush1.msra.mxu0 0.0
    %4213 = vmatprep.subr.mxu0 0.0
    %4214 = vmatpush1.msra.mxu0 0.0
    %4215 = vmatprep.subr.mxu0 0.0
    %4216 = vmatpush1.msra.mxu0 0.0
    %4217 = vmatprep.subr.mxu0 0.0
    %4218 = vmatpush1.msra.mxu0 0.0
    %4219 = vmatprep.subr.mxu0 0.0
    %4220 = vmatpush1.msra.mxu0 0.0
    %4221 = vmatprep.subr.mxu0 0.0
    %4222 = vmatpush1.msra.mxu0 0.0
    %4223 = vmatprep.subr.mxu0 0.0
    %4224 = vmatpush1.msra.mxu0 0.0
    %4225 = vmatprep.subr.mxu0 0.0
    %4226 = vmatpush1.msra.mxu0 0.0
    %4227 = vmatprep.subr.mxu0 0.0
    %4228 = vmatpush1.msra.mxu0 0.0
    %4229 = vmatprep.subr.mxu0 0.0
    %4230 = vmatpush1.msra.mxu0 0.0
    %4231 = vmatprep.subr.mxu0 0.0
    %4232 = vmatpush1.msra.mxu0 0.0
    %4233 = vmatprep.subr.mxu0 0.0
    %4234 = vmatpush1.msra.mxu0 0.0
    %4235 = vmatprep.subr.mxu0 0.0
    %4236 = vmatpush1.msra.mxu0 0.0
    %4237 = vmatprep.subr.mxu0 0.0
    %4238 = vmatpush1.msra.mxu0 0.0
    %4239 = vmatprep.subr.mxu0 0.0
    %4240 = vmatpush1.msra.mxu0 0.0
    %4241 = vmatprep.subr.mxu0 0.0
    %4242 = vmatpush1.msra.mxu0 0.0
    %4243 = vmatprep.subr.mxu0 0.0
    %4244 = vmatpush1.msra.mxu0 0.0
    %4245 = vmatprep.subr.mxu0 0.0
    %4246 = vmatpush1.msra.mxu0 0.0
    %4247 = vmatprep.subr.mxu0 0.0
    %4248 = vmatpush1.msra.mxu0 0.0
    %4249 = vmatprep.subr.mxu0 0.0
    %4250 = vmatpush1.msra.mxu0 0.0
    %4251 = vmatprep.subr.mxu0 0.0
    %4252 = vmatpush1.msra.mxu0 0.0
    %4253 = vmatprep.mubr.f32.mxu0 0.0
    %4254 = vmatmul.mubr.f32.gmra.mrb[0].mxu0 %v4187
    %v4255 = vpop.f32.mrb[0].mxu0
    %v4256 = vadd.f32 0.0, %v4255
    %v4257 = vpop.f32.mrb[0].mxu0
    %v4258 = vadd.f32 0.0, %v4257
    %4259 = vdwg.mxu0
    %4260 = vmatprep.subr.mxu0 %v4177
    %4261 = vmatpush1.msra.mxu0 %v4176
    %4262 = vmatprep.subr.mxu0 0.0
    %4263 = vmatpush1.msra.mxu0 0.0
    %4264 = vmatprep.subr.mxu0 0.0
    %4265 = vmatpush1.msra.mxu0 0.0
    %4266 = vmatprep.subr.mxu0 0.0
    %4267 = vmatpush1.msra.mxu0 0.0
    %4268 = vmatprep.subr.mxu0 0.0
    %4269 = vmatpush1.msra.mxu0 0.0
    %4270 = vmatprep.subr.mxu0 0.0
    %4271 = vmatpush1.msra.mxu0 0.0
    %4272 = vmatprep.subr.mxu0 0.0
    %4273 = vmatpush1.msra.mxu0 0.0
    %4274 = vmatprep.subr.mxu0 0.0
    %4275 = vmatpush1.msra.mxu0 0.0
    %4276 = vmatprep.subr.mxu0 0.0
    %4277 = vmatpush1.msra.mxu0 0.0
    %4278 = vmatprep.subr.mxu0 0.0
    %4279 = vmatpush1.msra.mxu0 0.0
    %4280 = vmatprep.subr.mxu0 0.0
    %4281 = vmatpush1.msra.mxu0 0.0
    %4282 = vmatprep.subr.mxu0 0.0
    %4283 = vmatpush1.msra.mxu0 0.0
    %4284 = vmatprep.subr.mxu0 0.0
    %4285 = vmatpush1.msra.mxu0 0.0
    %4286 = vmatprep.subr.mxu0 0.0
    %4287 = vmatpush1.msra.mxu0 0.0
    %4288 = vmatprep.subr.mxu0 0.0
    %4289 = vmatpush1.msra.mxu0 0.0
    %4290 = vmatprep.subr.mxu0 0.0
    %4291 = vmatpush1.msra.mxu0 0.0
    %4292 = vmatprep.subr.mxu0 0.0
    %4293 = vmatpush1.msra.mxu0 0.0
    %4294 = vmatprep.subr.mxu0 0.0
    %4295 = vmatpush1.msra.mxu0 0.0
    %4296 = vmatprep.subr.mxu0 0.0
    %4297 = vmatpush1.msra.mxu0 0.0
    %4298 = vmatprep.subr.mxu0 0.0
    %4299 = vmatpush1.msra.mxu0 0.0
    %4300 = vmatprep.subr.mxu0 0.0
    %4301 = vmatpush1.msra.mxu0 0.0
    %4302 = vmatprep.subr.mxu0 0.0
    %4303 = vmatpush1.msra.mxu0 0.0
    %4304 = vmatprep.subr.mxu0 0.0
    %4305 = vmatpush1.msra.mxu0 0.0
    %4306 = vmatprep.subr.mxu0 0.0
    %4307 = vmatpush1.msra.mxu0 0.0
    %4308 = vmatprep.subr.mxu0 0.0
    %4309 = vmatpush1.msra.mxu0 0.0
    %4310 = vmatprep.subr.mxu0 0.0
    %4311 = vmatpush1.msra.mxu0 0.0
    %4312 = vmatprep.subr.mxu0 0.0
    %4313 = vmatpush1.msra.mxu0 0.0
    %4314 = vmatprep.subr.mxu0 0.0
    %4315 = vmatpush1.msra.mxu0 0.0
    %4316 = vmatprep.subr.mxu0 0.0
    %4317 = vmatpush1.msra.mxu0 0.0
    %4318 = vmatprep.subr.mxu0 0.0
    %4319 = vmatpush1.msra.mxu0 0.0
    %4320 = vmatprep.subr.mxu0 0.0
    %4321 = vmatpush1.msra.mxu0 0.0
    %4322 = vmatprep.subr.mxu0 0.0
    %4323 = vmatpush1.msra.mxu0 0.0
    %4324 = vmatprep.mubr.f32.mxu0 0.0
    %4325 = vmatmul.mubr.f32.gmra.mrb[0].mxu0 %v4187
    %v4326 = vpop.f32.mrb[0].mxu0
    %v4327 = vadd.f32 0.0, %v4326
    %v4328 = vpop.f32.mrb[0].mxu0
    %v4329 = vadd.f32 0.0, %v4328
    %4330 = vdwg.mxu0
    %4331 = vmatprep.subr.mxu0 %v4179
    %4332 = vmatpush1.msra.mxu0 %v4178
    %4333 = vmatprep.subr.mxu0 0.0
    %4334 = vmatpush1.msra.mxu0 0.0
    %4335 = vmatprep.subr.mxu0 0.0
    %4336 = vmatpush1.msra.mxu0 0.0
    %4337 = vmatprep.subr.mxu0 0.0
    %4338 = vmatpush1.msra.mxu0 0.0
    %4339 = vmatprep.subr.mxu0 0.0
    %4340 = vmatpush1.msra.mxu0 0.0
    %4341 = vmatprep.subr.mxu0 0.0
    %4342 = vmatpush1.msra.mxu0 0.0
    %4343 = vmatprep.subr.mxu0 0.0
    %4344 = vmatpush1.msra.mxu0 0.0
    %4345 = vmatprep.subr.mxu0 0.0
    %4346 = vmatpush1.msra.mxu0 0.0
    %4347 = vmatprep.subr.mxu0 0.0
    %4348 = vmatpush1.msra.mxu0 0.0
    %4349 = vmatprep.subr.mxu0 0.0
    %4350 = vmatpush1.msra.mxu0 0.0
    %4351 = vmatprep.subr.mxu0 0.0
    %4352 = vmatpush1.msra.mxu0 0.0
    %4353 = vmatprep.subr.mxu0 0.0
    %4354 = vmatpush1.msra.mxu0 0.0
    %4355 = vmatprep.subr.mxu0 0.0
    %4356 = vmatpush1.msra.mxu0 0.0
    %4357 = vmatprep.subr.mxu0 0.0
    %4358 = vmatpush1.msra.mxu0 0.0
    %4359 = vmatprep.subr.mxu0 0.0
    %4360 = vmatpush1.msra.mxu0 0.0
    %4361 = vmatprep.subr.mxu0 0.0
    %4362 = vmatpush1.msra.mxu0 0.0
    %4363 = vmatprep.subr.mxu0 0.0
    %4364 = vmatpush1.msra.mxu0 0.0
    %4365 = vmatprep.subr.mxu0 0.0
    %4366 = vmatpush1.msra.mxu0 0.0
    %4367 = vmatprep.subr.mxu0 0.0
    %4368 = vmatpush1.msra.mxu0 0.0
    %4369 = vmatprep.subr.mxu0 0.0
    %4370 = vmatpush1.msra.mxu0 0.0
    %4371 = vmatprep.subr.mxu0 0.0
    %4372 = vmatpush1.msra.mxu0 0.0
    %4373 = vmatprep.subr.mxu0 0.0
    %4374 = vmatpush1.msra.mxu0 0.0
    %4375 = vmatprep.subr.mxu0 0.0
    %4376 = vmatpush1.msra.mxu0 0.0
    %4377 = vmatprep.subr.mxu0 0.0
    %4378 = vmatpush1.msra.mxu0 0.0
    %4379 = vmatprep.subr.mxu0 0.0
    %4380 = vmatpush1.msra.mxu0 0.0
    %4381 = vmatprep.subr.mxu0 0.0
    %4382 = vmatpush1.msra.mxu0 0.0
    %4383 = vmatprep.subr.mxu0 0.0
    %4384 = vmatpush1.msra.mxu0 0.0
    %4385 = vmatprep.subr.mxu0 0.0
    %4386 = vmatpush1.msra.mxu0 0.0
    %4387 = vmatprep.subr.mxu0 0.0
    %4388 = vmatpush1.msra.mxu0 0.0
    %4389 = vmatprep.subr.mxu0 0.0
    %4390 = vmatpush1.msra.mxu0 0.0
    %4391 = vmatprep.subr.mxu0 0.0
    %4392 = vmatpush1.msra.mxu0 0.0
    %4393 = vmatprep.subr.mxu0 0.0
    %4394 = vmatpush1.msra.mxu0 0.0
    %4395 = vmatprep.mubr.f32.mxu0 0.0
    %4396 = vmatmul.mubr.f32.gmra.mrb[0].mxu0 %v4187
    %v4397 = vpop.f32.mrb[0].mxu0
    %v4398 = vadd.f32 0.0, %v4397
    %v4399 = vpop.f32.mrb[0].mxu0
    %v4400 = vadd.f32 0.0, %v4399
    %4401 = vdwg.mxu0
    %v4402 = vadd.f32 %v4152, %v4256
    %v4403 = vadd.f32 %v4153, %v4258
    %v4404 = vadd.f32 %v4154, %v4327
    %v4405 = vadd.f32 %v4155, %v4329
    %v4406 = vadd.f32 %v4156, %v4398
    %v4407 = vadd.f32 %v4157, %v4400
    %s4408 = scalar_lea.vmem %s5, 56
    %v4409 = vld [vmem:[%s4408] sm:$0xff]
    %4410 = vrot.lane.b32.xlu0 %v3896, 110
    %v4411 = vpop.permute.xlu0 %4410
    %4412 = vrot.lane.b32.xlu0 %v3897, 110
    %v4413 = vpop.permute.xlu0 %4412
    %4414 = vrot.lane.b32.xlu0 %v3898, 110
    %v4415 = vpop.permute.xlu0 %4414
    %4416 = vrot.lane.b32.xlu0 %v3899, 110
    %v4417 = vpop.permute.xlu0 %4416
    %4418 = vrot.lane.b32.xlu0 %v3900, 110
    %v4419 = vpop.permute.xlu0 %4418
    %4420 = vrot.lane.b32.xlu0 %v3901, 110
    %v4421 = vpop.permute.xlu0 %4420
    %4422 = vrot.lane.b32.xlu0 %v3902, 110
    %v4423 = vpop.permute.xlu0 %4422
    %v4424 = vsel %vm1996, %v4411, %v4413
    %v4425 = vsel %vm1996, %v4413, %v4415
    %v4426 = vsel %vm1996, %v4415, %v4417
    %v4427 = vsel %vm1996, %v4417, %v4419
    %v4428 = vsel %vm1996, %v4419, %v4421
    %v4429 = vsel %vm1996, %v4421, %v4423
    %v4437 = vsel %vm95, %v4409, 0
    %4439 = vmatprep.subr.mxu0 %v4425
    %4440 = vmatpush1.msra.mxu0 %v4424
    %4441 = vmatprep.subr.mxu0 0.0
    %4442 = vmatpush1.msra.mxu0 0.0
    %4443 = vmatprep.subr.mxu0 0.0
    %4444 = vmatpush1.msra.mxu0 0.0
    %4445 = vmatprep.subr.mxu0 0.0
    %4446 = vmatpush1.msra.mxu0 0.0
    %4447 = vmatprep.subr.mxu0 0.0
    %4448 = vmatpush1.msra.mxu0 0.0
    %4449 = vmatprep.subr.mxu0 0.0
    %4450 = vmatpush1.msra.mxu0 0.0
    %4451 = vmatprep.subr.mxu0 0.0
    %4452 = vmatpush1.msra.mxu0 0.0
    %4453 = vmatprep.subr.mxu0 0.0
    %4454 = vmatpush1.msra.mxu0 0.0
    %4455 = vmatprep.subr.mxu0 0.0
    %4456 = vmatpush1.msra.mxu0 0.0
    %4457 = vmatprep.subr.mxu0 0.0
    %4458 = vmatpush1.msra.mxu0 0.0
    %4459 = vmatprep.subr.mxu0 0.0
    %4460 = vmatpush1.msra.mxu0 0.0
    %4461 = vmatprep.subr.mxu0 0.0
    %4462 = vmatpush1.msra.mxu0 0.0
    %4463 = vmatprep.subr.mxu0 0.0
    %4464 = vmatpush1.msra.mxu0 0.0
    %4465 = vmatprep.subr.mxu0 0.0
    %4466 = vmatpush1.msra.mxu0 0.0
    %4467 = vmatprep.subr.mxu0 0.0
    %4468 = vmatpush1.msra.mxu0 0.0
    %4469 = vmatprep.subr.mxu0 0.0
    %4470 = vmatpush1.msra.mxu0 0.0
    %4471 = vmatprep.subr.mxu0 0.0
    %4472 = vmatpush1.msra.mxu0 0.0
    %4473 = vmatprep.subr.mxu0 0.0
    %4474 = vmatpush1.msra.mxu0 0.0
    %4475 = vmatprep.subr.mxu0 0.0
    %4476 = vmatpush1.msra.mxu0 0.0
    %4477 = vmatprep.subr.mxu0 0.0
    %4478 = vmatpush1.msra.mxu0 0.0
    %4479 = vmatprep.subr.mxu0 0.0
    %4480 = vmatpush1.msra.mxu0 0.0
    %4481 = vmatprep.subr.mxu0 0.0
    %4482 = vmatpush1.msra.mxu0 0.0
    %4483 = vmatprep.subr.mxu0 0.0
    %4484 = vmatpush1.msra.mxu0 0.0
    %4485 = vmatprep.subr.mxu0 0.0
    %4486 = vmatpush1.msra.mxu0 0.0
    %4487 = vmatprep.subr.mxu0 0.0
    %4488 = vmatpush1.msra.mxu0 0.0
    %4489 = vmatprep.subr.mxu0 0.0
    %4490 = vmatpush1.msra.mxu0 0.0
    %4491 = vmatprep.subr.mxu0 0.0
    %4492 = vmatpush1.msra.mxu0 0.0
    %4493 = vmatprep.subr.mxu0 0.0
    %4494 = vmatpush1.msra.mxu0 0.0
    %4495 = vmatprep.subr.mxu0 0.0
    %4496 = vmatpush1.msra.mxu0 0.0
    %4497 = vmatprep.subr.mxu0 0.0
    %4498 = vmatpush1.msra.mxu0 0.0
    %4499 = vmatprep.subr.mxu0 0.0
    %4500 = vmatpush1.msra.mxu0 0.0
    %4501 = vmatprep.subr.mxu0 0.0
    %4502 = vmatpush1.msra.mxu0 0.0
    %4503 = vmatprep.mubr.f32.mxu0 0.0
    %4504 = vmatmul.mubr.f32.gmra.mrb[0].mxu0 %v4437
    %v4505 = vpop.f32.mrb[0].mxu0
    %v4506 = vadd.f32 0.0, %v4505
    %v4507 = vpop.f32.mrb[0].mxu0
    %v4508 = vadd.f32 0.0, %v4507
    %4509 = vdwg.mxu0
    %4510 = vmatprep.subr.mxu0 %v4427
    %4511 = vmatpush1.msra.mxu0 %v4426
    %4512 = vmatprep.subr.mxu0 0.0
    %4513 = vmatpush1.msra.mxu0 0.0
    %4514 = vmatprep.subr.mxu0 0.0
    %4515 = vmatpush1.msra.mxu0 0.0
    %4516 = vmatprep.subr.mxu0 0.0
    %4517 = vmatpush1.msra.mxu0 0.0
    %4518 = vmatprep.subr.mxu0 0.0
    %4519 = vmatpush1.msra.mxu0 0.0
    %4520 = vmatprep.subr.mxu0 0.0
    %4521 = vmatpush1.msra.mxu0 0.0
    %4522 = vmatprep.subr.mxu0 0.0
    %4523 = vmatpush1.msra.mxu0 0.0
    %4524 = vmatprep.subr.mxu0 0.0
    %4525 = vmatpush1.msra.mxu0 0.0
    %4526 = vmatprep.subr.mxu0 0.0
    %4527 = vmatpush1.msra.mxu0 0.0
    %4528 = vmatprep.subr.mxu0 0.0
    %4529 = vmatpush1.msra.mxu0 0.0
    %4530 = vmatprep.subr.mxu0 0.0
    %4531 = vmatpush1.msra.mxu0 0.0
    %4532 = vmatprep.subr.mxu0 0.0
    %4533 = vmatpush1.msra.mxu0 0.0
    %4534 = vmatprep.subr.mxu0 0.0
    %4535 = vmatpush1.msra.mxu0 0.0
    %4536 = vmatprep.subr.mxu0 0.0
    %4537 = vmatpush1.msra.mxu0 0.0
    %4538 = vmatprep.subr.mxu0 0.0
    %4539 = vmatpush1.msra.mxu0 0.0
    %4540 = vmatprep.subr.mxu0 0.0
    %4541 = vmatpush1.msra.mxu0 0.0
    %4542 = vmatprep.subr.mxu0 0.0
    %4543 = vmatpush1.msra.mxu0 0.0
    %4544 = vmatprep.subr.mxu0 0.0
    %4545 = vmatpush1.msra.mxu0 0.0
    %4546 = vmatprep.subr.mxu0 0.0
    %4547 = vmatpush1.msra.mxu0 0.0
    %4548 = vmatprep.subr.mxu0 0.0
    %4549 = vmatpush1.msra.mxu0 0.0
    %4550 = vmatprep.subr.mxu0 0.0
    %4551 = vmatpush1.msra.mxu0 0.0
    %4552 = vmatprep.subr.mxu0 0.0
    %4553 = vmatpush1.msra.mxu0 0.0
    %4554 = vmatprep.subr.mxu0 0.0
    %4555 = vmatpush1.msra.mxu0 0.0
    %4556 = vmatprep.subr.mxu0 0.0
    %4557 = vmatpush1.msra.mxu0 0.0
    %4558 = vmatprep.subr.mxu0 0.0
    %4559 = vmatpush1.msra.mxu0 0.0
    %4560 = vmatprep.subr.mxu0 0.0
    %4561 = vmatpush1.msra.mxu0 0.0
    %4562 = vmatprep.subr.mxu0 0.0
    %4563 = vmatpush1.msra.mxu0 0.0
    %4564 = vmatprep.subr.mxu0 0.0
    %4565 = vmatpush1.msra.mxu0 0.0
    %4566 = vmatprep.subr.mxu0 0.0
    %4567 = vmatpush1.msra.mxu0 0.0
    %4568 = vmatprep.subr.mxu0 0.0
    %4569 = vmatpush1.msra.mxu0 0.0
    %4570 = vmatprep.subr.mxu0 0.0
    %4571 = vmatpush1.msra.mxu0 0.0
    %4572 = vmatprep.subr.mxu0 0.0
    %4573 = vmatpush1.msra.mxu0 0.0
    %4574 = vmatprep.mubr.f32.mxu0 0.0
    %4575 = vmatmul.mubr.f32.gmra.mrb[0].mxu0 %v4437
    %v4576 = vpop.f32.mrb[0].mxu0
    %v4577 = vadd.f32 0.0, %v4576
    %v4578 = vpop.f32.mrb[0].mxu0
    %v4579 = vadd.f32 0.0, %v4578
    %4580 = vdwg.mxu0
    %4581 = vmatprep.subr.mxu0 %v4429
    %4582 = vmatpush1.msra.mxu0 %v4428
    %4583 = vmatprep.subr.mxu0 0.0
    %4584 = vmatpush1.msra.mxu0 0.0
    %4585 = vmatprep.subr.mxu0 0.0
    %4586 = vmatpush1.msra.mxu0 0.0
    %4587 = vmatprep.subr.mxu0 0.0
    %4588 = vmatpush1.msra.mxu0 0.0
    %4589 = vmatprep.subr.mxu0 0.0
    %4590 = vmatpush1.msra.mxu0 0.0
    %4591 = vmatprep.subr.mxu0 0.0
    %4592 = vmatpush1.msra.mxu0 0.0
    %4593 = vmatprep.subr.mxu0 0.0
    %4594 = vmatpush1.msra.mxu0 0.0
    %4595 = vmatprep.subr.mxu0 0.0
    %4596 = vmatpush1.msra.mxu0 0.0
    %4597 = vmatprep.subr.mxu0 0.0
    %4598 = vmatpush1.msra.mxu0 0.0
    %4599 = vmatprep.subr.mxu0 0.0
    %4600 = vmatpush1.msra.mxu0 0.0
    %4601 = vmatprep.subr.mxu0 0.0
    %4602 = vmatpush1.msra.mxu0 0.0
    %4603 = vmatprep.subr.mxu0 0.0
    %4604 = vmatpush1.msra.mxu0 0.0
    %4605 = vmatprep.subr.mxu0 0.0
    %4606 = vmatpush1.msra.mxu0 0.0
    %4607 = vmatprep.subr.mxu0 0.0
    %4608 = vmatpush1.msra.mxu0 0.0
    %4609 = vmatprep.subr.mxu0 0.0
    %4610 = vmatpush1.msra.mxu0 0.0
    %4611 = vmatprep.subr.mxu0 0.0
    %4612 = vmatpush1.msra.mxu0 0.0
    %4613 = vmatprep.subr.mxu0 0.0
    %4614 = vmatpush1.msra.mxu0 0.0
    %4615 = vmatprep.subr.mxu0 0.0
    %4616 = vmatpush1.msra.mxu0 0.0
    %4617 = vmatprep.subr.mxu0 0.0
    %4618 = vmatpush1.msra.mxu0 0.0
    %4619 = vmatprep.subr.mxu0 0.0
    %4620 = vmatpush1.msra.mxu0 0.0
    %4621 = vmatprep.subr.mxu0 0.0
    %4622 = vmatpush1.msra.mxu0 0.0
    %4623 = vmatprep.subr.mxu0 0.0
    %4624 = vmatpush1.msra.mxu0 0.0
    %4625 = vmatprep.subr.mxu0 0.0
    %4626 = vmatpush1.msra.mxu0 0.0
    %4627 = vmatprep.subr.mxu0 0.0
    %4628 = vmatpush1.msra.mxu0 0.0
    %4629 = vmatprep.subr.mxu0 0.0
    %4630 = vmatpush1.msra.mxu0 0.0
    %4631 = vmatprep.subr.mxu0 0.0
    %4632 = vmatpush1.msra.mxu0 0.0
    %4633 = vmatprep.subr.mxu0 0.0
    %4634 = vmatpush1.msra.mxu0 0.0
    %4635 = vmatprep.subr.mxu0 0.0
    %4636 = vmatpush1.msra.mxu0 0.0
    %4637 = vmatprep.subr.mxu0 0.0
    %4638 = vmatpush1.msra.mxu0 0.0
    %4639 = vmatprep.subr.mxu0 0.0
    %4640 = vmatpush1.msra.mxu0 0.0
    %4641 = vmatprep.subr.mxu0 0.0
    %4642 = vmatpush1.msra.mxu0 0.0
    %4643 = vmatprep.subr.mxu0 0.0
    %4644 = vmatpush1.msra.mxu0 0.0
    %4645 = vmatprep.mubr.f32.mxu0 0.0
    %4646 = vmatmul.mubr.f32.gmra.mrb[0].mxu0 %v4437
    %v4647 = vpop.f32.mrb[0].mxu0
    %v4648 = vadd.f32 0.0, %v4647
    %v4649 = vpop.f32.mrb[0].mxu0
    %v4650 = vadd.f32 0.0, %v4649
    %4651 = vdwg.mxu0
    %v4652 = vadd.f32 %v4402, %v4506
    %v4653 = vadd.f32 %v4403, %v4508
    %v4654 = vadd.f32 %v4404, %v4577
    %v4655 = vadd.f32 %v4405, %v4579
    %v4656 = vadd.f32 %v4406, %v4648
    %v4657 = vadd.f32 %v4407, %v4650
    %s4658 = scalar_lea.vmem %s5, 64
    %v4659 = vld [vmem:[%s4658] sm:$0xff]
    %4660 = vrot.lane.b32.xlu0 %v3896, 109
    %v4661 = vpop.permute.xlu0 %4660
    %4662 = vrot.lane.b32.xlu0 %v3897, 109
    %v4663 = vpop.permute.xlu0 %4662
    %4664 = vrot.lane.b32.xlu0 %v3898, 109
    %v4665 = vpop.permute.xlu0 %4664
    %4666 = vrot.lane.b32.xlu0 %v3899, 109
    %v4667 = vpop.permute.xlu0 %4666
    %4668 = vrot.lane.b32.xlu0 %v3900, 109
    %v4669 = vpop.permute.xlu0 %4668
    %4670 = vrot.lane.b32.xlu0 %v3901, 109
    %v4671 = vpop.permute.xlu0 %4670
    %4672 = vrot.lane.b32.xlu0 %v3902, 109
    %v4673 = vpop.permute.xlu0 %4672
    %v4674 = vsel %vm2275, %v4661, %v4663
    %v4675 = vsel %vm2275, %v4663, %v4665
    %v4676 = vsel %vm2275, %v4665, %v4667
    %v4677 = vsel %vm2275, %v4667, %v4669
    %v4678 = vsel %vm2275, %v4669, %v4671
    %v4679 = vsel %vm2275, %v4671, %v4673
    %v4687 = vsel %vm95, %v4659, 0
    %4689 = vmatprep.subr.mxu0 %v4675
    %4690 = vmatpush1.msra.mxu0 %v4674
    %4691 = vmatprep.subr.mxu0 0.0
    %4692 = vmatpush1.msra.mxu0 0.0
    %4693 = vmatprep.subr.mxu0 0.0
    %4694 = vmatpush1.msra.mxu0 0.0
    %4695 = vmatprep.subr.mxu0 0.0
    %4696 = vmatpush1.msra.mxu0 0.0
    %4697 = vmatprep.subr.mxu0 0.0
    %4698 = vmatpush1.msra.mxu0 0.0
    %4699 = vmatprep.subr.mxu0 0.0
    %4700 = vmatpush1.msra.mxu0 0.0
    %4701 = vmatprep.subr.mxu0 0.0
    %4702 = vmatpush1.msra.mxu0 0.0
    %4703 = vmatprep.subr.mxu0 0.0
    %4704 = vmatpush1.msra.mxu0 0.0
    %4705 = vmatprep.subr.mxu0 0.0
    %4706 = vmatpush1.msra.mxu0 0.0
    %4707 = vmatprep.subr.mxu0 0.0
    %4708 = vmatpush1.msra.mxu0 0.0
    %4709 = vmatprep.subr.mxu0 0.0
    %4710 = vmatpush1.msra.mxu0 0.0
    %4711 = vmatprep.subr.mxu0 0.0
    %4712 = vmatpush1.msra.mxu0 0.0
    %4713 = vmatprep.subr.mxu0 0.0
    %4714 = vmatpush1.msra.mxu0 0.0
    %4715 = vmatprep.subr.mxu0 0.0
    %4716 = vmatpush1.msra.mxu0 0.0
    %4717 = vmatprep.subr.mxu0 0.0
    %4718 = vmatpush1.msra.mxu0 0.0
    %4719 = vmatprep.subr.mxu0 0.0
    %4720 = vmatpush1.msra.mxu0 0.0
    %4721 = vmatprep.subr.mxu0 0.0
    %4722 = vmatpush1.msra.mxu0 0.0
    %4723 = vmatprep.subr.mxu0 0.0
    %4724 = vmatpush1.msra.mxu0 0.0
    %4725 = vmatprep.subr.mxu0 0.0
    %4726 = vmatpush1.msra.mxu0 0.0
    %4727 = vmatprep.subr.mxu0 0.0
    %4728 = vmatpush1.msra.mxu0 0.0
    %4729 = vmatprep.subr.mxu0 0.0
    %4730 = vmatpush1.msra.mxu0 0.0
    %4731 = vmatprep.subr.mxu0 0.0
    %4732 = vmatpush1.msra.mxu0 0.0
    %4733 = vmatprep.subr.mxu0 0.0
    %4734 = vmatpush1.msra.mxu0 0.0
    %4735 = vmatprep.subr.mxu0 0.0
    %4736 = vmatpush1.msra.mxu0 0.0
    %4737 = vmatprep.subr.mxu0 0.0
    %4738 = vmatpush1.msra.mxu0 0.0
    %4739 = vmatprep.subr.mxu0 0.0
    %4740 = vmatpush1.msra.mxu0 0.0
    %4741 = vmatprep.subr.mxu0 0.0
    %4742 = vmatpush1.msra.mxu0 0.0
    %4743 = vmatprep.subr.mxu0 0.0
    %4744 = vmatpush1.msra.mxu0 0.0
    %4745 = vmatprep.subr.mxu0 0.0
    %4746 = vmatpush1.msra.mxu0 0.0
    %4747 = vmatprep.subr.mxu0 0.0
    %4748 = vmatpush1.msra.mxu0 0.0
    %4749 = vmatprep.subr.mxu0 0.0
    %4750 = vmatpush1.msra.mxu0 0.0
    %4751 = vmatprep.subr.mxu0 0.0
    %4752 = vmatpush1.msra.mxu0 0.0
    %4753 = vmatprep.mubr.f32.mxu0 0.0
    %4754 = vmatmul.mubr.f32.gmra.mrb[0].mxu0 %v4687
    %v4755 = vpop.f32.mrb[0].mxu0
    %v4756 = vadd.f32 0.0, %v4755
    %v4757 = vpop.f32.mrb[0].mxu0
    %v4758 = vadd.f32 0.0, %v4757
    %4759 = vdwg.mxu0
    %4760 = vmatprep.subr.mxu0 %v4677
    %4761 = vmatpush1.msra.mxu0 %v4676
    %4762 = vmatprep.subr.mxu0 0.0
    %4763 = vmatpush1.msra.mxu0 0.0
    %4764 = vmatprep.subr.mxu0 0.0
    %4765 = vmatpush1.msra.mxu0 0.0
    %4766 = vmatprep.subr.mxu0 0.0
    %4767 = vmatpush1.msra.mxu0 0.0
    %4768 = vmatprep.subr.mxu0 0.0
    %4769 = vmatpush1.msra.mxu0 0.0
    %4770 = vmatprep.subr.mxu0 0.0
    %4771 = vmatpush1.msra.mxu0 0.0
    %4772 = vmatprep.subr.mxu0 0.0
    %4773 = vmatpush1.msra.mxu0 0.0
    %4774 = vmatprep.subr.mxu0 0.0
    %4775 = vmatpush1.msra.mxu0 0.0
    %4776 = vmatprep.subr.mxu0 0.0
    %4777 = vmatpush1.msra.mxu0 0.0
    %4778 = vmatprep.subr.mxu0 0.0
    %4779 = vmatpush1.msra.mxu0 0.0
    %4780 = vmatprep.subr.mxu0 0.0
    %4781 = vmatpush1.msra.mxu0 0.0
    %4782 = vmatprep.subr.mxu0 0.0
    %4783 = vmatpush1.msra.mxu0 0.0
    %4784 = vmatprep.subr.mxu0 0.0
    %4785 = vmatpush1.msra.mxu0 0.0
    %4786 = vmatprep.subr.mxu0 0.0
    %4787 = vmatpush1.msra.mxu0 0.0
    %4788 = vmatprep.subr.mxu0 0.0
    %4789 = vmatpush1.msra.mxu0 0.0
    %4790 = vmatprep.subr.mxu0 0.0
    %4791 = vmatpush1.msra.mxu0 0.0
    %4792 = vmatprep.subr.mxu0 0.0
    %4793 = vmatpush1.msra.mxu0 0.0
    %4794 = vmatprep.subr.mxu0 0.0
    %4795 = vmatpush1.msra.mxu0 0.0
    %4796 = vmatprep.subr.mxu0 0.0
    %4797 = vmatpush1.msra.mxu0 0.0
    %4798 = vmatprep.subr.mxu0 0.0
    %4799 = vmatpush1.msra.mxu0 0.0
    %4800 = vmatprep.subr.mxu0 0.0
    %4801 = vmatpush1.msra.mxu0 0.0
    %4802 = vmatprep.subr.mxu0 0.0
    %4803 = vmatpush1.msra.mxu0 0.0
    %4804 = vmatprep.subr.mxu0 0.0
    %4805 = vmatpush1.msra.mxu0 0.0
    %4806 = vmatprep.subr.mxu0 0.0
    %4807 = vmatpush1.msra.mxu0 0.0
    %4808 = vmatprep.subr.mxu0 0.0
    %4809 = vmatpush1.msra.mxu0 0.0
    %4810 = vmatprep.subr.mxu0 0.0
    %4811 = vmatpush1.msra.mxu0 0.0
    %4812 = vmatprep.subr.mxu0 0.0
    %4813 = vmatpush1.msra.mxu0 0.0
    %4814 = vmatprep.subr.mxu0 0.0
    %4815 = vmatpush1.msra.mxu0 0.0
    %4816 = vmatprep.subr.mxu0 0.0
    %4817 = vmatpush1.msra.mxu0 0.0
    %4818 = vmatprep.subr.mxu0 0.0
    %4819 = vmatpush1.msra.mxu0 0.0
    %4820 = vmatprep.subr.mxu0 0.0
    %4821 = vmatpush1.msra.mxu0 0.0
    %4822 = vmatprep.subr.mxu0 0.0
    %4823 = vmatpush1.msra.mxu0 0.0
    %4824 = vmatprep.mubr.f32.mxu0 0.0
    %4825 = vmatmul.mubr.f32.gmra.mrb[0].mxu0 %v4687
    %v4826 = vpop.f32.mrb[0].mxu0
    %v4827 = vadd.f32 0.0, %v4826
    %v4828 = vpop.f32.mrb[0].mxu0
    %v4829 = vadd.f32 0.0, %v4828
    %4830 = vdwg.mxu0
    %4831 = vmatprep.subr.mxu0 %v4679
    %4832 = vmatpush1.msra.mxu0 %v4678
    %4833 = vmatprep.subr.mxu0 0.0
    %4834 = vmatpush1.msra.mxu0 0.0
    %4835 = vmatprep.subr.mxu0 0.0
    %4836 = vmatpush1.msra.mxu0 0.0
    %4837 = vmatprep.subr.mxu0 0.0
    %4838 = vmatpush1.msra.mxu0 0.0
    %4839 = vmatprep.subr.mxu0 0.0
    %4840 = vmatpush1.msra.mxu0 0.0
    %4841 = vmatprep.subr.mxu0 0.0
    %4842 = vmatpush1.msra.mxu0 0.0
    %4843 = vmatprep.subr.mxu0 0.0
    %4844 = vmatpush1.msra.mxu0 0.0
    %4845 = vmatprep.subr.mxu0 0.0
    %4846 = vmatpush1.msra.mxu0 0.0
    %4847 = vmatprep.subr.mxu0 0.0
    %4848 = vmatpush1.msra.mxu0 0.0
    %4849 = vmatprep.subr.mxu0 0.0
    %4850 = vmatpush1.msra.mxu0 0.0
    %4851 = vmatprep.subr.mxu0 0.0
    %4852 = vmatpush1.msra.mxu0 0.0
    %4853 = vmatprep.subr.mxu0 0.0
    %4854 = vmatpush1.msra.mxu0 0.0
    %4855 = vmatprep.subr.mxu0 0.0
    %4856 = vmatpush1.msra.mxu0 0.0
    %4857 = vmatprep.subr.mxu0 0.0
    %4858 = vmatpush1.msra.mxu0 0.0
    %4859 = vmatprep.subr.mxu0 0.0
    %4860 = vmatpush1.msra.mxu0 0.0
    %4861 = vmatprep.subr.mxu0 0.0
    %4862 = vmatpush1.msra.mxu0 0.0
    %4863 = vmatprep.subr.mxu0 0.0
    %4864 = vmatpush1.msra.mxu0 0.0
    %4865 = vmatprep.subr.mxu0 0.0
    %4866 = vmatpush1.msra.mxu0 0.0
    %4867 = vmatprep.subr.mxu0 0.0
    %4868 = vmatpush1.msra.mxu0 0.0
    %4869 = vmatprep.subr.mxu0 0.0
    %4870 = vmatpush1.msra.mxu0 0.0
    %4871 = vmatprep.subr.mxu0 0.0
    %4872 = vmatpush1.msra.mxu0 0.0
    %4873 = vmatprep.subr.mxu0 0.0
    %4874 = vmatpush1.msra.mxu0 0.0
    %4875 = vmatprep.subr.mxu0 0.0
    %4876 = vmatpush1.msra.mxu0 0.0
    %4877 = vmatprep.subr.mxu0 0.0
    %4878 = vmatpush1.msra.mxu0 0.0
    %4879 = vmatprep.subr.mxu0 0.0
    %4880 = vmatpush1.msra.mxu0 0.0
    %4881 = vmatprep.subr.mxu0 0.0
    %4882 = vmatpush1.msra.mxu0 0.0
    %4883 = vmatprep.subr.mxu0 0.0
    %4884 = vmatpush1.msra.mxu0 0.0
    %4885 = vmatprep.subr.mxu0 0.0
    %4886 = vmatpush1.msra.mxu0 0.0
    %4887 = vmatprep.subr.mxu0 0.0
    %4888 = vmatpush1.msra.mxu0 0.0
    %4889 = vmatprep.subr.mxu0 0.0
    %4890 = vmatpush1.msra.mxu0 0.0
    %4891 = vmatprep.subr.mxu0 0.0
    %4892 = vmatpush1.msra.mxu0 0.0
    %4893 = vmatprep.subr.mxu0 0.0
    %4894 = vmatpush1.msra.mxu0 0.0
    %4895 = vmatprep.mubr.f32.mxu0 0.0
    %4896 = vmatmul.mubr.f32.gmra.mrb[0].mxu0 %v4687
    %v4897 = vpop.f32.mrb[0].mxu0
    %v4898 = vadd.f32 0.0, %v4897
    %v4899 = vpop.f32.mrb[0].mxu0
    %v4900 = vadd.f32 0.0, %v4899
    %4901 = vdwg.mxu0
    %v4902 = vadd.f32 %v4652, %v4756
    %v4903 = vadd.f32 %v4653, %v4758
    %v4904 = vadd.f32 %v4654, %v4827
    %v4905 = vadd.f32 %v4655, %v4829
    %v4906 = vadd.f32 %v4656, %v4898
    %v4907 = vadd.f32 %v4657, %v4900
    %v4908 = vsel %vm2574, %v4902, 0.0
    %v4909 = vsel %vm2575, %v4903, 0.0
    %v4910 = vsel %vm2576, %v4904, 0.0
    %v4911 = vsel %vm2577, %v4905, 0.0
    %v4912 = vsel %vm2578, %v4906, 0.0
    %v4913 = vsel %vm2579, %v4907, 0.0
    %v4914 = vadd.f32 %v4908, %v4909
    %v4915 = vadd.f32 %v4914, %v4910
    %v4916 = vadd.f32 %v4915, %v4911
    %v4917 = vadd.f32 %v4916, %v4912
    %v4918 = vadd.f32 %v4917, %v4913
    %4919 = vadd.xlane.f32.xlu0 %v4918
    %v4920 = vpop.xlane.xlu0 %4919
    %v4921 = vmul.f32 %v4908, %v4908
    %v4922 = vmul.f32 %v4909, %v4909
    %v4923 = vmul.f32 %v4910, %v4910
    %v4924 = vmul.f32 %v4911, %v4911
    %v4925 = vmul.f32 %v4912, %v4912
    %v4926 = vmul.f32 %v4913, %v4913
    %v4927 = vadd.f32 %v4921, %v4922
    %v4928 = vadd.f32 %v4927, %v4923
    %v4929 = vadd.f32 %v4928, %v4924
    %v4930 = vadd.f32 %v4929, %v4925
    %v4931 = vadd.f32 %v4930, %v4926
    %4932 = vadd.xlane.f32.xlu0 %v4931
    %v4933 = vpop.xlane.xlu0 %4932
    %v4934 = vmul.f32 %v4920, 0.001953125
    %v4935 = vmul.f32 %v4933, 0.001953125
    %v4936 = vmul.f32 %v4934, %v4934
    %v4937 = vsub.f32 %v4935, %v4936
    %v4938 = vld [vmem:[%s6] sm:$0xff]
    %v4939 = vadd.f32 %v4937, 1e-05
    %v4940 = vrsqrt.pop %v4939
    %v4941 = vmul.f32 %v4938, %v4940
    %v4942 = vld [vmem:[%s7] sm:$0xff]
    %v4943 = vmul.f32 %v4934, %v4941
    %v4944 = vsub.f32 %v4942, %v4943
    %4946 = vset.pattern.permute.xlu0 0
    %4947 = vperm.xlu0 %4946, %v4941
    %v4948 = vpop.permute.xlu0 %4947
    %v4950 = vmul.f32 %v4902, %v4948
    %v4951 = vmul.f32 %v4903, %v4948
    %v4952 = vmul.f32 %v4904, %v4948
    %v4953 = vmul.f32 %v4905, %v4948
    %v4954 = vmul.f32 %v4906, %v4948
    %v4955 = vmul.f32 %v4907, %v4948
    %4957 = vset.pattern.permute.xlu0 0
    %4958 = vperm.xlu0 %4957, %v4944
    %v4959 = vpop.permute.xlu0 %4958
    %v4961 = vadd.f32 %v4950, %v4959
    %v4962 = vadd.f32 %v4951, %v4959
    %v4963 = vadd.f32 %v4952, %v4959
    %v4964 = vadd.f32 %v4953, %v4959
    %v4965 = vadd.f32 %v4954, %v4959
    %v4966 = vadd.f32 %v4955, %v4959
    %v4967 = vadd.f32 %v2543, %v4961
    %v4968 = vadd.f32 %v2544, %v4962
    %v4969 = vadd.f32 %v2545, %v4963
    %v4970 = vadd.f32 %v2546, %v4964
    %v4971 = vadd.f32 %v2547, %v4965
    %v4972 = vadd.f32 %v2548, %v4966
    %vm4973 = vcmp.gt.f32.partialorder %v4967, 0.0
    %vm4974 = vcmp.gt.f32.partialorder %v4968, 0.0
    %vm4975 = vcmp.gt.f32.partialorder %v4969, 0.0
    %vm4976 = vcmp.gt.f32.partialorder %v4970, 0.0
    %vm4977 = vcmp.gt.f32.partialorder %v4971, 0.0
    %vm4978 = vcmp.gt.f32.partialorder %v4972, 0.0
    %v4979 = vmul.f32 %v4967, 0.01
    %v4980 = vmul.f32 %v4968, 0.01
    %v4981 = vmul.f32 %v4969, 0.01
    %v4982 = vmul.f32 %v4970, 0.01
    %v4983 = vmul.f32 %v4971, 0.01
    %v4984 = vmul.f32 %v4972, 0.01
    %v4985 = vsel %vm4973, %v4967, %v4979
    %v4986 = vsel %vm4974, %v4968, %v4980
    %v4987 = vsel %vm4975, %v4969, %v4981
    %v4988 = vsel %vm4976, %v4970, %v4982
    %v4989 = vsel %vm4977, %v4971, %v4983
    %v4990 = vsel %vm4978, %v4972, %v4984
    %4991 = vst [vmem:[#allocation3] sm:$0xff] %v4985
    %4992 = vst [vmem:[#allocation3 + $0x8] sm:$0xff] %v4986
    %4993 = vst [vmem:[#allocation3 + $0x10] sm:$0xff] %v4987
    %4994 = vst [vmem:[#allocation3 + $0x18] sm:$0xff] %v4988
    %4995 = vst [vmem:[#allocation3 + $0x20] sm:$0xff] %v4989
    %4996 = vst [vmem:[#allocation3 + $0x28] sm:$0xff] %v4990
    // Predicated region
    $region38: #{tpu_custom_call.1} parent=1 // pred_check
      _
    $region39: #{tpu_custom_call.1} parent=1 // pred_check_branch
      %4998 = sbr.rel (0) target = $region41
    $region40: #{tpu_custom_call.1} parent=1 // pred_region
      %s5000 = ssub.s32 768, 768
      %5001 = vsyncadd [#allocation4], %s5000
      %s5003 = sshll.u32 [#allocation3], 4
      %s5004 = int_to_ptr.vmem [resolvable:$true] %s5003
      %5006 = dma.vmem_to_hbm [thread:$0]  %s5004, 768, %s9, [#allocation4]
    $region41: #{tpu_custom_call.1} parent=1 // pred_fallthru
      _
    // Predicated region
    $region42: #{tpu_custom_call.1} parent=1 // pred_check
      _
    $region43: #{tpu_custom_call.1} parent=1 // pred_check_branch
      %5008 = sbr.rel (0) target = $region45
    $region44: #{tpu_custom_call.1} parent=1 // pred_region
      %5009 = dma.done [#allocation4], 768
    $region45: #{tpu_custom_call.1} parent=1 // pred_fallthru
      _
    %5010 = vsyncpa [#allocation4], 1

</llo_original>
